<compile_context>
chip_gen: v6e
topology: v6e:2x2x1
jax: 0.10.0
libtpu: 0.0.40
codegen_flags: <defaults>
</compile_context>

<pallas_src>
import functools
import itertools

import numpy as np
import jax
import jax.numpy as jnp
from jax import lax
from jax.experimental import pallas as pl
from jax.experimental.pallas import tpu as pltpu


# ----------------------------------------------------------------------------
# Kernel 1: turbulent kinetic energy field  tke = 0.5 * sum_c (u - u_mean)^2
# Grid over the R channel regions; the region mean is indexed by the BlockSpec
# so the (Ba+Bb)-fold mean broadcast is never materialized in HBM and no
# wrapper-side channel transpose is needed.
# ----------------------------------------------------------------------------
def _tke_kernel(u_ref, m_ref, out_ref):
    # u_ref: (B, 3, G), m_ref: (3, G), out_ref: (B, G)
    u = u_ref[...]
    m = m_ref[...]
    d = u - m[None, :, :]                       # VPU broadcast subtract
    out_ref[...] = 0.5 * jnp.sum(d * d, axis=1)  # channel (sublane-axis) reduce


def tke_field(u_regions, m_regions):
    """u_regions: (R, B, 3, G) f32, m_regions: (R, 3, G) f32 -> tke (R, B, G) f32."""
    R, B, _, G = u_regions.shape
    return pl.pallas_call(
        _tke_kernel,
        out_shape=jax.ShapeDtypeStruct((R, B, G), jnp.float32),
        grid=(R,),
        in_specs=[pl.BlockSpec((None, B, 3, G), lambda r: (r, 0, 0, 0)),
                  pl.BlockSpec((None, 3, G), lambda r: (r, 0, 0))],
        out_specs=pl.BlockSpec((None, B, G), lambda r: (r, 0, 0)),
        compiler_params=pltpu.CompilerParams(dimension_semantics=("parallel",)),
    )(u_regions, m_regions)


# ----------------------------------------------------------------------------
# Kernel 2 (fused): log-power -> TKE spectrum -> pairwise log-spectrum distance
#   logP   = max(log(P), -1e30)                       (fused, EUP)
#   t      = logP @ WmatT          (bf16 weights, f32 acc, Gp-tiled + pipelined)
#   E(k)   = exp(t) @ W2           (spherical quadrature, 4*pi*k^2 folded in)
#   logE   = log(max(E, tiny))
#   D_r[i,j] = sqrt( a2_i + b2_j - 2 * sum_k wleg_k logE_a[i,k] logE_b[j,k] )
# ----------------------------------------------------------------------------
def _spectrum_pairdist_kernel(p_ref, wT_ref, w2_ref, wleg_ref,
                              logtke_ref, d_ref, acc_ref,
                              *, n_regions, n_a, n_b):
    g = pl.program_id(0)

    @pl.when(g == 0)
    def _():
        acc_ref[...] = jnp.zeros_like(acc_ref)

    # log-power for this Gp tile. Padded columns hold 1.0 -> log == 0 exactly,
    # and they also multiply all-zero Wmat rows. Genuine zero bins are clamped
    # so that (-inf) * 0 never produces NaN in the dense interpolation matmul.
    logp = jnp.maximum(jnp.log(p_ref[...]), -1e30)
    # Trilinear interpolation as a dense matmul: bf16 weight stream, f32 accumulate.
    acc_ref[...] += jnp.dot(logp, wT_ref[...], preferred_element_type=jnp.float32)

    @pl.when(g == pl.num_programs(0) - 1)
    def _():
        e = jnp.exp(acc_ref[...])                                          # (B, M)
        E = jnp.dot(e, w2_ref[...], preferred_element_type=jnp.float32)    # (B, K)
        logE = jnp.log(jnp.maximum(E, 1e-30))      # guard an all-zero shell
        logtke_ref[...] = logE

        wleg = wleg_ref[...]                       # (1, K) = slope * legendre weights
        lw = logE * wleg                           # weighted logE, computed once
        # Pairwise distance in a2 + b2 - 2*a.b form (tiny MXU dots); no
        # (n_a, n_b, K) broadcast and no per-region wleg broadcast.
        s_col = jnp.sum(lw * logE, axis=-1, keepdims=True)                 # (B, 1)
        s_row = lax.dot_general(wleg, logE * logE, (((1,), (1,)), ((), ())),
                                preferred_element_type=jnp.float32)        # (1, B)
        grp = n_a + n_b
        for r in range(n_regions):                 # static unroll (R = 3)
            lo = r * grp
            a2 = s_col[lo:lo + n_a]                                        # (n_a, 1)
            b2 = s_row[:, lo + n_a:lo + grp]                               # (1, n_b)
            cross = lax.dot_general(lw[lo:lo + n_a], logE[lo + n_a:lo + grp],
                                    (((1,), (1,)), ((), ())),
                                    preferred_element_type=jnp.float32)    # (n_a, n_b)
            d2 = a2 + b2 - 2.0 * cross
            d_ref[r] = jnp.sqrt(jnp.maximum(d2, 0.0))


def tke_spectrum_and_pairdist(power_pad, WmatT_bf16, W2_bf16, wleg,
                              n_regions, n_a, n_b):
    B, G_pad = power_pad.shape
    M, K = W2_bf16.shape
    gp_tiles = 2 if (G_pad // 2) % 128 == 0 else 1
    gp_tile = G_pad // gp_tiles

    kernel = functools.partial(_spectrum_pairdist_kernel,
                               n_regions=n_regions, n_a=n_a, n_b=n_b)
    flops = int(2 * B * G_pad * M + 2 * B * M * K
                + 2 * n_regions * (n_a + n_b) * K)
    transcendentals = int(B * G_pad + B * M + B * K)
    bytes_accessed = int(B * G_pad * 4 + G_pad * M * 2 + M * K * 2
                         + K * 4 + B * K * 4 + n_regions * n_a * n_b * 4)

    log_tke, D = pl.pallas_call(
        kernel,
        out_shape=(jax.ShapeDtypeStruct((B, K), jnp.float32),
                   jax.ShapeDtypeStruct((n_regions, n_a, n_b), jnp.float32)),
        grid=(gp_tiles,),
        in_specs=[pl.BlockSpec((B, gp_tile), lambda g: (0, g)),
                  pl.BlockSpec((gp_tile, M), lambda g: (g, 0)),
                  pl.BlockSpec((M, K), lambda g: (0, 0)),
                  pl.BlockSpec((1, K), lambda g: (0, 0))],
        out_specs=(pl.BlockSpec((B, K), lambda g: (0, 0)),
                   pl.BlockSpec((n_regions, n_a, n_b), lambda g: (0, 0, 0))),
        scratch_shapes=[pltpu.VMEM((B, M), jnp.float32)],
        compiler_params=pltpu.CompilerParams(dimension_semantics=("arbitrary",)),
        cost_estimate=pl.CostEstimate(flops=flops,
                                      transcendentals=transcendentals,
                                      bytes_accessed=bytes_accessed),
    )(power_pad, WmatT_bf16, W2_bf16, wleg)
    return log_tke, D


# ----------------------------------------------------------------------------
# Operator construction (deterministic, in-script numpy)
# ----------------------------------------------------------------------------
def fibonacci_sphere(n):
    # TODO(synk): original Lebedev quadrature is loaded from numgrids.pickle; we
    # substitute a deterministic Fibonacci-sphere quadrature with uniform weights.
    i = np.arange(n) + 0.5
    phi = np.arccos(1.0 - 2.0 * i / n)
    theta = np.pi * (1.0 + 5.0 ** 0.5) * i
    p = np.stack(
        [np.cos(theta) * np.sin(phi), np.sin(theta) * np.sin(phi), np.cos(phi)],
        axis=1,
    )
    w = np.full(n, 1.0 / n)
    return p.astype(np.float32), w.astype(np.float32)


def build_interp_matrix(k_np, p_np, dims, g_pad):
    """Dense matrix Wmat (K*N, g_pad) such that Wmat @ grid.flatten() == interp3(grid, q)
    with q = k[:,None,None]*p + center, matching the reference interp3 exactly
    (weights measured from the clamped floor point). Columns >= X*Y*Z are zero padding."""
    X, Y, Z = dims
    center = np.array([X // 2, Y // 2, Z // 2], dtype=np.float64)
    q = (k_np.astype(np.float64)[:, None, None] * p_np.astype(np.float64)[None]
         + center)                                          # (K, N, 3)
    q = q.reshape(-1, 3)
    M = q.shape[0]
    p0 = np.floor(q).astype(np.int64)
    p1 = p0 + 1
    upper = np.array([X - 1, Y - 1, Z - 1], dtype=np.int64)
    p0c = np.clip(p0, 0, upper)
    p1c = np.clip(p1, 0, upper)
    w = q - p0c
    Wmat = np.zeros((M, g_pad), dtype=np.float32)
    rows = np.arange(M)
    for cx, cy, cz in itertools.product((0, 1), repeat=3):
        xs = (p1c if cx else p0c)[:, 0]
        ys = (p1c if cy else p0c)[:, 1]
        zs = (p1c if cz else p0c)[:, 2]
        wx = w[:, 0] if cx else (1.0 - w[:, 0])
        wy = w[:, 1] if cy else (1.0 - w[:, 1])
        wz = w[:, 2] if cz else (1.0 - w[:, 2])
        flat = xs * (Y * Z) + ys * Z + zs
        np.add.at(Wmat, (rows, flat), (wx * wy * wz).astype(np.float32))
    return Wmat


# ----------------------------------------------------------------------------
# LogTKESpectrumL2Distance forward, batched over the 3 channel regions
# ----------------------------------------------------------------------------
def log_tke_spectrum_l2_distance_batched(u_a_regions, u_b_regions, u_mean_regions,
                                         n_legendre=16, n_sphere=32):
    """u_a_regions: (R, Ba, 3, X, Y, Z), u_b_regions: (R, Bb, 3, X, Y, Z),
    u_mean_regions: (R, 3, X, Y, Z).
    Returns D (R, Ba, Bb), log_a (R, Ba, K), log_b (R, Bb, K), k (K,)."""
    R, Ba = u_a_regions.shape[:2]
    Bb = u_b_regions.shape[1]
    dims = u_a_regions.shape[-3:]
    X, Y, Z = dims
    G = X * Y * Z
    G_pad = ((G + 127) // 128) * 128      # whole number of 128-lane vregs

    # Gauss-Legendre nodes -> wavenumbers k (identical for every region).
    k_min = 1.0
    k_max = float((min(dims) - 1) // 2)
    slope = (k_max - k_min) / 2.0
    nodes, weights = np.polynomial.legendre.leggauss(n_legendre)
    k = (slope * nodes + ((k_max - k_min) / 2.0 + k_min)).astype(np.float32)

    p_sphere, w_sphere = fibonacci_sphere(n_sphere)
    Wmat = build_interp_matrix(k, p_sphere, dims, G_pad)       # (K*N, G_pad) f32
    # Fold spherical quadrature weights and the 4*pi*k^2 factor into one matrix.
    W2_np = np.zeros((n_legendre * n_sphere, n_legendre), dtype=np.float32)
    for kk in range(n_legendre):
        W2_np[kk * n_sphere:(kk + 1) * n_sphere, kk] = w_sphere * (4.0 * np.pi * k[kk] ** 2)
    # bf16 weight streams (kernel 2 is HBM-bandwidth bound); logP and all
    # accumulation stay f32.
    WmatT = jnp.asarray(Wmat.T, dtype=jnp.bfloat16)            # (G_pad, K*N)
    W2 = jnp.asarray(W2_np, dtype=jnp.bfloat16)                # (K*N, K)
    wleg = jnp.asarray((slope * weights.astype(np.float32))[None, :])  # (1, K)

    B_total = R * (Ba + Bb)
    # Per region: samples then data -> one big batch; natural layout, no transpose.
    u_all = jnp.concatenate([u_a_regions, u_b_regions], axis=1)         # (R, Ba+Bb, 3, ...)
    u_all = u_all.reshape(R, Ba + Bb, 3, G)
    m_all = u_mean_regions.reshape(R, 3, G)

    # Pallas kernel 1: TKE field (mean selected per region by the BlockSpec).
    tke = tke_field(u_all, m_all)                              # (R, Ba+Bb, G)
    tke = tke.reshape(B_total, X, Y, Z)

    # TODO(synk): no Pallas FFT primitive on TPU; FFT + fftshift done with jnp.fft.
    tke_fft = jnp.fft.fftshift(jnp.fft.fftn(tke, axes=(-3, -2, -1)), axes=(-3, -2, -1))
    # Power spectrum re^2 + im^2 (no abs/sqrt); log + zero-bin clamp are fused
    # into kernel 2. Pad with 1.0 so padded columns give log == 0 exactly and
    # also hit the all-zero Wmat rows.
    power = (jnp.real(tke_fft) ** 2 + jnp.imag(tke_fft) ** 2).astype(jnp.float32)
    power = power.reshape(B_total, G)
    power = jnp.pad(power, ((0, 0), (0, G_pad - G)), constant_values=1.0)

    # Pallas kernel 2 (fused): log + interp matmul (bf16 weights, Gp-tiled) +
    # exp + quadrature matmul + log + per-region pairwise distance.
    log_tke, D = tke_spectrum_and_pairdist(power, WmatT, W2, wleg, R, Ba, Bb)

    log_tke = log_tke.reshape(R, Ba + Bb, n_legendre)
    log_a, log_b = log_tke[:, :Ba], log_tke[:, Ba:]
    return D, log_a, log_b, jnp.asarray(k)


# ----------------------------------------------------------------------------
# WassersteinTKE forward (numerical core)
# ----------------------------------------------------------------------------
def wasserstein_tke_forward(u_sample, u_data):
    """u_sample, u_data: (B, 3, L, H, W) float32 (NCDHW / NC-XYZ layout)."""
    # No mean-flow file in this synthetic setting -> fallback branch: mean over data samples.
    u_mean = jnp.mean(u_data, axis=0)                          # (3, L, H, W)

    crop = lambda x: x[..., 1:-1, 1:-1, 1:-1]
    u_s, u_d, u_m = crop(u_sample), crop(u_data), crop(u_mean)

    channel_width = min(u_s.shape[-2:])
    channel_length = u_s.shape[-3]
    offset_multiplier = {"front": 3, "middle": 2, "back": 1}

    # Batch the three regions into one set of kernel calls (Wmat/W2/k are identical).
    starts = [channel_length - n * channel_width for n in offset_multiplier.values()]
    sl = lambda x, s: x[..., s:s + channel_width, :, :]
    u_a_regions = jnp.stack([sl(u_s, s) for s in starts])      # (R, Bs, 3, cw, cw, cw)
    u_b_regions = jnp.stack([sl(u_d, s) for s in starts])      # (R, Bd, 3, cw, cw, cw)
    u_m_regions = jnp.stack([sl(u_m, s) for s in starts])      # (R, 3, cw, cw, cw)

    D, log_a, log_b, k = log_tke_spectrum_l2_distance_batched(
        u_a_regions, u_b_regions, u_m_regions)

    outputs = {}
    for i, region in enumerate(offset_multiplier):
        # TODO(synk): ot.emd2 (exact optimal-transport solver) has no Pallas equivalent;
        # the per-region pairwise distance matrix D is returned instead of the scalar W2.
        outputs[f"tke-{region}"] = D[i]
    outputs["tke"] = jnp.sqrt(jnp.sum(D ** 2, axis=0))         # combined distance matrix
    return outputs


if __name__ == "__main__":
    key = jax.random.PRNGKey(0)
    k1, k2 = jax.random.split(key)
    Bs, Bd = 2, 2
    # Raw grid (L, H, W) = (38, 14, 14) -> cropped (36, 12, 12); three (12,12,12) regions.
    L, H, W = 38, 14, 14
    u_sample = jax.random.normal(k1, (Bs, 3, L, H, W), dtype=jnp.float32)
    u_data = jax.random.normal(k2, (Bd, 3, L, H, W), dtype=jnp.float32) + 0.5

    fwd = jax.jit(wasserstein_tke_forward)
    out = fwd(u_sample, u_data)
    out = jax.tree_util.tree_map(jax.block_until_ready, out)
    assert out["tke"].shape == (Bs, Bd)
    assert all(bool(jnp.all(jnp.isfinite(v))) for v in jax.tree_util.tree_leaves(out))
    print("KERNEL_OK")
</pallas_src>

<mosaic_0001>
module attributes {stable_mosaic.version = 11 : i64} {
  func.func @_tke_kernel(%arg0: i32, %arg1: memref<1x4x3x1728xf32, #tpu.memory_space<vmem>>, %arg2: memref<1x3x1728xf32, #tpu.memory_space<vmem>>, %arg3: memref<1x4x1728xf32, #tpu.memory_space<vmem>>) attributes {dimension_semantics = [#tpu.dimension_semantics<parallel>], iteration_bounds = array<i64: 3>, scalar_prefetch = 0 : i64, scratch_operands = 0 : i64, tpu.core_type = #tpu.core_type<tc>, window_params = [{transform_indices = @transform_0, window_bounds = array<i64: 1, 4, 3, 1728>}, {transform_indices = @transform_1, window_bounds = array<i64: 1, 3, 1728>}, {transform_indices = @transform_2, window_bounds = array<i64: 1, 4, 1728>}]} {
    %c0 = arith.constant 0 : index
    %c0_0 = arith.constant 0 : index
    %c0_1 = arith.constant 0 : index
    %c0_2 = arith.constant 0 : index
    %0 = vector.load %arg1[%c0, %c0_0, %c0_1, %c0_2] : memref<1x4x3x1728xf32, #tpu.memory_space<vmem>>, vector<1x4x3x1728xf32>
    %1 = vector.shape_cast %0 : vector<1x4x3x1728xf32> to vector<4x3x1728xf32>
    %c0_3 = arith.constant 0 : index
    %c0_4 = arith.constant 0 : index
    %c0_5 = arith.constant 0 : index
    %2 = vector.load %arg2[%c0_3, %c0_4, %c0_5] : memref<1x3x1728xf32, #tpu.memory_space<vmem>>, vector<1x3x1728xf32>
    %3 = vector.shape_cast %2 : vector<1x3x1728xf32> to vector<3x1728xf32>
    %4 = vector.shape_cast %3 : vector<3x1728xf32> to vector<1x3x1728xf32>
    %5 = vector.broadcast %4 : vector<1x3x1728xf32> to vector<4x3x1728xf32>
    %6 = arith.subf %1, %5 : vector<4x3x1728xf32>
    %7 = arith.mulf %6, %6 : vector<4x3x1728xf32>
    %cst = arith.constant dense<0.000000e+00> : vector<4x1728xf32>
    %8 = vector.multi_reduction <add>, %7, %cst [1] : vector<4x3x1728xf32> to vector<4x1728xf32>
    %cst_6 = arith.constant 5.000000e-01 : f32
    %9 = vector.broadcast %cst_6 : f32 to vector<4x1728xf32>
    %10 = arith.mulf %9, %8 : vector<4x1728xf32>
    %c0_7 = arith.constant 0 : index
    %c0_8 = arith.constant 0 : index
    %c0_9 = arith.constant 0 : index
    %11 = vector.load %arg3[%c0_7, %c0_8, %c0_9] : memref<1x4x1728xf32, #tpu.memory_space<vmem>>, vector<1x4x1728xf32>
    %12 = vector.shape_cast %11 : vector<1x4x1728xf32> to vector<4x1728xf32>
    %13 = vector.shape_cast %10 : vector<4x1728xf32> to vector<1x4x1728xf32>
    tpu.vector_store %arg3[%c0_7, %c0_8, %c0_9], %13 {strides = array<i32>} : memref<1x4x1728xf32, #tpu.memory_space<vmem>>, vector<1x4x1728xf32>,
    return
  }
  func.func @transform_0(%arg0: i32) -> (i32, i32, i32, i32) {
    %c0_i32 = arith.constant 0 : i32
    %c0_i32_0 = arith.constant 0 : i32
    %c0_i32_1 = arith.constant 0 : i32
    %c0_i32_2 = arith.constant 0 : i32
    return %arg0, %c0_i32, %c0_i32_0, %c0_i32_1 : i32, i32, i32, i32
  }
  func.func @transform_1(%arg0: i32) -> (i32, i32, i32) {
    %c0_i32 = arith.constant 0 : i32
    %c0_i32_0 = arith.constant 0 : i32
    %c0_i32_1 = arith.constant 0 : i32
    return %arg0, %c0_i32, %c0_i32_0 : i32, i32, i32
  }
  func.func @transform_2(%arg0: i32) -> (i32, i32, i32) {
    %c0_i32 = arith.constant 0 : i32
    %c0_i32_0 = arith.constant 0 : i32
    %c0_i32_1 = arith.constant 0 : i32
    return %arg0, %c0_i32, %c0_i32_0 : i32, i32, i32
  }
}

module attributes {stable_mosaic.version = 11 : i64} {
  func.func @_spectrum_pairdist_kernel(%arg0: i32, %arg1: memref<12x896xf32, #tpu.memory_space<vmem>>, %arg2: memref<896x512xbf16, #tpu.memory_space<vmem>>, %arg3: memref<512x16xbf16, #tpu.memory_space<vmem>>, %arg4: memref<1x16xf32, #tpu.memory_space<vmem>>, %arg5: memref<12x16xf32, #tpu.memory_space<vmem>>, %arg6: memref<3x2x2xf32, #tpu.memory_space<vmem>>, %arg7: memref<12x512xf32, #tpu.memory_space<vmem>>) attributes {dimension_semantics = [#tpu.dimension_semantics<arbitrary>], iteration_bounds = array<i64: 2>, scalar_prefetch = 0 : i64, scratch_operands = 1 : i64, tpu.core_type = #tpu.core_type<tc>, window_params = [{transform_indices = @transform_0, window_bounds = array<i64: 12, 896>}, {transform_indices = @transform_1, window_bounds = array<i64: 896, 512>}, {pipeline_mode = #tpu.pipeline_mode<synchronous>, transform_indices = @transform_2, window_bounds = array<i64: 512, 16>}, {pipeline_mode = #tpu.pipeline_mode<synchronous>, transform_indices = @transform_3, window_bounds = array<i64: 1, 16>}, {pipeline_mode = #tpu.pipeline_mode<synchronous>, transform_indices = @transform_4, window_bounds = array<i64: 12, 16>}, {pipeline_mode = #tpu.pipeline_mode<synchronous>, transform_indices = @transform_5, window_bounds = array<i64: 3, 2, 2>}]} {
    %c0_i32 = arith.constant 0 : i32
    %0 = arith.cmpi eq, %arg0, %c0_i32 : i32
    %1 = arith.extui %0 : i1 to i32
    %c0_i32_0 = arith.constant 0 : i32
    %2 = arith.cmpi ne, %1, %c0_i32_0 : i32
    scf.if %2 {
      %cst_10 = arith.constant 0.000000e+00 : f32
      %15 = vector.broadcast %cst_10 : f32 to vector<12x512xf32>
      %c0_11 = arith.constant 0 : index
      %c0_12 = arith.constant 0 : index
      %16 = vector.load %arg7[%c0_11, %c0_12] : memref<12x512xf32, #tpu.memory_space<vmem>>, vector<12x512xf32>
      tpu.vector_store %arg7[%c0_11, %c0_12], %15 {strides = array<i32>} : memref<12x512xf32, #tpu.memory_space<vmem>>, vector<12x512xf32>,
    } else {
    }
    %c0 = arith.constant 0 : index
    %c0_1 = arith.constant 0 : index
    %3 = vector.load %arg1[%c0, %c0_1] : memref<12x896xf32, #tpu.memory_space<vmem>>, vector<12x896xf32>
    %4 = math.log %3 : vector<12x896xf32>
    %cst = arith.constant -1.000000e+30 : f32
    %5 = vector.broadcast %cst : f32 to vector<12x896xf32>
    %6 = arith.maximumf %4, %5 : vector<12x896xf32>
    %c0_2 = arith.constant 0 : index
    %c0_3 = arith.constant 0 : index
    %7 = vector.load %arg7[%c0_2, %c0_3] : memref<12x512xf32, #tpu.memory_space<vmem>>, vector<12x512xf32>
    %c0_4 = arith.constant 0 : index
    %c0_5 = arith.constant 0 : index
    %8 = vector.load %arg2[%c0_4, %c0_5] : memref<896x512xbf16, #tpu.memory_space<vmem>>, vector<896x512xbf16>
    %cst_6 = arith.constant dense<0.000000e+00> : vector<12x512xf32>
    %9 = tpu.matmul %6, %8, %cst_6 {dimension_numbers = #tpu.dot_dimension_numbers<[1], [0], [0], [1], [0, 0, 1, 1], [], []>} : vector<12x896xf32>, vector<896x512xbf16>, vector<12x512xf32> -> vector<12x512xf32>
    %10 = arith.addf %7, %9 : vector<12x512xf32>
    %c0_7 = arith.constant 0 : index
    %c0_8 = arith.constant 0 : index
    %11 = vector.load %arg7[%c0_7, %c0_8] : memref<12x512xf32, #tpu.memory_space<vmem>>, vector<12x512xf32>
    tpu.vector_store %arg7[%c0_7, %c0_8], %10 {strides = array<i32>} : memref<12x512xf32, #tpu.memory_space<vmem>>, vector<12x512xf32>,
    %c1_i32 = arith.constant 1 : i32
    %12 = arith.cmpi eq, %arg0, %c1_i32 : i32
    %13 = arith.extui %12 : i1 to i32
    %c0_i32_9 = arith.constant 0 : i32
    %14 = arith.cmpi ne, %13, %c0_i32_9 : i32
    scf.if %14 {
      %c0_10 = arith.constant 0 : index
      %c0_11 = arith.constant 0 : index
      %15 = vector.load %arg7[%c0_10, %c0_11] : memref<12x512xf32, #tpu.memory_space<vmem>>, vector<12x512xf32>
      %16 = math.exp %15 : vector<12x512xf32>
      %c0_12 = arith.constant 0 : index
      %c0_13 = arith.constant 0 : index
      %17 = vector.load %arg3[%c0_12, %c0_13] : memref<512x16xbf16, #tpu.memory_space<vmem>>, vector<512x16xbf16>
      %cst_14 = arith.constant dense<0.000000e+00> : vector<12x16xf32>
      %18 = tpu.matmul %16, %17, %cst_14 {dimension_numbers = #tpu.dot_dimension_numbers<[1], [0], [0], [1], [0, 0, 1, 1], [], []>} : vector<12x512xf32>, vector<512x16xbf16>, vector<12x16xf32> -> vector<12x16xf32>
      %cst_15 = arith.constant 1.000000e-30 : f32
      %19 = vector.broadcast %cst_15 : f32 to vector<12x16xf32>
      %20 = arith.maximumf %18, %19 : vector<12x16xf32>
      %21 = math.log %20 : vector<12x16xf32>
      %c0_16 = arith.constant 0 : index
      %c0_17 = arith.constant 0 : index
      %22 = vector.load %arg5[%c0_16, %c0_17] : memref<12x16xf32, #tpu.memory_space<vmem>>, vector<12x16xf32>
      tpu.vector_store %arg5[%c0_16, %c0_17], %21 {strides = array<i32>} : memref<12x16xf32, #tpu.memory_space<vmem>>, vector<12x16xf32>,
      %c0_18 = arith.constant 0 : index
      %c0_19 = arith.constant 0 : index
      %23 = vector.load %arg4[%c0_18, %c0_19] : memref<1x16xf32, #tpu.memory_space<vmem>>, vector<1x16xf32>
      %24 = vector.broadcast %23 : vector<1x16xf32> to vector<12x16xf32>
      %25 = arith.mulf %21, %24 : vector<12x16xf32>
      %26 = arith.mulf %25, %21 : vector<12x16xf32>
      %cst_20 = arith.constant dense<0.000000e+00> : vector<12xf32>
      %27 = vector.multi_reduction <add>, %26, %cst_20 [1] : vector<12x16xf32> to vector<12xf32>
      %28 = vector.shape_cast %27 : vector<12xf32> to vector<12x1xf32>
      %29 = arith.mulf %21, %21 : vector<12x16xf32>
      %cst_21 = arith.constant dense<0.000000e+00> : vector<1x12xf32>
      %30 = tpu.matmul %23, %29, %cst_21 {dimension_numbers = #tpu.dot_dimension_numbers<[1], [1], [0], [0], [0, 0, 1, 0], [], []>} : vector<1x16xf32>, vector<12x16xf32>, vector<1x12xf32> -> vector<1x12xf32>
      %31 = vector.extract_strided_slice %28 {offsets = [0, 0], sizes = [2, 1], strides = [1, 1]} : vector<12x1xf32> to vector<2x1xf32>
      %32 = vector.extract_strided_slice %30 {offsets = [0, 2], sizes = [1, 2], strides = [1, 1]} : vector<1x12xf32> to vector<1x2xf32>
      %33 = vector.extract_strided_slice %25 {offsets = [0, 0], sizes = [2, 16], strides = [1, 1]} : vector<12x16xf32> to vector<2x16xf32>
      %34 = vector.extract_strided_slice %21 {offsets = [2, 0], sizes = [2, 16], strides = [1, 1]} : vector<12x16xf32> to vector<2x16xf32>
      %cst_22 = arith.constant dense<0.000000e+00> : vector<2x2xf32>
      %35 = tpu.matmul %33, %34, %cst_22 {dimension_numbers = #tpu.dot_dimension_numbers<[1], [1], [0], [0], [0, 0, 1, 0], [], []>} : vector<2x16xf32>, vector<2x16xf32>, vector<2x2xf32> -> vector<2x2xf32>
      %36 = vector.broadcast %31 : vector<2x1xf32> to vector<2x2xf32>
      %37 = vector.broadcast %32 : vector<1x2xf32> to vector<2x2xf32>
      %38 = arith.addf %36, %37 : vector<2x2xf32>
      %cst_23 = arith.constant 2.000000e+00 : f32
      %39 = vector.broadcast %cst_23 : f32 to vector<2x2xf32>
      %40 = arith.mulf %39, %35 : vector<2x2xf32>
      %41 = arith.subf %38, %40 : vector<2x2xf32>
      %cst_24 = arith.constant 0.000000e+00 : f32
      %42 = vector.broadcast %cst_24 : f32 to vector<2x2xf32>
      %43 = arith.maximumf %41, %42 : vector<2x2xf32>
      %44 = math.sqrt %43 : vector<2x2xf32>
      %c0_25 = arith.constant 0 : index
      %c0_26 = arith.constant 0 : index
      %c0_27 = arith.constant 0 : index
      %45 = vector.load %arg6[%c0_25, %c0_26, %c0_27] : memref<3x2x2xf32, #tpu.memory_space<vmem>>, vector<1x2x2xf32>
      %46 = vector.shape_cast %45 : vector<1x2x2xf32> to vector<2x2xf32>
      %47 = vector.shape_cast %44 : vector<2x2xf32> to vector<1x2x2xf32>
      tpu.vector_store %arg6[%c0_25, %c0_26, %c0_27], %47 {strides = array<i32>} : memref<3x2x2xf32, #tpu.memory_space<vmem>>, vector<1x2x2xf32>,
      %48 = vector.extract_strided_slice %28 {offsets = [4, 0], sizes = [2, 1], strides = [1, 1]} : vector<12x1xf32> to vector<2x1xf32>
      %49 = vector.extract_strided_slice %30 {offsets = [0, 6], sizes = [1, 2], strides = [1, 1]} : vector<1x12xf32> to vector<1x2xf32>
      %50 = vector.extract_strided_slice %25 {offsets = [4, 0], sizes = [2, 16], strides = [1, 1]} : vector<12x16xf32> to vector<2x16xf32>
      %51 = vector.extract_strided_slice %21 {offsets = [6, 0], sizes = [2, 16], strides = [1, 1]} : vector<12x16xf32> to vector<2x16xf32>
      %cst_28 = arith.constant dense<0.000000e+00> : vector<2x2xf32>
      %52 = tpu.matmul %50, %51, %cst_28 {dimension_numbers = #tpu.dot_dimension_numbers<[1], [1], [0], [0], [0, 0, 1, 0], [], []>} : vector<2x16xf32>, vector<2x16xf32>, vector<2x2xf32> -> vector<2x2xf32>
      %53 = vector.broadcast %48 : vector<2x1xf32> to vector<2x2xf32>
      %54 = vector.broadcast %49 : vector<1x2xf32> to vector<2x2xf32>
      %55 = arith.addf %53, %54 : vector<2x2xf32>
      %cst_29 = arith.constant 2.000000e+00 : f32
      %56 = vector.broadcast %cst_29 : f32 to vector<2x2xf32>
      %57 = arith.mulf %56, %52 : vector<2x2xf32>
      %58 = arith.subf %55, %57 : vector<2x2xf32>
      %cst_30 = arith.constant 0.000000e+00 : f32
      %59 = vector.broadcast %cst_30 : f32 to vector<2x2xf32>
      %60 = arith.maximumf %58, %59 : vector<2x2xf32>
      %61 = math.sqrt %60 : vector<2x2xf32>
      %c1 = arith.constant 1 : index
      %c0_31 = arith.constant 0 : index
      %c0_32 = arith.constant 0 : index
      %62 = vector.load %arg6[%c1, %c0_31, %c0_32] : memref<3x2x2xf32, #tpu.memory_space<vmem>>, vector<1x2x2xf32>
      %63 = vector.shape_cast %62 : vector<1x2x2xf32> to vector<2x2xf32>
      %64 = vector.shape_cast %61 : vector<2x2xf32> to vector<1x2x2xf32>
      tpu.vector_store %arg6[%c1, %c0_31, %c0_32], %64 {strides = array<i32>} : memref<3x2x2xf32, #tpu.memory_space<vmem>>, vector<1x2x2xf32>,
      %65 = vector.extract_strided_slice %28 {offsets = [8, 0], sizes = [2, 1], strides = [1, 1]} : vector<12x1xf32> to vector<2x1xf32>
      %66 = vector.extract_strided_slice %30 {offsets = [0, 10], sizes = [1, 2], strides = [1, 1]} : vector<1x12xf32> to vector<1x2xf32>
      %67 = vector.extract_strided_slice %25 {offsets = [8, 0], sizes = [2, 16], strides = [1, 1]} : vector<12x16xf32> to vector<2x16xf32>
      %68 = vector.extract_strided_slice %21 {offsets = [10, 0], sizes = [2, 16], strides = [1, 1]} : vector<12x16xf32> to vector<2x16xf32>
      %cst_33 = arith.constant dense<0.000000e+00> : vector<2x2xf32>
      %69 = tpu.matmul %67, %68, %cst_33 {dimension_numbers = #tpu.dot_dimension_numbers<[1], [1], [0], [0], [0, 0, 1, 0], [], []>} : vector<2x16xf32>, vector<2x16xf32>, vector<2x2xf32> -> vector<2x2xf32>
      %70 = vector.broadcast %65 : vector<2x1xf32> to vector<2x2xf32>
      %71 = vector.broadcast %66 : vector<1x2xf32> to vector<2x2xf32>
      %72 = arith.addf %70, %71 : vector<2x2xf32>
      %cst_34 = arith.constant 2.000000e+00 : f32
      %73 = vector.broadcast %cst_34 : f32 to vector<2x2xf32>
      %74 = arith.mulf %73, %69 : vector<2x2xf32>
      %75 = arith.subf %72, %74 : vector<2x2xf32>
      %cst_35 = arith.constant 0.000000e+00 : f32
      %76 = vector.broadcast %cst_35 : f32 to vector<2x2xf32>
      %77 = arith.maximumf %75, %76 : vector<2x2xf32>
      %78 = math.sqrt %77 : vector<2x2xf32>
      %c2 = arith.constant 2 : index
      %c0_36 = arith.constant 0 : index
      %c0_37 = arith.constant 0 : index
      %79 = vector.load %arg6[%c2, %c0_36, %c0_37] : memref<3x2x2xf32, #tpu.memory_space<vmem>>, vector<1x2x2xf32>
      %80 = vector.shape_cast %79 : vector<1x2x2xf32> to vector<2x2xf32>
      %81 = vector.shape_cast %78 : vector<2x2xf32> to vector<1x2x2xf32>
      tpu.vector_store %arg6[%c2, %c0_36, %c0_37], %81 {strides = array<i32>} : memref<3x2x2xf32, #tpu.memory_space<vmem>>, vector<1x2x2xf32>,
    } else {
    }
    return
  }
  func.func @transform_0(%arg0: i32) -> (i32, i32) {
    %c0_i32 = arith.constant 0 : i32
    %c0_i32_0 = arith.constant 0 : i32
    return %c0_i32, %arg0 : i32, i32
  }
  func.func @transform_1(%arg0: i32) -> (i32, i32) {
    %c0_i32 = arith.constant 0 : i32
    %c0_i32_0 = arith.constant 0 : i32
    return %arg0, %c0_i32 : i32, i32
  }
  func.func @transform_2(%arg0: i32) -> (i32, i32) {
    %c0_i32 = arith.constant 0 : i32
    %c0_i32_0 = arith.constant 0 : i32
    %c0_i32_1 = arith.constant 0 : i32
    return %c0_i32, %c0_i32_0 : i32, i32
  }
  func.func @transform_3(%arg0: i32) -> (i32, i32) {
    %c0_i32 = arith.constant 0 : i32
    %c0_i32_0 = arith.constant 0 : i32
    %c0_i32_1 = arith.constant 0 : i32
    return %c0_i32, %c0_i32_0 : i32, i32
  }
  func.func @transform_4(%arg0: i32) -> (i32, i32) {
    %c0_i32 = arith.constant 0 : i32
    %c0_i32_0 = arith.constant 0 : i32
    %c0_i32_1 = arith.constant 0 : i32
    return %c0_i32, %c0_i32_0 : i32, i32
  }
  func.func @transform_5(%arg0: i32) -> (i32, i32, i32) {
    %c0_i32 = arith.constant 0 : i32
    %c0_i32_0 = arith.constant 0 : i32
    %c0_i32_1 = arith.constant 0 : i32
    %c0_i32_2 = arith.constant 0 : i32
    return %c0_i32, %c0_i32_0, %c0_i32_1 : i32, i32, i32
  }
}

</mosaic_0001>

<llo_original>
// kernel: wasserstein_tke_forward.2
$region0: #{wasserstein_tke_forward.2}
  #allocation0 [shape = 'u32[]', space=smem, size = 0x4, offset = 0x4, fixed_abs, tag = 'smem constant byte address 0x4 - core index']
  #allocation1 [shape = 'u32[144,128]{1,0:T(1,128)}', space=vmem, size = 0x12000, scoped, tag = 'internal scratch']
  %s0 = inlined_call_operand.vmem [shape: f32[3,4,3,1728], index: 0, kind: input, shape index: {}]
  %s1 = inlined_call_operand.vmem [shape: f32[3,3,1728], index: 1, kind: input, shape index: {}]
  %s2 = inlined_call_operand.vmem [shape: f32[3,4,1728], index: 2, kind: output, shape index: {}]
  %s3 = sld [smem:[#allocation0]]
  $region41: #{wasserstein_tke_forward.2} parent=0
    _
  %s5 = ssub.s32 1, %s3
  %s6 = scalar_select 0, %s5, %s3
  loop: start=0, step=1, limit=5
  $region2: #{wasserstein_tke_forward.2} parent=0 // loop_pre_header
    _
  $region3: #{wasserstein_tke_forward.2} parent=0 // loop_header
    %s8 = sphi 0, %s12
    %p9 = scmp.ge.s32.totalorder %s8, 5
    %s18 = sphi 0, %s20
    %s21 = sphi 0, %s18
    %s22 = sphi 0, %s21
    %s38 = sphi 0, %s22
    %s44 = sphi 0, %s46
    %s47 = sphi 0, %s44
    %s48 = sphi 0, %s47
    %s64 = sphi 0, %s48
    %s70 = sphi 0, %s72
    %s73 = sphi 0, %s70
    %s74 = sphi 0, %s73
    %s90 = sphi 0, %s74
  $region4: #{wasserstein_tke_forward.2} parent=0 // loop_header_branch
    %11 = sbr.rel (%p9) target = $region8
  $region5: #{wasserstein_tke_forward.2} parent=0 // loop_body
    %s13 = ssub.s32 %s8, 1
    %s14 = ssub.s32 %s8, 2
    %s15 = sadd.s32 %s8, 1
    %s16 = ssub.s32 %s8, %s15
    %p17 = scmp.eq.s32.totalorder %s16, 0
    %s19 = sadd.s32 %s18, 1
    %s20 = scalar_select %p17, %s18, %s19
    %p23 = pneg %p17
    %p24 = scmp.eq.s32.totalorder %s8, 2
    %p25 = por %p23, %p24
    %p26 = scmp.ne.s32.totalorder %s18, %s21
    %p27 = scmp.eq.s32.totalorder %s8, 0
    %p28 = por %p26, %p27
    %p29 = scmp.ne.s32.totalorder %s18, %s21
    %p30 = scmp.eq.s32.totalorder %s13, 2
    %p31 = por %p29, %p30
    %p32 = scmp.ne.s32.totalorder %s21, %s22
    %p33 = scmp.eq.s32.totalorder %s13, 0
    %p34 = por %p32, %p33
    %p35 = scmp.ne.s32.totalorder %s21, %s22
    %p36 = scmp.eq.s32.totalorder %s14, 2
    %p37 = por %p35, %p36
    %p39 = scmp.ne.s32.totalorder %s22, %s38
    %p40 = scmp.eq.s32.totalorder %s14, 0
    %p41 = por %p39, %p40
    %s42 = ssub.s32 %s8, %s15
    %p43 = scmp.eq.s32.totalorder %s42, 0
    %s45 = sadd.s32 %s44, 1
    %s46 = scalar_select %p43, %s44, %s45
    %p49 = pneg %p43
    %p50 = scmp.eq.s32.totalorder %s8, 2
    %p51 = por %p49, %p50
    %p52 = scmp.ne.s32.totalorder %s44, %s47
    %p53 = scmp.eq.s32.totalorder %s8, 0
    %p54 = por %p52, %p53
    %p55 = scmp.ne.s32.totalorder %s44, %s47
    %p56 = scmp.eq.s32.totalorder %s13, 2
    %p57 = por %p55, %p56
    %p58 = scmp.ne.s32.totalorder %s47, %s48
    %p59 = scmp.eq.s32.totalorder %s13, 0
    %p60 = por %p58, %p59
    %p61 = scmp.ne.s32.totalorder %s47, %s48
    %p62 = scmp.eq.s32.totalorder %s14, 2
    %p63 = por %p61, %p62
    %p65 = scmp.ne.s32.totalorder %s48, %s64
    %p66 = scmp.eq.s32.totalorder %s14, 0
    %p67 = por %p65, %p66
    %s68 = ssub.s32 %s8, %s15
    %p69 = scmp.eq.s32.totalorder %s68, 0
    %s71 = sadd.s32 %s70, 1
    %s72 = scalar_select %p69, %s70, %s71
    %p75 = pneg %p69
    %p76 = scmp.eq.s32.totalorder %s8, 2
    %p77 = por %p75, %p76
    %p78 = scmp.ne.s32.totalorder %s70, %s73
    %p79 = scmp.eq.s32.totalorder %s8, 0
    %p80 = por %p78, %p79
    %p81 = scmp.ne.s32.totalorder %s70, %s73
    %p82 = scmp.eq.s32.totalorder %s13, 2
    %p83 = por %p81, %p82
    %p84 = scmp.ne.s32.totalorder %s73, %s74
    %p85 = scmp.eq.s32.totalorder %s13, 0
    %p86 = por %p84, %p85
    %p87 = scmp.ne.s32.totalorder %s73, %s74
    %p88 = scmp.eq.s32.totalorder %s14, 2
    %p89 = por %p87, %p88
    %p91 = scmp.ne.s32.totalorder %s74, %s90
    %p92 = scmp.eq.s32.totalorder %s14, 0
    %p93 = por %p91, %p92
    %p94 = scmp.le.s32.totalorder 1, %s8
    %p95 = scmp.lt.s32.totalorder %s8, 4
    %p96 = pnand %p94, %p95
    %p97 = pneg %p96
    // Predicated region
    $region9: #{wasserstein_tke_forward.2} parent=5 // pred_check
      _
    $region10: #{wasserstein_tke_forward.2} parent=5 // pred_check_branch
      %99 = sbr.rel (%p96) target = $region12
    $region11: #{wasserstein_tke_forward.2} parent=5 // pred_region
      %s100 = ssub.s32 %s8, 1
    $region12: #{wasserstein_tke_forward.2} parent=5 // pred_fallthru
      _
    %p101 = scmp.lt.s32.totalorder %s8, 3
    // Predicated region
    $region13: #{wasserstein_tke_forward.2} parent=5 // pred_check
      %p102 = pneg %p101
    $region14: #{wasserstein_tke_forward.2} parent=5 // pred_check_branch
      %104 = sbr.rel (%p102) target = $region16
    $region15: #{wasserstein_tke_forward.2} parent=5 // pred_region
      // Predicated region
      $region17: #{wasserstein_tke_forward.2} parent=15 // pred_check
        %p105 = pneg %p28
      $region18: #{wasserstein_tke_forward.2} parent=15 // pred_check_branch
        %107 = sbr.rel (%p105) target = $region20
      $region19: #{wasserstein_tke_forward.2} parent=15 // pred_region
        %p108 = scmp.lt.s32.totalorder %s8, 2
        %s109 = scalar_select %p108, %s8, 2
        %s110 = smul.addr %s109, 56
        %s111 = smul.addr %s110, 4
        %s112 = scalar_lea.vmem %s0, %s111
      $region20: #{wasserstein_tke_forward.2} parent=15 // pred_fallthru
        _
      // Predicated region
      $region21: #{wasserstein_tke_forward.2} parent=15 // pred_check
        %p113 = pneg %p54
      $region22: #{wasserstein_tke_forward.2} parent=15 // pred_check_branch
        %115 = sbr.rel (%p113) target = $region24
      $region23: #{wasserstein_tke_forward.2} parent=15 // pred_region
        %p116 = scmp.lt.s32.totalorder %s8, 2
        %s117 = scalar_select %p116, %s8, 2
        %s118 = smul.addr %s117, 14
        %s119 = smul.addr %s118, 4
        %s120 = scalar_lea.vmem %s1, %s119
      $region24: #{wasserstein_tke_forward.2} parent=15 // pred_fallthru
        _
    $region16: #{wasserstein_tke_forward.2} parent=5 // pred_fallthru
      _
    %p121 = scmp.le.s32.totalorder 1, %s8
    %p122 = scmp.lt.s32.totalorder %s8, 4
    %p123 = pnand %p121, %p122
    %p124 = pneg %p123
    // Predicated region
    $region25: #{wasserstein_tke_forward.2} parent=5 // pred_check
      _
    $region26: #{wasserstein_tke_forward.2} parent=5 // pred_check_branch
      %126 = sbr.rel (%p123) target = $region28
    $region27: #{wasserstein_tke_forward.2} parent=5 // pred_region
      %s127 = ssub.s32 %s8, 1
      %p128 = scmp.lt.s32.totalorder %s13, 2
      %s129 = scalar_select %p128, %s13, 2
      %s130 = smul.addr %s129, 56
      %s131 = smul.addr %s130, 4
      %s132 = scalar_lea.vmem %s0, %s131
      %p133 = pneg %p34
      %p134 = pneg %p31
      %p135 = scmp.lt.s32.totalorder %s13, 2
      %s136 = scalar_select %p135, %s13, 2
      %s137 = smul.addr %s136, 14
      %s138 = smul.addr %s137, 4
      %s139 = scalar_lea.vmem %s1, %s138
      %p140 = pneg %p60
      %p141 = pneg %p57
      %p142 = pneg %p86
      %p143 = pneg %p83
      %p144 = scmp.lt.s32.totalorder %s13, 2
      %s145 = scalar_select %p144, %s13, 2
      %s146 = smul.addr %s145, 14
      %s147 = smul.addr %s146, 4
      %s148 = scalar_lea.vmem %s2, %s147
      %p149 = scmp.lt.s32.totalorder %s13, 2
      %s150 = scalar_select %p149, %s13, 2
      %s151 = smul.addr %s150, 56
      %s152 = smul.addr %s151, 4
      %s153 = scalar_lea.vmem %s0, %s152
      %p154 = scmp.lt.s32.totalorder %s13, 2
      %s155 = scalar_select %p154, %s13, 2
      %s156 = smul.addr %s155, 14
      %s157 = smul.addr %s156, 4
      %s158 = scalar_lea.vmem %s1, %s157
      %p159 = scmp.lt.s32.totalorder %s13, 2
      %s160 = scalar_select %p159, %s13, 2
      %s161 = smul.addr %s160, 14
      %s162 = smul.addr %s161, 4
      %s163 = scalar_lea.vmem %s2, %s162
      %v164 = vld [vmem:[%s153] sm:$0x77]
      %v165 = vld [vmem:[%s153 + $0x8] sm:$0x77]
      %v166 = vld [vmem:[%s153 + $0x10] sm:$0x77]
      %v167 = vld [vmem:[%s153 + $0x18] sm:$0x77]
      %v168 = vld [vmem:[%s153 + $0x20] sm:$0x77]
      %v169 = vld [vmem:[%s153 + $0x28] sm:$0x77]
      %v170 = vld [vmem:[%s153 + $0x30] sm:$0x77]
      %v171 = vld [vmem:[%s153 + $0x38] sm:$0x77]
      %v172 = vld [vmem:[%s153 + $0x40] sm:$0x77]
      %v173 = vld [vmem:[%s153 + $0x48] sm:$0x77]
      %v174 = vld [vmem:[%s153 + $0x50] sm:$0x77]
      %v175 = vld [vmem:[%s153 + $0x58] sm:$0x77]
      %v176 = vld [vmem:[%s153 + $0x60] sm:$0x77]
      %v177 = vld [vmem:[%s153 + $0x68] sm:$0x77]
      %v178 = vld [vmem:[%s153 + $0x70] sm:$0x77]
      %v179 = vld [vmem:[%s153 + $0x78] sm:$0x77]
      %v180 = vld [vmem:[%s153 + $0x80] sm:$0x77]
      %v181 = vld [vmem:[%s153 + $0x88] sm:$0x77]
      %v182 = vld [vmem:[%s153 + $0x90] sm:$0x77]
      %v183 = vld [vmem:[%s153 + $0x98] sm:$0x77]
      %v184 = vld [vmem:[%s153 + $0xa0] sm:$0x77]
      %v185 = vld [vmem:[%s153 + $0xa8] sm:$0x77]
      %v186 = vld [vmem:[%s153 + $0xb0] sm:$0x77]
      %v187 = vld [vmem:[%s153 + $0xb8] sm:$0x77]
      %v188 = vld [vmem:[%s153 + $0xc0] sm:$0x77]
      %v189 = vld [vmem:[%s153 + $0xc8] sm:$0x77]
      %v190 = vld [vmem:[%s153 + $0xd0] sm:$0x77]
      %v191 = vld [vmem:[%s153 + $0xd8] sm:$0x77]
      %v192 = vld [vmem:[%s158] sm:$0x77]
      %v193 = vld [vmem:[%s158 + $0x8] sm:$0x77]
      %v194 = vld [vmem:[%s158 + $0x10] sm:$0x77]
      %v195 = vld [vmem:[%s158 + $0x18] sm:$0x77]
      %v196 = vld [vmem:[%s158 + $0x20] sm:$0x77]
      %v197 = vld [vmem:[%s158 + $0x28] sm:$0x77]
      %v198 = vld [vmem:[%s158 + $0x30] sm:$0x77]
      %v199 = vsub.f32 %v164, %v192
      %v200 = vsub.f32 %v165, %v193
      %v201 = vsub.f32 %v166, %v194
      %v202 = vsub.f32 %v167, %v195
      %v203 = vsub.f32 %v168, %v196
      %v204 = vsub.f32 %v169, %v197
      %v205 = vsub.f32 %v170, %v198
      %v206 = vsub.f32 %v171, %v192
      %v207 = vsub.f32 %v172, %v193
      %v208 = vsub.f32 %v173, %v194
      %v209 = vsub.f32 %v174, %v195
      %v210 = vsub.f32 %v175, %v196
      %v211 = vsub.f32 %v176, %v197
      %v212 = vsub.f32 %v177, %v198
      %v213 = vsub.f32 %v178, %v192
      %v214 = vsub.f32 %v179, %v193
      %v215 = vsub.f32 %v180, %v194
      %v216 = vsub.f32 %v181, %v195
      %v217 = vsub.f32 %v182, %v196
      %v218 = vsub.f32 %v183, %v197
      %v219 = vsub.f32 %v184, %v198
      %v220 = vsub.f32 %v185, %v192
      %v221 = vsub.f32 %v186, %v193
      %v222 = vsub.f32 %v187, %v194
      %v223 = vsub.f32 %v188, %v195
      %v224 = vsub.f32 %v189, %v196
      %v225 = vsub.f32 %v190, %v197
      %v226 = vsub.f32 %v191, %v198
      %v227 = vmul.f32 %v199, %v199
      %v228 = vmul.f32 %v200, %v200
      %v229 = vmul.f32 %v201, %v201
      %v230 = vmul.f32 %v202, %v202
      %v231 = vmul.f32 %v203, %v203
      %v232 = vmul.f32 %v204, %v204
      %v233 = vmul.f32 %v205, %v205
      %v234 = vmul.f32 %v206, %v206
      %v235 = vmul.f32 %v207, %v207
      %v236 = vmul.f32 %v208, %v208
      %v237 = vmul.f32 %v209, %v209
      %v238 = vmul.f32 %v210, %v210
      %v239 = vmul.f32 %v211, %v211
      %v240 = vmul.f32 %v212, %v212
      %v241 = vmul.f32 %v213, %v213
      %v242 = vmul.f32 %v214, %v214
      %v243 = vmul.f32 %v215, %v215
      %v244 = vmul.f32 %v216, %v216
      %v245 = vmul.f32 %v217, %v217
      %v246 = vmul.f32 %v218, %v218
      %v247 = vmul.f32 %v219, %v219
      %v248 = vmul.f32 %v220, %v220
      %v249 = vmul.f32 %v221, %v221
      %v250 = vmul.f32 %v222, %v222
      %v251 = vmul.f32 %v223, %v223
      %v252 = vmul.f32 %v224, %v224
      %v253 = vmul.f32 %v225, %v225
      %v254 = vmul.f32 %v226, %v226
      %v283 = vcombine.high %v227, %v227
      %v284 = vcombine.high %v228, %v228
      %v285 = vcombine.high %v229, %v229
      %v286 = vcombine.high %v230, %v230
      %v287 = vcombine.high %v231, %v231
      %v288 = vcombine.high %v232, %v232
      %v289 = vcombine.high %v233, %v233
      %v290 = vcombine.high %v234, %v234
      %v291 = vcombine.high %v235, %v235
      %v292 = vcombine.high %v236, %v236
      %v293 = vcombine.high %v237, %v237
      %v294 = vcombine.high %v238, %v238
      %v295 = vcombine.high %v239, %v239
      %v296 = vcombine.high %v240, %v240
      %v297 = vcombine.high %v241, %v241
      %v298 = vcombine.high %v242, %v242
      %v299 = vcombine.high %v243, %v243
      %v300 = vcombine.high %v244, %v244
      %v301 = vcombine.high %v245, %v245
      %v302 = vcombine.high %v246, %v246
      %v303 = vcombine.high %v247, %v247
      %v304 = vcombine.high %v248, %v248
      %v305 = vcombine.high %v249, %v249
      %v306 = vcombine.high %v250, %v250
      %v307 = vcombine.high %v251, %v251
      %v308 = vcombine.high %v252, %v252
      %v309 = vcombine.high %v253, %v253
      %v310 = vcombine.high %v254, %v254
      %vm339 = vcmask 1042432
      %v340 = vsel %vm339, %v227, 0.0
      %v341 = vrot.slane %v340, 4
      %v342 = vadd.f32 %v340, %v341
      %v343 = vrot.slane %v342, 2
      %v344 = vadd.f32 %v342, %v343
      %v345 = vrot.slane %v344, 1
      %v346 = vadd.f32 %v344, %v345
      %v347 = vsel %vm339, %v283, 0.0
      %v348 = vrot.slane %v347, 4
      %v349 = vadd.f32 %v347, %v348
      %v350 = vrot.slane %v349, 2
      %v351 = vadd.f32 %v349, %v350
      %v352 = vrot.slane %v351, 1
      %v353 = vadd.f32 %v351, %v352
      %v354 = vsel %vm339, %v228, 0.0
      %v355 = vrot.slane %v354, 4
      %v356 = vadd.f32 %v354, %v355
      %v357 = vrot.slane %v356, 2
      %v358 = vadd.f32 %v356, %v357
      %v359 = vrot.slane %v358, 1
      %v360 = vadd.f32 %v358, %v359
      %v361 = vsel %vm339, %v284, 0.0
      %v362 = vrot.slane %v361, 4
      %v363 = vadd.f32 %v361, %v362
      %v364 = vrot.slane %v363, 2
      %v365 = vadd.f32 %v363, %v364
      %v366 = vrot.slane %v365, 1
      %v367 = vadd.f32 %v365, %v366
      %v368 = vsel %vm339, %v229, 0.0
      %v369 = vrot.slane %v368, 4
      %v370 = vadd.f32 %v368, %v369
      %v371 = vrot.slane %v370, 2
      %v372 = vadd.f32 %v370, %v371
      %v373 = vrot.slane %v372, 1
      %v374 = vadd.f32 %v372, %v373
      %v375 = vsel %vm339, %v285, 0.0
      %v376 = vrot.slane %v375, 4
      %v377 = vadd.f32 %v375, %v376
      %v378 = vrot.slane %v377, 2
      %v379 = vadd.f32 %v377, %v378
      %v380 = vrot.slane %v379, 1
      %v381 = vadd.f32 %v379, %v380
      %v382 = vsel %vm339, %v230, 0.0
      %v383 = vrot.slane %v382, 4
      %v384 = vadd.f32 %v382, %v383
      %v385 = vrot.slane %v384, 2
      %v386 = vadd.f32 %v384, %v385
      %v387 = vrot.slane %v386, 1
      %v388 = vadd.f32 %v386, %v387
      %v389 = vsel %vm339, %v286, 0.0
      %v390 = vrot.slane %v389, 4
      %v391 = vadd.f32 %v389, %v390
      %v392 = vrot.slane %v391, 2
      %v393 = vadd.f32 %v391, %v392
      %v394 = vrot.slane %v393, 1
      %v395 = vadd.f32 %v393, %v394
      %v396 = vsel %vm339, %v231, 0.0
      %v397 = vrot.slane %v396, 4
      %v398 = vadd.f32 %v396, %v397
      %v399 = vrot.slane %v398, 2
      %v400 = vadd.f32 %v398, %v399
      %v401 = vrot.slane %v400, 1
      %v402 = vadd.f32 %v400, %v401
      %v403 = vsel %vm339, %v287, 0.0
      %v404 = vrot.slane %v403, 4
      %v405 = vadd.f32 %v403, %v404
      %v406 = vrot.slane %v405, 2
      %v407 = vadd.f32 %v405, %v406
      %v408 = vrot.slane %v407, 1
      %v409 = vadd.f32 %v407, %v408
      %v410 = vsel %vm339, %v232, 0.0
      %v411 = vrot.slane %v410, 4
      %v412 = vadd.f32 %v410, %v411
      %v413 = vrot.slane %v412, 2
      %v414 = vadd.f32 %v412, %v413
      %v415 = vrot.slane %v414, 1
      %v416 = vadd.f32 %v414, %v415
      %v417 = vsel %vm339, %v288, 0.0
      %v418 = vrot.slane %v417, 4
      %v419 = vadd.f32 %v417, %v418
      %v420 = vrot.slane %v419, 2
      %v421 = vadd.f32 %v419, %v420
      %v422 = vrot.slane %v421, 1
      %v423 = vadd.f32 %v421, %v422
      %v424 = vsel %vm339, %v233, 0.0
      %v425 = vrot.slane %v424, 4
      %v426 = vadd.f32 %v424, %v425
      %v427 = vrot.slane %v426, 2
      %v428 = vadd.f32 %v426, %v427
      %v429 = vrot.slane %v428, 1
      %v430 = vadd.f32 %v428, %v429
      %vm431 = vcmask 518144
      %v432 = vsel %vm431, %v289, 0.0
      %v433 = vrot.slane %v432, 4
      %v434 = vadd.f32 %v432, %v433
      %v435 = vrot.slane %v434, 2
      %v436 = vadd.f32 %v434, %v435
      %v437 = vrot.slane %v436, 1
      %v438 = vadd.f32 %v436, %v437
      %v439 = vsel %vm339, %v234, 0.0
      %v440 = vrot.slane %v439, 4
      %v441 = vadd.f32 %v439, %v440
      %v442 = vrot.slane %v441, 2
      %v443 = vadd.f32 %v441, %v442
      %v444 = vrot.slane %v443, 1
      %v445 = vadd.f32 %v443, %v444
      %v446 = vsel %vm339, %v290, 0.0
      %v447 = vrot.slane %v446, 4
      %v448 = vadd.f32 %v446, %v447
      %v449 = vrot.slane %v448, 2
      %v450 = vadd.f32 %v448, %v449
      %v451 = vrot.slane %v450, 1
      %v452 = vadd.f32 %v450, %v451
      %v453 = vsel %vm339, %v235, 0.0
      %v454 = vrot.slane %v453, 4
      %v455 = vadd.f32 %v453, %v454
      %v456 = vrot.slane %v455, 2
      %v457 = vadd.f32 %v455, %v456
      %v458 = vrot.slane %v457, 1
      %v459 = vadd.f32 %v457, %v458
      %v460 = vsel %vm339, %v291, 0.0
      %v461 = vrot.slane %v460, 4
      %v462 = vadd.f32 %v460, %v461
      %v463 = vrot.slane %v462, 2
      %v464 = vadd.f32 %v462, %v463
      %v465 = vrot.slane %v464, 1
      %v466 = vadd.f32 %v464, %v465
      %v467 = vsel %vm339, %v236, 0.0
      %v468 = vrot.slane %v467, 4
      %v469 = vadd.f32 %v467, %v468
      %v470 = vrot.slane %v469, 2
      %v471 = vadd.f32 %v469, %v470
      %v472 = vrot.slane %v471, 1
      %v473 = vadd.f32 %v471, %v472
      %v474 = vsel %vm339, %v292, 0.0
      %v475 = vrot.slane %v474, 4
      %v476 = vadd.f32 %v474, %v475
      %v477 = vrot.slane %v476, 2
      %v478 = vadd.f32 %v476, %v477
      %v479 = vrot.slane %v478, 1
      %v480 = vadd.f32 %v478, %v479
      %v481 = vsel %vm339, %v237, 0.0
      %v482 = vrot.slane %v481, 4
      %v483 = vadd.f32 %v481, %v482
      %v484 = vrot.slane %v483, 2
      %v485 = vadd.f32 %v483, %v484
      %v486 = vrot.slane %v485, 1
      %v487 = vadd.f32 %v485, %v486
      %v488 = vsel %vm339, %v293, 0.0
      %v489 = vrot.slane %v488, 4
      %v490 = vadd.f32 %v488, %v489
      %v491 = vrot.slane %v490, 2
      %v492 = vadd.f32 %v490, %v491
      %v493 = vrot.slane %v492, 1
      %v494 = vadd.f32 %v492, %v493
      %v495 = vsel %vm339, %v238, 0.0
      %v496 = vrot.slane %v495, 4
      %v497 = vadd.f32 %v495, %v496
      %v498 = vrot.slane %v497, 2
      %v499 = vadd.f32 %v497, %v498
      %v500 = vrot.slane %v499, 1
      %v501 = vadd.f32 %v499, %v500
      %v502 = vsel %vm339, %v294, 0.0
      %v503 = vrot.slane %v502, 4
      %v504 = vadd.f32 %v502, %v503
      %v505 = vrot.slane %v504, 2
      %v506 = vadd.f32 %v504, %v505
      %v507 = vrot.slane %v506, 1
      %v508 = vadd.f32 %v506, %v507
      %v509 = vsel %vm339, %v239, 0.0
      %v510 = vrot.slane %v509, 4
      %v511 = vadd.f32 %v509, %v510
      %v512 = vrot.slane %v511, 2
      %v513 = vadd.f32 %v511, %v512
      %v514 = vrot.slane %v513, 1
      %v515 = vadd.f32 %v513, %v514
      %v516 = vsel %vm339, %v295, 0.0
      %v517 = vrot.slane %v516, 4
      %v518 = vadd.f32 %v516, %v517
      %v519 = vrot.slane %v518, 2
      %v520 = vadd.f32 %v518, %v519
      %v521 = vrot.slane %v520, 1
      %v522 = vadd.f32 %v520, %v521
      %v523 = vsel %vm339, %v240, 0.0
      %v524 = vrot.slane %v523, 4
      %v525 = vadd.f32 %v523, %v524
      %v526 = vrot.slane %v525, 2
      %v527 = vadd.f32 %v525, %v526
      %v528 = vrot.slane %v527, 1
      %v529 = vadd.f32 %v527, %v528
      %v530 = vsel %vm431, %v296, 0.0
      %v531 = vrot.slane %v530, 4
      %v532 = vadd.f32 %v530, %v531
      %v533 = vrot.slane %v532, 2
      %v534 = vadd.f32 %v532, %v533
      %v535 = vrot.slane %v534, 1
      %v536 = vadd.f32 %v534, %v535
      %v537 = vsel %vm339, %v241, 0.0
      %v538 = vrot.slane %v537, 4
      %v539 = vadd.f32 %v537, %v538
      %v540 = vrot.slane %v539, 2
      %v541 = vadd.f32 %v539, %v540
      %v542 = vrot.slane %v541, 1
      %v543 = vadd.f32 %v541, %v542
      %v544 = vsel %vm339, %v297, 0.0
      %v545 = vrot.slane %v544, 4
      %v546 = vadd.f32 %v544, %v545
      %v547 = vrot.slane %v546, 2
      %v548 = vadd.f32 %v546, %v547
      %v549 = vrot.slane %v548, 1
      %v550 = vadd.f32 %v548, %v549
      %v551 = vsel %vm339, %v242, 0.0
      %v552 = vrot.slane %v551, 4
      %v553 = vadd.f32 %v551, %v552
      %v554 = vrot.slane %v553, 2
      %v555 = vadd.f32 %v553, %v554
      %v556 = vrot.slane %v555, 1
      %v557 = vadd.f32 %v555, %v556
      %v558 = vsel %vm339, %v298, 0.0
      %v559 = vrot.slane %v558, 4
      %v560 = vadd.f32 %v558, %v559
      %v561 = vrot.slane %v560, 2
      %v562 = vadd.f32 %v560, %v561
      %v563 = vrot.slane %v562, 1
      %v564 = vadd.f32 %v562, %v563
      %v565 = vsel %vm339, %v243, 0.0
      %v566 = vrot.slane %v565, 4
      %v567 = vadd.f32 %v565, %v566
      %v568 = vrot.slane %v567, 2
      %v569 = vadd.f32 %v567, %v568
      %v570 = vrot.slane %v569, 1
      %v571 = vadd.f32 %v569, %v570
      %v572 = vsel %vm339, %v299, 0.0
      %v573 = vrot.slane %v572, 4
      %v574 = vadd.f32 %v572, %v573
      %v575 = vrot.slane %v574, 2
      %v576 = vadd.f32 %v574, %v575
      %v577 = vrot.slane %v576, 1
      %v578 = vadd.f32 %v576, %v577
      %v579 = vsel %vm339, %v244, 0.0
      %v580 = vrot.slane %v579, 4
      %v581 = vadd.f32 %v579, %v580
      %v582 = vrot.slane %v581, 2
      %v583 = vadd.f32 %v581, %v582
      %v584 = vrot.slane %v583, 1
      %v585 = vadd.f32 %v583, %v584
      %v586 = vsel %vm339, %v300, 0.0
      %v587 = vrot.slane %v586, 4
      %v588 = vadd.f32 %v586, %v587
      %v589 = vrot.slane %v588, 2
      %v590 = vadd.f32 %v588, %v589
      %v591 = vrot.slane %v590, 1
      %v592 = vadd.f32 %v590, %v591
      %v593 = vsel %vm339, %v245, 0.0
      %v594 = vrot.slane %v593, 4
      %v595 = vadd.f32 %v593, %v594
      %v596 = vrot.slane %v595, 2
      %v597 = vadd.f32 %v595, %v596
      %v598 = vrot.slane %v597, 1
      %v599 = vadd.f32 %v597, %v598
      %v600 = vsel %vm339, %v301, 0.0
      %v601 = vrot.slane %v600, 4
      %v602 = vadd.f32 %v600, %v601
      %v603 = vrot.slane %v602, 2
      %v604 = vadd.f32 %v602, %v603
      %v605 = vrot.slane %v604, 1
      %v606 = vadd.f32 %v604, %v605
      %v607 = vsel %vm339, %v246, 0.0
      %v608 = vrot.slane %v607, 4
      %v609 = vadd.f32 %v607, %v608
      %v610 = vrot.slane %v609, 2
      %v611 = vadd.f32 %v609, %v610
      %v612 = vrot.slane %v611, 1
      %v613 = vadd.f32 %v611, %v612
      %v614 = vsel %vm339, %v302, 0.0
      %v615 = vrot.slane %v614, 4
      %v616 = vadd.f32 %v614, %v615
      %v617 = vrot.slane %v616, 2
      %v618 = vadd.f32 %v616, %v617
      %v619 = vrot.slane %v618, 1
      %v620 = vadd.f32 %v618, %v619
      %v621 = vsel %vm339, %v247, 0.0
      %v622 = vrot.slane %v621, 4
      %v623 = vadd.f32 %v621, %v622
      %v624 = vrot.slane %v623, 2
      %v625 = vadd.f32 %v623, %v624
      %v626 = vrot.slane %v625, 1
      %v627 = vadd.f32 %v625, %v626
      %v628 = vsel %vm431, %v303, 0.0
      %v629 = vrot.slane %v628, 4
      %v630 = vadd.f32 %v628, %v629
      %v631 = vrot.slane %v630, 2
      %v632 = vadd.f32 %v630, %v631
      %v633 = vrot.slane %v632, 1
      %v634 = vadd.f32 %v632, %v633
      %v635 = vsel %vm339, %v248, 0.0
      %v636 = vrot.slane %v635, 4
      %v637 = vadd.f32 %v635, %v636
      %v638 = vrot.slane %v637, 2
      %v639 = vadd.f32 %v637, %v638
      %v640 = vrot.slane %v639, 1
      %v641 = vadd.f32 %v639, %v640
      %v642 = vsel %vm339, %v304, 0.0
      %v643 = vrot.slane %v642, 4
      %v644 = vadd.f32 %v642, %v643
      %v645 = vrot.slane %v644, 2
      %v646 = vadd.f32 %v644, %v645
      %v647 = vrot.slane %v646, 1
      %v648 = vadd.f32 %v646, %v647
      %v649 = vsel %vm339, %v249, 0.0
      %v650 = vrot.slane %v649, 4
      %v651 = vadd.f32 %v649, %v650
      %v652 = vrot.slane %v651, 2
      %v653 = vadd.f32 %v651, %v652
      %v654 = vrot.slane %v653, 1
      %v655 = vadd.f32 %v653, %v654
      %v656 = vsel %vm339, %v305, 0.0
      %v657 = vrot.slane %v656, 4
      %v658 = vadd.f32 %v656, %v657
      %v659 = vrot.slane %v658, 2
      %v660 = vadd.f32 %v658, %v659
      %v661 = vrot.slane %v660, 1
      %v662 = vadd.f32 %v660, %v661
      %v663 = vsel %vm339, %v250, 0.0
      %v664 = vrot.slane %v663, 4
      %v665 = vadd.f32 %v663, %v664
      %v666 = vrot.slane %v665, 2
      %v667 = vadd.f32 %v665, %v666
      %v668 = vrot.slane %v667, 1
      %v669 = vadd.f32 %v667, %v668
      %v670 = vsel %vm339, %v306, 0.0
      %v671 = vrot.slane %v670, 4
      %v672 = vadd.f32 %v670, %v671
      %v673 = vrot.slane %v672, 2
      %v674 = vadd.f32 %v672, %v673
      %v675 = vrot.slane %v674, 1
      %v676 = vadd.f32 %v674, %v675
      %v677 = vsel %vm339, %v251, 0.0
      %v678 = vrot.slane %v677, 4
      %v679 = vadd.f32 %v677, %v678
      %v680 = vrot.slane %v679, 2
      %v681 = vadd.f32 %v679, %v680
      %v682 = vrot.slane %v681, 1
      %v683 = vadd.f32 %v681, %v682
      %v684 = vsel %vm339, %v307, 0.0
      %v685 = vrot.slane %v684, 4
      %v686 = vadd.f32 %v684, %v685
      %v687 = vrot.slane %v686, 2
      %v688 = vadd.f32 %v686, %v687
      %v689 = vrot.slane %v688, 1
      %v690 = vadd.f32 %v688, %v689
      %v691 = vsel %vm339, %v252, 0.0
      %v692 = vrot.slane %v691, 4
      %v693 = vadd.f32 %v691, %v692
      %v694 = vrot.slane %v693, 2
      %v695 = vadd.f32 %v693, %v694
      %v696 = vrot.slane %v695, 1
      %v697 = vadd.f32 %v695, %v696
      %v698 = vsel %vm339, %v308, 0.0
      %v699 = vrot.slane %v698, 4
      %v700 = vadd.f32 %v698, %v699
      %v701 = vrot.slane %v700, 2
      %v702 = vadd.f32 %v700, %v701
      %v703 = vrot.slane %v702, 1
      %v704 = vadd.f32 %v702, %v703
      %v705 = vsel %vm339, %v253, 0.0
      %v706 = vrot.slane %v705, 4
      %v707 = vadd.f32 %v705, %v706
      %v708 = vrot.slane %v707, 2
      %v709 = vadd.f32 %v707, %v708
      %v710 = vrot.slane %v709, 1
      %v711 = vadd.f32 %v709, %v710
      %v712 = vsel %vm339, %v309, 0.0
      %v713 = vrot.slane %v712, 4
      %v714 = vadd.f32 %v712, %v713
      %v715 = vrot.slane %v714, 2
      %v716 = vadd.f32 %v714, %v715
      %v717 = vrot.slane %v716, 1
      %v718 = vadd.f32 %v716, %v717
      %v719 = vsel %vm339, %v254, 0.0
      %v720 = vrot.slane %v719, 4
      %v721 = vadd.f32 %v719, %v720
      %v722 = vrot.slane %v721, 2
      %v723 = vadd.f32 %v721, %v722
      %v724 = vrot.slane %v723, 1
      %v725 = vadd.f32 %v723, %v724
      %v726 = vsel %vm431, %v310, 0.0
      %v727 = vrot.slane %v726, 4
      %v728 = vadd.f32 %v726, %v727
      %v729 = vrot.slane %v728, 2
      %v730 = vadd.f32 %v728, %v729
      %v731 = vrot.slane %v730, 1
      %v732 = vadd.f32 %v730, %v731
      %v733 = vmul.f32 %v346, 0.5
      %v734 = vmul.f32 %v353, 0.5
      %v735 = vmul.f32 %v360, 0.5
      %v736 = vmul.f32 %v367, 0.5
      %v737 = vmul.f32 %v374, 0.5
      %v738 = vmul.f32 %v381, 0.5
      %v739 = vmul.f32 %v388, 0.5
      %v740 = vmul.f32 %v395, 0.5
      %v741 = vmul.f32 %v402, 0.5
      %v742 = vmul.f32 %v409, 0.5
      %v743 = vmul.f32 %v416, 0.5
      %v744 = vmul.f32 %v423, 0.5
      %v745 = vmul.f32 %v430, 0.5
      %v746 = vmul.f32 %v438, 0.5
      %v747 = vmul.f32 %v445, 0.5
      %v748 = vmul.f32 %v452, 0.5
      %v749 = vmul.f32 %v459, 0.5
      %v750 = vmul.f32 %v466, 0.5
      %v751 = vmul.f32 %v473, 0.5
      %v752 = vmul.f32 %v480, 0.5
      %v753 = vmul.f32 %v487, 0.5
      %v754 = vmul.f32 %v494, 0.5
      %v755 = vmul.f32 %v501, 0.5
      %v756 = vmul.f32 %v508, 0.5
      %v757 = vmul.f32 %v515, 0.5
      %v758 = vmul.f32 %v522, 0.5
      %v759 = vmul.f32 %v529, 0.5
      %v760 = vmul.f32 %v536, 0.5
      %v761 = vmul.f32 %v543, 0.5
      %v762 = vmul.f32 %v550, 0.5
      %v763 = vmul.f32 %v557, 0.5
      %v764 = vmul.f32 %v564, 0.5
      %v765 = vmul.f32 %v571, 0.5
      %v766 = vmul.f32 %v578, 0.5
      %v767 = vmul.f32 %v585, 0.5
      %v768 = vmul.f32 %v592, 0.5
      %v769 = vmul.f32 %v599, 0.5
      %v770 = vmul.f32 %v606, 0.5
      %v771 = vmul.f32 %v613, 0.5
      %v772 = vmul.f32 %v620, 0.5
      %v773 = vmul.f32 %v627, 0.5
      %v774 = vmul.f32 %v634, 0.5
      %v775 = vmul.f32 %v641, 0.5
      %v776 = vmul.f32 %v648, 0.5
      %v777 = vmul.f32 %v655, 0.5
      %v778 = vmul.f32 %v662, 0.5
      %v779 = vmul.f32 %v669, 0.5
      %v780 = vmul.f32 %v676, 0.5
      %v781 = vmul.f32 %v683, 0.5
      %v782 = vmul.f32 %v690, 0.5
      %v783 = vmul.f32 %v697, 0.5
      %v784 = vmul.f32 %v704, 0.5
      %v785 = vmul.f32 %v711, 0.5
      %v786 = vmul.f32 %v718, 0.5
      %v787 = vmul.f32 %v725, 0.5
      %v788 = vmul.f32 %v732, 0.5
      %v845 = vcombine.low %v733, %v734
      %v846 = vcombine.low %v735, %v736
      %v847 = vcombine.low %v737, %v738
      %v848 = vcombine.low %v739, %v740
      %v849 = vcombine.low %v741, %v742
      %v850 = vcombine.low %v743, %v744
      %v851 = vcombine.low %v745, %v746
      %v852 = vcombine.low %v747, %v748
      %v853 = vcombine.low %v749, %v750
      %v854 = vcombine.low %v751, %v752
      %v855 = vcombine.low %v753, %v754
      %v856 = vcombine.low %v755, %v756
      %v857 = vcombine.low %v757, %v758
      %v858 = vcombine.low %v759, %v760
      %v859 = vcombine.low %v761, %v762
      %v860 = vcombine.low %v763, %v764
      %v861 = vcombine.low %v765, %v766
      %v862 = vcombine.low %v767, %v768
      %v863 = vcombine.low %v769, %v770
      %v864 = vcombine.low %v771, %v772
      %v865 = vcombine.low %v773, %v774
      %v866 = vcombine.low %v775, %v776
      %v867 = vcombine.low %v777, %v778
      %v868 = vcombine.low %v779, %v780
      %v869 = vcombine.low %v781, %v782
      %v870 = vcombine.low %v783, %v784
      %v871 = vcombine.low %v785, %v786
      %v872 = vcombine.low %v787, %v788
      %v873 = vrot.slane %v852, 7
      %vm874 = vcmask 1041409
      %v875 = vsel %vm874, %v873, %v845
      %vm876 = vcmask 1045509
      %v877 = vsel %vm876, %v873, %v875
      %v878 = vrot.slane %v859, 6
      %vm879 = vcmask 1042434
      %v880 = vsel %vm879, %v878, %v877
      %vm881 = vcmask 1046534
      %v882 = vsel %vm881, %v878, %v880
      %v883 = vrot.slane %v866, 5
      %vm884 = vcmask 1043459
      %v885 = vsel %vm884, %v883, %v882
      %vm886 = vcmask 1047559
      %v887 = vsel %vm886, %v883, %v885
      %v888 = vrot.slane %v853, 7
      %v889 = vsel %vm874, %v888, %v846
      %v890 = vsel %vm876, %v888, %v889
      %v891 = vrot.slane %v860, 6
      %v892 = vsel %vm879, %v891, %v890
      %v893 = vsel %vm881, %v891, %v892
      %v894 = vrot.slane %v867, 5
      %v895 = vsel %vm884, %v894, %v893
      %v896 = vsel %vm886, %v894, %v895
      %v897 = vrot.slane %v854, 7
      %v898 = vsel %vm874, %v897, %v847
      %v899 = vsel %vm876, %v897, %v898
      %v900 = vrot.slane %v861, 6
      %v901 = vsel %vm879, %v900, %v899
      %v902 = vsel %vm881, %v900, %v901
      %v903 = vrot.slane %v868, 5
      %v904 = vsel %vm884, %v903, %v902
      %v905 = vsel %vm886, %v903, %v904
      %v906 = vrot.slane %v855, 7
      %v907 = vsel %vm874, %v906, %v848
      %v908 = vsel %vm876, %v906, %v907
      %v909 = vrot.slane %v862, 6
      %v910 = vsel %vm879, %v909, %v908
      %v911 = vsel %vm881, %v909, %v910
      %v912 = vrot.slane %v869, 5
      %v913 = vsel %vm884, %v912, %v911
      %v914 = vsel %vm886, %v912, %v913
      %v915 = vrot.slane %v856, 7
      %v916 = vsel %vm874, %v915, %v849
      %v917 = vsel %vm876, %v915, %v916
      %v918 = vrot.slane %v863, 6
      %v919 = vsel %vm879, %v918, %v917
      %v920 = vsel %vm881, %v918, %v919
      %v921 = vrot.slane %v870, 5
      %v922 = vsel %vm884, %v921, %v920
      %v923 = vsel %vm886, %v921, %v922
      %v924 = vrot.slane %v857, 7
      %v925 = vsel %vm874, %v924, %v850
      %v926 = vsel %vm876, %v924, %v925
      %v927 = vrot.slane %v864, 6
      %v928 = vsel %vm879, %v927, %v926
      %v929 = vsel %vm881, %v927, %v928
      %v930 = vrot.slane %v871, 5
      %v931 = vsel %vm884, %v930, %v929
      %v932 = vsel %vm886, %v930, %v931
      %v933 = vrot.slane %v858, 7
      %v934 = vsel %vm874, %v933, %v851
      %v935 = vsel %vm876, %v933, %v934
      %v936 = vrot.slane %v865, 6
      %v937 = vsel %vm879, %v936, %v935
      %v938 = vsel %vm881, %v936, %v937
      %v939 = vrot.slane %v872, 5
      %v940 = vsel %vm884, %v939, %v938
      %v941 = vsel %vm886, %v939, %v940
      %949 = vst [vmem:[%s163] sm:$0xff] %v887
      %950 = vst [vmem:[%s163 + $0x8] sm:$0xff] %v896
      %951 = vst [vmem:[%s163 + $0x10] sm:$0xff] %v905
      %952 = vst [vmem:[%s163 + $0x18] sm:$0xff] %v914
      %953 = vst [vmem:[%s163 + $0x20] sm:$0xff] %v923
      %954 = vst [vmem:[%s163 + $0x28] sm:$0xff] %v932
      %vm955 = vcmask 1043456
      %vm956 = vcmask 523268
      %vm957 = vmor %vm956, %vm955
      %958 = vst.msk [vmem:[%s163 + $0x30] sm:$0xff] %vm957, %v941
      %p959 = scmp.lt.s32.totalorder %s13, 2
      %s960 = scalar_select %p959, %s13, 2
      %s961 = smul.addr %s960, 14
      %s962 = smul.addr %s961, 4
      %s963 = scalar_lea.vmem %s2, %s962
      // Predicated region
      $region29: #{wasserstein_tke_forward.2} parent=27 // pred_check
        %p964 = pneg %p83
      $region30: #{wasserstein_tke_forward.2} parent=27 // pred_check_branch
        %966 = sbr.rel (%p964) target = $region32
      $region31: #{wasserstein_tke_forward.2} parent=27 // pred_region
        _
      $region32: #{wasserstein_tke_forward.2} parent=27 // pred_fallthru
        _
    $region28: #{wasserstein_tke_forward.2} parent=5 // pred_fallthru
      _
    %p967 = scmp.le.s32.totalorder 2, %s8
    // Predicated region
    $region33: #{wasserstein_tke_forward.2} parent=5 // pred_check
      %p968 = pneg %p967
    $region34: #{wasserstein_tke_forward.2} parent=5 // pred_check_branch
      %970 = sbr.rel (%p968) target = $region36
    $region35: #{wasserstein_tke_forward.2} parent=5 // pred_region
      %s971 = ssub.s32 %s8, 2
      // Predicated region
      $region37: #{wasserstein_tke_forward.2} parent=35 // pred_check
        %p972 = pneg %p89
      $region38: #{wasserstein_tke_forward.2} parent=35 // pred_check_branch
        %974 = sbr.rel (%p972) target = $region40
      $region39: #{wasserstein_tke_forward.2} parent=35 // pred_region
        %p975 = scmp.lt.s32.totalorder %s14, 2
        %s976 = scalar_select %p975, %s14, 2
        %s977 = smul.addr %s976, 14
        %s978 = smul.addr %s977, 4
        %s979 = scalar_lea.vmem %s2, %s978
      $region40: #{wasserstein_tke_forward.2} parent=35 // pred_fallthru
        _
    $region36: #{wasserstein_tke_forward.2} parent=5 // pred_fallthru
      _
  $region6: #{wasserstein_tke_forward.2} parent=0 // loop_footer
    %s12 = sadd.s32 1, %s8
  $region7: #{wasserstein_tke_forward.2} parent=0 // loop_footer_branch
    %7 = sbr.rel target = $region3
  $region8: #{wasserstein_tke_forward.2} parent=0 // loop_exit
    _

// kernel: wasserstein_tke_forward.3
$region0: #{wasserstein_tke_forward.3}
  #allocation0 [shape = 'u32[]', space=smem, size = 0x4, offset = 0x4, fixed_abs, tag = 'smem constant byte address 0x4 - core index']
  #allocation1 [shape = 'u32[144,128]{1,0:T(1,128)}', space=vmem, size = 0x12000, scoped, tag = 'internal scratch']
  #allocation2 [shape = 'f32[12,512]{1,0:T(8,128)}', space=vmem, size = 0x8000, scoped, tag = 'scratch operand']
  %s0 = inlined_call_operand.vmem [shape: f32[12,1792], index: 0, kind: input, shape index: {}]
  %s1 = inlined_call_operand.vmem [shape: bf16[1792,512], index: 1, kind: input, shape index: {}]
  %s2 = inlined_call_operand.vmem [shape: bf16[512,16], index: 2, kind: input, shape index: {}]
  %s3 = inlined_call_operand.vmem [shape: f32[1,16], index: 3, kind: input, shape index: {}]
  %s4 = inlined_call_operand.hbm [shape: f32[12,16], index: 4, kind: output, shape index: {0}]
  %s5 = inlined_call_operand.vmem [shape: f32[3,2,2], index: 5, kind: output, shape index: {1}]
  %6 = xla_tuple %s4, %s5
  %s7 = sld [smem:[#allocation0]]
  $region88: #{wasserstein_tke_forward.3} parent=0
    _
  %s9 = ssub.s32 1, %s7
  %s10 = scalar_select 0, %s9, %s7
  $region1: #{wasserstein_tke_forward.3} parent=0
    #allocation3 [shape = 'u8[114688]{0}', space=vmem, size = 0x1c000, scoped, tag = 'input window, operand 0']
    #allocation4 [shape = 'u8[8192]{0}', space=vmem, size = 0x2000, scoped, tag = 'output window, operand 0, single buffered']
    #allocation5 [shape = 's32[2]{0}', space=sflag, size = 0x8, scoped, tag = 'scoped memory for wasserstein_tke_forward.3']
    %11 = vsyncpa [#allocation5], 0
    loop: start=0, step=1, limit=4
    $region2: #{wasserstein_tke_forward.3} parent=1 // loop_pre_header
      _
    $region3: #{wasserstein_tke_forward.3} parent=1 // loop_header
      %s13 = sphi 0, %s17
      %p14 = scmp.ge.s32.totalorder %s13, 4
      %s23 = sphi 0, %s25
      %s26 = sphi 0, %s23
      %s27 = sphi 0, %s26
      %s43 = sphi 0, %s27
      %s49 = sphi 0, %s51
      %s52 = sphi 0, %s49
      %s53 = sphi 0, %s52
      %s69 = sphi 0, %s53
      %s73 = sphi 0, %s73
      %s75 = sphi 0, %s73
      %s76 = sphi 0, %s75
      %s90 = sphi 0, %s76
      %s94 = sphi 0, %s94
      %s96 = sphi 0, %s94
      %s97 = sphi 0, %s96
      %s111 = sphi 0, %s97
      %s115 = sphi 0, %s115
      %s117 = sphi 0, %s115
      %s118 = sphi 0, %s117
      %s132 = sphi 0, %s118
      %s136 = sphi 0, %s136
      %s138 = sphi 0, %s136
      %s139 = sphi 0, %s138
      %s153 = sphi 0, %s139
    $region4: #{wasserstein_tke_forward.3} parent=1 // loop_header_branch
      %16 = sbr.rel (%p14) target = $region8
    $region5: #{wasserstein_tke_forward.3} parent=1 // loop_body
      %s18 = ssub.s32 %s13, 1
      %s19 = ssub.s32 %s13, 2
      %s20 = sadd.s32 %s13, 1
      %s21 = ssub.s32 %s13, %s20
      %p22 = scmp.eq.s32.totalorder %s21, 0
      %s24 = sadd.s32 %s23, 1
      %s25 = scalar_select %p22, %s23, %s24
      %p28 = pneg %p22
      %p29 = scmp.eq.s32.totalorder %s13, 1
      %p30 = por %p28, %p29
      %p31 = scmp.ne.s32.totalorder %s23, %s26
      %p32 = scmp.eq.s32.totalorder %s13, 0
      %p33 = por %p31, %p32
      %p34 = scmp.ne.s32.totalorder %s23, %s26
      %p35 = scmp.eq.s32.totalorder %s18, 1
      %p36 = por %p34, %p35
      %p37 = scmp.ne.s32.totalorder %s26, %s27
      %p38 = scmp.eq.s32.totalorder %s18, 0
      %p39 = por %p37, %p38
      %p40 = scmp.ne.s32.totalorder %s26, %s27
      %p41 = scmp.eq.s32.totalorder %s19, 1
      %p42 = por %p40, %p41
      %p44 = scmp.ne.s32.totalorder %s27, %s43
      %p45 = scmp.eq.s32.totalorder %s19, 0
      %p46 = por %p44, %p45
      %s47 = ssub.s32 %s13, %s20
      %p48 = scmp.eq.s32.totalorder %s47, 0
      %s50 = sadd.s32 %s49, 1
      %s51 = scalar_select %p48, %s49, %s50
      %p54 = pneg %p48
      %p55 = scmp.eq.s32.totalorder %s13, 1
      %p56 = por %p54, %p55
      %p57 = scmp.ne.s32.totalorder %s49, %s52
      %p58 = scmp.eq.s32.totalorder %s13, 0
      %p59 = por %p57, %p58
      %p60 = scmp.ne.s32.totalorder %s49, %s52
      %p61 = scmp.eq.s32.totalorder %s18, 1
      %p62 = por %p60, %p61
      %p63 = scmp.ne.s32.totalorder %s52, %s53
      %p64 = scmp.eq.s32.totalorder %s18, 0
      %p65 = por %p63, %p64
      %p66 = scmp.ne.s32.totalorder %s52, %s53
      %p67 = scmp.eq.s32.totalorder %s19, 1
      %p68 = por %p66, %p67
      %p70 = scmp.ne.s32.totalorder %s53, %s69
      %p71 = scmp.eq.s32.totalorder %s19, 0
      %p72 = por %p70, %p71
      %s74 = sadd.s32 %s73, 1
      %p77 = scmp.eq.s32.totalorder %s13, 1
      %p78 = scmp.ne.s32.totalorder %s73, %s75
      %p79 = scmp.eq.s32.totalorder %s13, 0
      %p80 = por %p78, %p79
      %p81 = scmp.ne.s32.totalorder %s73, %s75
      %p82 = scmp.eq.s32.totalorder %s18, 1
      %p83 = por %p81, %p82
      %p84 = scmp.ne.s32.totalorder %s75, %s76
      %p85 = scmp.eq.s32.totalorder %s18, 0
      %p86 = por %p84, %p85
      %p87 = scmp.ne.s32.totalorder %s75, %s76
      %p88 = scmp.eq.s32.totalorder %s19, 1
      %p89 = por %p87, %p88
      %p91 = scmp.ne.s32.totalorder %s76, %s90
      %p92 = scmp.eq.s32.totalorder %s19, 0
      %p93 = por %p91, %p92
      %s95 = sadd.s32 %s94, 1
      %p98 = scmp.eq.s32.totalorder %s13, 1
      %p99 = scmp.ne.s32.totalorder %s94, %s96
      %p100 = scmp.eq.s32.totalorder %s13, 0
      %p101 = por %p99, %p100
      %p102 = scmp.ne.s32.totalorder %s94, %s96
      %p103 = scmp.eq.s32.totalorder %s18, 1
      %p104 = por %p102, %p103
      %p105 = scmp.ne.s32.totalorder %s96, %s97
      %p106 = scmp.eq.s32.totalorder %s18, 0
      %p107 = por %p105, %p106
      %p108 = scmp.ne.s32.totalorder %s96, %s97
      %p109 = scmp.eq.s32.totalorder %s19, 1
      %p110 = por %p108, %p109
      %p112 = scmp.ne.s32.totalorder %s97, %s111
      %p113 = scmp.eq.s32.totalorder %s19, 0
      %p114 = por %p112, %p113
      %s116 = sadd.s32 %s115, 1
      %p119 = scmp.eq.s32.totalorder %s13, 1
      %p120 = scmp.ne.s32.totalorder %s115, %s117
      %p121 = scmp.eq.s32.totalorder %s13, 0
      %p122 = por %p120, %p121
      %p123 = scmp.ne.s32.totalorder %s115, %s117
      %p124 = scmp.eq.s32.totalorder %s18, 1
      %p125 = por %p123, %p124
      %p126 = scmp.ne.s32.totalorder %s117, %s118
      %p127 = scmp.eq.s32.totalorder %s18, 0
      %p128 = por %p126, %p127
      %p129 = scmp.ne.s32.totalorder %s117, %s118
      %p130 = scmp.eq.s32.totalorder %s19, 1
      %p131 = por %p129, %p130
      %p133 = scmp.ne.s32.totalorder %s118, %s132
      %p134 = scmp.eq.s32.totalorder %s19, 0
      %p135 = por %p133, %p134
      %s137 = sadd.s32 %s136, 1
      %p140 = scmp.eq.s32.totalorder %s13, 1
      %p141 = scmp.ne.s32.totalorder %s136, %s138
      %p142 = scmp.eq.s32.totalorder %s13, 0
      %p143 = por %p141, %p142
      %p144 = scmp.ne.s32.totalorder %s136, %s138
      %p145 = scmp.eq.s32.totalorder %s18, 1
      %p146 = por %p144, %p145
      %p147 = scmp.ne.s32.totalorder %s138, %s139
      %p148 = scmp.eq.s32.totalorder %s18, 0
      %p149 = por %p147, %p148
      %p150 = scmp.ne.s32.totalorder %s138, %s139
      %p151 = scmp.eq.s32.totalorder %s19, 1
      %p152 = por %p150, %p151
      %p154 = scmp.ne.s32.totalorder %s139, %s153
      %p155 = scmp.eq.s32.totalorder %s19, 0
      %p156 = por %p154, %p155
      %p157 = scmp.le.s32.totalorder 1, %s13
      %p158 = scmp.lt.s32.totalorder %s13, 3
      %p159 = pnand %p157, %p158
      %p160 = pneg %p159
      // Predicated region
      $region9: #{wasserstein_tke_forward.3} parent=5 // pred_check
        _
      $region10: #{wasserstein_tke_forward.3} parent=5 // pred_check_branch
        %162 = sbr.rel (%p159) target = $region12
      $region11: #{wasserstein_tke_forward.3} parent=5 // pred_region
        %s163 = ssub.s32 %s13, 1
        // Predicated region
        $region13: #{wasserstein_tke_forward.3} parent=11 // pred_check
          %p164 = pneg %p86
        $region14: #{wasserstein_tke_forward.3} parent=11 // pred_check_branch
          %166 = sbr.rel (%p164) target = $region16
        $region15: #{wasserstein_tke_forward.3} parent=11 // pred_region
          _
        $region16: #{wasserstein_tke_forward.3} parent=11 // pred_fallthru
          _
        // Predicated region
        $region17: #{wasserstein_tke_forward.3} parent=11 // pred_check
          %p167 = pneg %p107
        $region18: #{wasserstein_tke_forward.3} parent=11 // pred_check_branch
          %169 = sbr.rel (%p167) target = $region20
        $region19: #{wasserstein_tke_forward.3} parent=11 // pred_region
          _
        $region20: #{wasserstein_tke_forward.3} parent=11 // pred_fallthru
          _
      $region12: #{wasserstein_tke_forward.3} parent=5 // pred_fallthru
        _
      %p170 = scmp.lt.s32.totalorder %s13, 2
      // Predicated region
      $region21: #{wasserstein_tke_forward.3} parent=5 // pred_check
        %p171 = pneg %p170
      $region22: #{wasserstein_tke_forward.3} parent=5 // pred_check_branch
        %173 = sbr.rel (%p171) target = $region24
      $region23: #{wasserstein_tke_forward.3} parent=5 // pred_region
        // Predicated region
        $region25: #{wasserstein_tke_forward.3} parent=23 // pred_check
          %p174 = pneg %p33
        $region26: #{wasserstein_tke_forward.3} parent=23 // pred_check_branch
          %176 = sbr.rel (%p174) target = $region28
        $region27: #{wasserstein_tke_forward.3} parent=23 // pred_region
          %s177 = sand.u32 %s23, 1
          %s178 = sand.u32 %s23, 1
          %s179 = smul.addr %s178, 112
          %s180 = scalar_lea.vmem [#allocation3], %s179
          %s181 = smul.u32 7, %s13
          %s182 = smul.addr %s181, 8
          %s183 = scalar_lea.vmem %s0, %s182
          // Predicated region
          $region29: #{wasserstein_tke_forward.3} parent=27 // pred_check
            _
          $region30: #{wasserstein_tke_forward.3} parent=27 // pred_check_branch
            %185 = sbr.rel (0) target = $region32
          $region31: #{wasserstein_tke_forward.3} parent=27 // pred_region
            // Predicated region
            $region33: #{wasserstein_tke_forward.3} parent=31 // pred_check
              _
            $region34: #{wasserstein_tke_forward.3} parent=31 // pred_check_branch
              %187 = sbr.rel (0) target = $region36
            $region35: #{wasserstein_tke_forward.3} parent=31 // pred_region
              loop: start=0, step=1, limit=1
              $region37: #{wasserstein_tke_forward.3} parent=35 // loop_pre_header
                _
              $region38: #{wasserstein_tke_forward.3} parent=35 // loop_header
                %s189 = sphi 0, %s193
                %p190 = scmp.ge.s32.totalorder %s189, 1
                %s194 = sphi %s183, %s183
                %s195 = sphi %s180, %s180
              $region39: #{wasserstein_tke_forward.3} parent=35 // loop_header_branch
                %192 = sbr.rel (%p190) target = $region43
              $region40: #{wasserstein_tke_forward.3} parent=35 // loop_body
                %v196 = vld [vmem:[%s194] sm:$0xff]
                %197 = vst [vmem:[%s195] sm:$0xff] %v196
                %v198 = vld [vmem:[%s194 + $0x8] sm:$0xff]
                %199 = vst [vmem:[%s195 + $0x8] sm:$0xff] %v198
                %v200 = vld [vmem:[%s194 + $0x10] sm:$0xff]
                %201 = vst [vmem:[%s195 + $0x10] sm:$0xff] %v200
                %v202 = vld [vmem:[%s194 + $0x18] sm:$0xff]
                %203 = vst [vmem:[%s195 + $0x18] sm:$0xff] %v202
                %v204 = vld [vmem:[%s194 + $0x20] sm:$0xff]
                %205 = vst [vmem:[%s195 + $0x20] sm:$0xff] %v204
                %v206 = vld [vmem:[%s194 + $0x28] sm:$0xff]
                %207 = vst [vmem:[%s195 + $0x28] sm:$0xff] %v206
                %v208 = vld [vmem:[%s194 + $0x30] sm:$0xff]
                %209 = vst [vmem:[%s195 + $0x30] sm:$0xff] %v208
                %v210 = vld [vmem:[%s194 + $0x70] sm:$0xff]
                %211 = vst [vmem:[%s195 + $0x38] sm:$0xff] %v210
                %v212 = vld [vmem:[%s194 + $0x78] sm:$0xff]
                %213 = vst [vmem:[%s195 + $0x40] sm:$0xff] %v212
                %v214 = vld [vmem:[%s194 + $0x80] sm:$0xff]
                %215 = vst [vmem:[%s195 + $0x48] sm:$0xff] %v214
                %v216 = vld [vmem:[%s194 + $0x88] sm:$0xff]
                %217 = vst [vmem:[%s195 + $0x50] sm:$0xff] %v216
                %v218 = vld [vmem:[%s194 + $0x90] sm:$0xff]
                %219 = vst [vmem:[%s195 + $0x58] sm:$0xff] %v218
                %v220 = vld [vmem:[%s194 + $0x98] sm:$0xff]
                %221 = vst [vmem:[%s195 + $0x60] sm:$0xff] %v220
                %v222 = vld [vmem:[%s194 + $0xa0] sm:$0xff]
                %223 = vst [vmem:[%s195 + $0x68] sm:$0xff] %v222
              $region41: #{wasserstein_tke_forward.3} parent=35 // loop_footer
                %s193 = sadd.s32 1, %s189
              $region42: #{wasserstein_tke_forward.3} parent=35 // loop_footer_branch
                %188 = sbr.rel target = $region38
              $region43: #{wasserstein_tke_forward.3} parent=35 // loop_exit
                _
            $region36: #{wasserstein_tke_forward.3} parent=31 // pred_fallthru
              _
            // Predicated region
            $region44: #{wasserstein_tke_forward.3} parent=31 // pred_check
              _
            $region45: #{wasserstein_tke_forward.3} parent=31 // pred_check_branch
              %225 = sbr.rel target = $region47
            $region46: #{wasserstein_tke_forward.3} parent=31 // pred_region
              _
            $region47: #{wasserstein_tke_forward.3} parent=31 // pred_fallthru
              _
          $region32: #{wasserstein_tke_forward.3} parent=27 // pred_fallthru
            _
          %226 = vnop
        $region28: #{wasserstein_tke_forward.3} parent=23 // pred_fallthru
          _
        // Predicated region
        $region48: #{wasserstein_tke_forward.3} parent=23 // pred_check
          %p227 = pneg %p59
        $region49: #{wasserstein_tke_forward.3} parent=23 // pred_check_branch
          %229 = sbr.rel (%p227) target = $region51
        $region50: #{wasserstein_tke_forward.3} parent=23 // pred_region
          %s230 = smul.u32 112, %s13
          %p231 = scmp.lt.s32.totalorder %s230, 223
          %s232 = scalar_select %p231, %s230, 223
          %s233 = smul.addr %s232, 4
          %s234 = smul.addr %s233, 4
          %s235 = scalar_lea.vmem %s1, %s234
          %s236 = smul.u32 112, %s13
        $region51: #{wasserstein_tke_forward.3} parent=23 // pred_fallthru
          _
      $region24: #{wasserstein_tke_forward.3} parent=5 // pred_fallthru
        _
      %p237 = scmp.le.s32.totalorder 1, %s13
      %p238 = scmp.lt.s32.totalorder %s13, 3
      %p239 = pnand %p237, %p238
      %p240 = pneg %p239
      // Predicated region
      $region52: #{wasserstein_tke_forward.3} parent=5 // pred_check
        _
      $region53: #{wasserstein_tke_forward.3} parent=5 // pred_check_branch
        %242 = sbr.rel (%p239) target = $region55
      $region54: #{wasserstein_tke_forward.3} parent=5 // pred_region
        %s243 = ssub.s32 %s13, 1
        %s244 = sand.u32 %s26, 1
        %s245 = sand.u32 %s26, 1
        %s246 = smul.addr %s245, 112
        %s247 = scalar_lea.vmem [#allocation3], %s246
        // Predicated region
        $region56: #{wasserstein_tke_forward.3} parent=54 // pred_check
          %p248 = pneg %p39
        $region57: #{wasserstein_tke_forward.3} parent=54 // pred_check_branch
          %250 = sbr.rel (%p248) target = $region59
        $region58: #{wasserstein_tke_forward.3} parent=54 // pred_region
          _
        $region59: #{wasserstein_tke_forward.3} parent=54 // pred_fallthru
          _
        %s251 = sand.u32 %s26, 1
        %s252 = sand.u32 %s26, 1
        %s253 = smul.addr %s252, 112
        %s254 = scalar_lea.vmem [#allocation3], %s253
        %p255 = pneg %p39
        %p256 = pneg %p36
        %s257 = smul.u32 112, %s18
        %p258 = scmp.lt.s32.totalorder %s257, 223
        %s259 = scalar_select %p258, %s257, 223
        %s260 = smul.addr %s259, 4
        %s261 = smul.addr %s260, 4
        %s262 = scalar_lea.vmem %s1, %s261
        %p263 = pneg %p65
        %p264 = pneg %p62
        %p265 = pneg %p86
        %p266 = pneg %p83
        %p267 = pneg %p107
        %p268 = pneg %p104
        %p269 = pneg %p128
        %p270 = pneg %p125
        %p271 = pneg %p149
        %p272 = pneg %p146
        %s273 = smul.u32 7, %s18
        %s274 = smul.u32 112, %s18
        %p275 = scmp.lt.s32.totalorder %s274, 223
        %s276 = scalar_select %p275, %s274, 223
        %s277 = smul.addr %s276, 4
        %s278 = smul.addr %s277, 4
        %s279 = scalar_lea.vmem %s1, %s278
        %s280 = smul.u32 112, %s18
        %p282 = scmp.eq.s32.totalorder %s18, 0
        // Predicated region
        $region60: #{wasserstein_tke_forward.3} parent=54 // pred_check
          %p283 = pneg %p282
        $region61: #{wasserstein_tke_forward.3} parent=54 // pred_check_branch
          %285 = sbr.rel (%p283) target = $region63
        $region62: #{wasserstein_tke_forward.3} parent=54 // pred_region
          %286 = vst [vmem:[#allocation2] sm:$0xff] 0.0
          %287 = vst [vmem:[#allocation2 + $0x8] sm:$0xff] 0.0
          %288 = vst [vmem:[#allocation2 + $0x10] sm:$0xff] 0.0
          %289 = vst [vmem:[#allocation2 + $0x18] sm:$0xff] 0.0
          %290 = vst [vmem:[#allocation2 + $0x20] sm:$0xf] 0.0
          %291 = vst [vmem:[#allocation2 + $0x28] sm:$0xf] 0.0
          %292 = vst [vmem:[#allocation2 + $0x30] sm:$0xf] 0.0
          %293 = vst [vmem:[#allocation2 + $0x38] sm:$0xf] 0.0
        $region63: #{wasserstein_tke_forward.3} parent=54 // pred_fallthru
          _
        %v294 = vld [vmem:[%s247] sm:$0xff]
        %v295 = vld [vmem:[%s247 + $0x8] sm:$0xff]
        %v296 = vld [vmem:[%s247 + $0x10] sm:$0xff]
        %v297 = vld [vmem:[%s247 + $0x18] sm:$0xff]
        %v298 = vld [vmem:[%s247 + $0x20] sm:$0xff]
        %v299 = vld [vmem:[%s247 + $0x28] sm:$0xff]
        %v300 = vld [vmem:[%s247 + $0x30] sm:$0xff]
        %v301 = vld [vmem:[%s247 + $0x38] sm:$0xf]
        %v302 = vld [vmem:[%s247 + $0x40] sm:$0xf]
        %v303 = vld [vmem:[%s247 + $0x48] sm:$0xf]
        %v304 = vld [vmem:[%s247 + $0x50] sm:$0xf]
        %v305 = vld [vmem:[%s247 + $0x58] sm:$0xf]
        %v306 = vld [vmem:[%s247 + $0x60] sm:$0xf]
        %v307 = vld [vmem:[%s247 + $0x68] sm:$0xf]
        %v308 = vlog2.pop %v294
        %v309 = vmul.f32 %v308, 0.6931472
        %v310 = vlog2.pop %v295
        %v311 = vmul.f32 %v310, 0.6931472
        %v312 = vlog2.pop %v296
        %v313 = vmul.f32 %v312, 0.6931472
        %v314 = vlog2.pop %v297
        %v315 = vmul.f32 %v314, 0.6931472
        %v316 = vlog2.pop %v298
        %v317 = vmul.f32 %v316, 0.6931472
        %v318 = vlog2.pop %v299
        %v319 = vmul.f32 %v318, 0.6931472
        %v320 = vlog2.pop %v300
        %v321 = vmul.f32 %v320, 0.6931472
        %v322 = vlog2.pop %v301
        %v323 = vmul.f32 %v322, 0.6931472
        %v324 = vlog2.pop %v302
        %v325 = vmul.f32 %v324, 0.6931472
        %v326 = vlog2.pop %v303
        %v327 = vmul.f32 %v326, 0.6931472
        %v328 = vlog2.pop %v304
        %v329 = vmul.f32 %v328, 0.6931472
        %v330 = vlog2.pop %v305
        %v331 = vmul.f32 %v330, 0.6931472
        %v332 = vlog2.pop %v306
        %v333 = vmul.f32 %v332, 0.6931472
        %v334 = vlog2.pop %v307
        %v335 = vmul.f32 %v334, 0.6931472
        %v336 = vmax.f32 %v309, -1e+30
        %v337 = vmax.f32 %v311, -1e+30
        %v338 = vmax.f32 %v313, -1e+30
        %v339 = vmax.f32 %v315, -1e+30
        %v340 = vmax.f32 %v317, -1e+30
        %v341 = vmax.f32 %v319, -1e+30
        %v342 = vmax.f32 %v321, -1e+30
        %v343 = vmax.f32 %v323, -1e+30
        %v344 = vmax.f32 %v325, -1e+30
        %v345 = vmax.f32 %v327, -1e+30
        %v346 = vmax.f32 %v329, -1e+30
        %v347 = vmax.f32 %v331, -1e+30
        %v348 = vmax.f32 %v333, -1e+30
        %v349 = vmax.f32 %v335, -1e+30
        %v350 = vld [vmem:[#allocation2] sm:$0xff]
        %v351 = vld [vmem:[#allocation2 + $0x8] sm:$0xff]
        %v352 = vld [vmem:[#allocation2 + $0x10] sm:$0xff]
        %v353 = vld [vmem:[#allocation2 + $0x18] sm:$0xff]
        %v354 = vld [vmem:[#allocation2 + $0x20] sm:$0xf]
        %v355 = vld [vmem:[#allocation2 + $0x28] sm:$0xf]
        %v356 = vld [vmem:[#allocation2 + $0x30] sm:$0xf]
        %v357 = vld [vmem:[#allocation2 + $0x38] sm:$0xf]
        %v358 = vld [vmem:[%s279] sm:$0xff]
        %v359 = vld [vmem:[%s279 + $0x8] sm:$0xff]
        %v360 = vld [vmem:[%s279 + $0x10] sm:$0xff]
        %v361 = vld [vmem:[%s279 + $0x18] sm:$0xff]
        %v362 = vld [vmem:[%s279 + $0x20] sm:$0xff]
        %v363 = vld [vmem:[%s279 + $0x28] sm:$0xff]
        %v364 = vld [vmem:[%s279 + $0x30] sm:$0xff]
        %v365 = vld [vmem:[%s279 + $0x38] sm:$0xff]
        %v366 = vld [vmem:[%s279 + $0x40] sm:$0xff]
        %v367 = vld [vmem:[%s279 + $0x48] sm:$0xff]
        %v368 = vld [vmem:[%s279 + $0x50] sm:$0xff]
        %v369 = vld [vmem:[%s279 + $0x58] sm:$0xff]
        %v370 = vld [vmem:[%s279 + $0x60] sm:$0xff]
        %v371 = vld [vmem:[%s279 + $0x68] sm:$0xff]
        %v372 = vld [vmem:[%s279 + $0x70] sm:$0xff]
        %v373 = vld [vmem:[%s279 + $0x78] sm:$0xff]
        %v374 = vld [vmem:[%s279 + $0x80] sm:$0xff]
        %v375 = vld [vmem:[%s279 + $0x88] sm:$0xff]
        %v376 = vld [vmem:[%s279 + $0x90] sm:$0xff]
        %v377 = vld [vmem:[%s279 + $0x98] sm:$0xff]
        %v378 = vld [vmem:[%s279 + $0xa0] sm:$0xff]
        %v379 = vld [vmem:[%s279 + $0xa8] sm:$0xff]
        %v380 = vld [vmem:[%s279 + $0xb0] sm:$0xff]
        %v381 = vld [vmem:[%s279 + $0xb8] sm:$0xff]
        %v382 = vld [vmem:[%s279 + $0xc0] sm:$0xff]
        %v383 = vld [vmem:[%s279 + $0xc8] sm:$0xff]
        %v384 = vld [vmem:[%s279 + $0xd0] sm:$0xff]
        %v385 = vld [vmem:[%s279 + $0xd8] sm:$0xff]
        %v386 = vld [vmem:[%s279 + $0xe0] sm:$0xff]
        %v387 = vld [vmem:[%s279 + $0xe8] sm:$0xff]
        %v388 = vld [vmem:[%s279 + $0xf0] sm:$0xff]
        %v389 = vld [vmem:[%s279 + $0xf8] sm:$0xff]
        %v390 = vld [vmem:[%s279 + $0x100] sm:$0xff]
        %v391 = vld [vmem:[%s279 + $0x108] sm:$0xff]
        %v392 = vld [vmem:[%s279 + $0x110] sm:$0xff]
        %v393 = vld [vmem:[%s279 + $0x118] sm:$0xff]
        %v394 = vld [vmem:[%s279 + $0x120] sm:$0xff]
        %v395 = vld [vmem:[%s279 + $0x128] sm:$0xff]
        %v396 = vld [vmem:[%s279 + $0x130] sm:$0xff]
        %v397 = vld [vmem:[%s279 + $0x138] sm:$0xff]
        %v398 = vld [vmem:[%s279 + $0x140] sm:$0xff]
        %v399 = vld [vmem:[%s279 + $0x148] sm:$0xff]
        %v400 = vld [vmem:[%s279 + $0x150] sm:$0xff]
        %v401 = vld [vmem:[%s279 + $0x158] sm:$0xff]
        %v402 = vld [vmem:[%s279 + $0x160] sm:$0xff]
        %v403 = vld [vmem:[%s279 + $0x168] sm:$0xff]
        %v404 = vld [vmem:[%s279 + $0x170] sm:$0xff]
        %v405 = vld [vmem:[%s279 + $0x178] sm:$0xff]
        %v406 = vld [vmem:[%s279 + $0x180] sm:$0xff]
        %v407 = vld [vmem:[%s279 + $0x188] sm:$0xff]
        %v408 = vld [vmem:[%s279 + $0x190] sm:$0xff]
        %v409 = vld [vmem:[%s279 + $0x198] sm:$0xff]
        %v410 = vld [vmem:[%s279 + $0x1a0] sm:$0xff]
        %v411 = vld [vmem:[%s279 + $0x1a8] sm:$0xff]
        %v412 = vld [vmem:[%s279 + $0x1b0] sm:$0xff]
        %v413 = vld [vmem:[%s279 + $0x1b8] sm:$0xff]
        %v414 = vld [vmem:[%s279 + $0x1c0] sm:$0xff]
        %v415 = vld [vmem:[%s279 + $0x1c8] sm:$0xff]
        %v416 = vld [vmem:[%s279 + $0x1d0] sm:$0xff]
        %v417 = vld [vmem:[%s279 + $0x1d8] sm:$0xff]
        %v418 = vld [vmem:[%s279 + $0x1e0] sm:$0xff]
        %v419 = vld [vmem:[%s279 + $0x1e8] sm:$0xff]
        %v420 = vld [vmem:[%s279 + $0x1f0] sm:$0xff]
        %v421 = vld [vmem:[%s279 + $0x1f8] sm:$0xff]
        %v422 = vld [vmem:[%s279 + $0x200] sm:$0xff]
        %v423 = vld [vmem:[%s279 + $0x208] sm:$0xff]
        %v424 = vld [vmem:[%s279 + $0x210] sm:$0xff]
        %v425 = vld [vmem:[%s279 + $0x218] sm:$0xff]
        %v426 = vld [vmem:[%s279 + $0x220] sm:$0xff]
        %v427 = vld [vmem:[%s279 + $0x228] sm:$0xff]
        %v428 = vld [vmem:[%s279 + $0x230] sm:$0xff]
        %v429 = vld [vmem:[%s279 + $0x238] sm:$0xff]
        %v430 = vld [vmem:[%s279 + $0x240] sm:$0xff]
        %v431 = vld [vmem:[%s279 + $0x248] sm:$0xff]
        %v432 = vld [vmem:[%s279 + $0x250] sm:$0xff]
        %v433 = vld [vmem:[%s279 + $0x258] sm:$0xff]
        %v434 = vld [vmem:[%s279 + $0x260] sm:$0xff]
        %v435 = vld [vmem:[%s279 + $0x268] sm:$0xff]
        %v436 = vld [vmem:[%s279 + $0x270] sm:$0xff]
        %v437 = vld [vmem:[%s279 + $0x278] sm:$0xff]
        %v438 = vld [vmem:[%s279 + $0x280] sm:$0xff]
        %v439 = vld [vmem:[%s279 + $0x288] sm:$0xff]
        %v440 = vld [vmem:[%s279 + $0x290] sm:$0xff]
        %v441 = vld [vmem:[%s279 + $0x298] sm:$0xff]
        %v442 = vld [vmem:[%s279 + $0x2a0] sm:$0xff]
        %v443 = vld [vmem:[%s279 + $0x2a8] sm:$0xff]
        %v444 = vld [vmem:[%s279 + $0x2b0] sm:$0xff]
        %v445 = vld [vmem:[%s279 + $0x2b8] sm:$0xff]
        %v446 = vld [vmem:[%s279 + $0x2c0] sm:$0xff]
        %v447 = vld [vmem:[%s279 + $0x2c8] sm:$0xff]
        %v448 = vld [vmem:[%s279 + $0x2d0] sm:$0xff]
        %v449 = vld [vmem:[%s279 + $0x2d8] sm:$0xff]
        %v450 = vld [vmem:[%s279 + $0x2e0] sm:$0xff]
        %v451 = vld [vmem:[%s279 + $0x2e8] sm:$0xff]
        %v452 = vld [vmem:[%s279 + $0x2f0] sm:$0xff]
        %v453 = vld [vmem:[%s279 + $0x2f8] sm:$0xff]
        %v454 = vld [vmem:[%s279 + $0x300] sm:$0xff]
        %v455 = vld [vmem:[%s279 + $0x308] sm:$0xff]
        %v456 = vld [vmem:[%s279 + $0x310] sm:$0xff]
        %v457 = vld [vmem:[%s279 + $0x318] sm:$0xff]
        %v458 = vld [vmem:[%s279 + $0x320] sm:$0xff]
        %v459 = vld [vmem:[%s279 + $0x328] sm:$0xff]
        %v460 = vld [vmem:[%s279 + $0x330] sm:$0xff]
        %v461 = vld [vmem:[%s279 + $0x338] sm:$0xff]
        %v462 = vld [vmem:[%s279 + $0x340] sm:$0xff]
        %v463 = vld [vmem:[%s279 + $0x348] sm:$0xff]
        %v464 = vld [vmem:[%s279 + $0x350] sm:$0xff]
        %v465 = vld [vmem:[%s279 + $0x358] sm:$0xff]
        %v466 = vld [vmem:[%s279 + $0x360] sm:$0xff]
        %v467 = vld [vmem:[%s279 + $0x368] sm:$0xff]
        %v468 = vld [vmem:[%s279 + $0x370] sm:$0xff]
        %v469 = vld [vmem:[%s279 + $0x378] sm:$0xff]
        %v470 = vld [vmem:[%s279 + $0x380] sm:$0xff]
        %v471 = vld [vmem:[%s279 + $0x388] sm:$0xff]
        %v472 = vld [vmem:[%s279 + $0x390] sm:$0xff]
        %v473 = vld [vmem:[%s279 + $0x398] sm:$0xff]
        %v474 = vld [vmem:[%s279 + $0x3a0] sm:$0xff]
        %v475 = vld [vmem:[%s279 + $0x3a8] sm:$0xff]
        %v476 = vld [vmem:[%s279 + $0x3b0] sm:$0xff]
        %v477 = vld [vmem:[%s279 + $0x3b8] sm:$0xff]
        %v478 = vld [vmem:[%s279 + $0x3c0] sm:$0xff]
        %v479 = vld [vmem:[%s279 + $0x3c8] sm:$0xff]
        %v480 = vld [vmem:[%s279 + $0x3d0] sm:$0xff]
        %v481 = vld [vmem:[%s279 + $0x3d8] sm:$0xff]
        %v482 = vld [vmem:[%s279 + $0x3e0] sm:$0xff]
        %v483 = vld [vmem:[%s279 + $0x3e8] sm:$0xff]
        %v484 = vld [vmem:[%s279 + $0x3f0] sm:$0xff]
        %v485 = vld [vmem:[%s279 + $0x3f8] sm:$0xff]
        %v486 = vld [vmem:[%s279 + $0x400] sm:$0xff]
        %v487 = vld [vmem:[%s279 + $0x408] sm:$0xff]
        %v488 = vld [vmem:[%s279 + $0x410] sm:$0xff]
        %v489 = vld [vmem:[%s279 + $0x418] sm:$0xff]
        %v490 = vld [vmem:[%s279 + $0x420] sm:$0xff]
        %v491 = vld [vmem:[%s279 + $0x428] sm:$0xff]
        %v492 = vld [vmem:[%s279 + $0x430] sm:$0xff]
        %v493 = vld [vmem:[%s279 + $0x438] sm:$0xff]
        %v494 = vld [vmem:[%s279 + $0x440] sm:$0xff]
        %v495 = vld [vmem:[%s279 + $0x448] sm:$0xff]
        %v496 = vld [vmem:[%s279 + $0x450] sm:$0xff]
        %v497 = vld [vmem:[%s279 + $0x458] sm:$0xff]
        %v498 = vld [vmem:[%s279 + $0x460] sm:$0xff]
        %v499 = vld [vmem:[%s279 + $0x468] sm:$0xff]
        %v500 = vld [vmem:[%s279 + $0x470] sm:$0xff]
        %v501 = vld [vmem:[%s279 + $0x478] sm:$0xff]
        %v502 = vld [vmem:[%s279 + $0x480] sm:$0xff]
        %v503 = vld [vmem:[%s279 + $0x488] sm:$0xff]
        %v504 = vld [vmem:[%s279 + $0x490] sm:$0xff]
        %v505 = vld [vmem:[%s279 + $0x498] sm:$0xff]
        %v506 = vld [vmem:[%s279 + $0x4a0] sm:$0xff]
        %v507 = vld [vmem:[%s279 + $0x4a8] sm:$0xff]
        %v508 = vld [vmem:[%s279 + $0x4b0] sm:$0xff]
        %v509 = vld [vmem:[%s279 + $0x4b8] sm:$0xff]
        %v510 = vld [vmem:[%s279 + $0x4c0] sm:$0xff]
        %v511 = vld [vmem:[%s279 + $0x4c8] sm:$0xff]
        %v512 = vld [vmem:[%s279 + $0x4d0] sm:$0xff]
        %v513 = vld [vmem:[%s279 + $0x4d8] sm:$0xff]
        %v514 = vld [vmem:[%s279 + $0x4e0] sm:$0xff]
        %v515 = vld [vmem:[%s279 + $0x4e8] sm:$0xff]
        %v516 = vld [vmem:[%s279 + $0x4f0] sm:$0xff]
        %v517 = vld [vmem:[%s279 + $0x4f8] sm:$0xff]
        %v518 = vld [vmem:[%s279 + $0x500] sm:$0xff]
        %v519 = vld [vmem:[%s279 + $0x508] sm:$0xff]
        %v520 = vld [vmem:[%s279 + $0x510] sm:$0xff]
        %v521 = vld [vmem:[%s279 + $0x518] sm:$0xff]
        %v522 = vld [vmem:[%s279 + $0x520] sm:$0xff]
        %v523 = vld [vmem:[%s279 + $0x528] sm:$0xff]
        %v524 = vld [vmem:[%s279 + $0x530] sm:$0xff]
        %v525 = vld [vmem:[%s279 + $0x538] sm:$0xff]
        %v526 = vld [vmem:[%s279 + $0x540] sm:$0xff]
        %v527 = vld [vmem:[%s279 + $0x548] sm:$0xff]
        %v528 = vld [vmem:[%s279 + $0x550] sm:$0xff]
        %v529 = vld [vmem:[%s279 + $0x558] sm:$0xff]
        %v530 = vld [vmem:[%s279 + $0x560] sm:$0xff]
        %v531 = vld [vmem:[%s279 + $0x568] sm:$0xff]
        %v532 = vld [vmem:[%s279 + $0x570] sm:$0xff]
        %v533 = vld [vmem:[%s279 + $0x578] sm:$0xff]
        %v534 = vld [vmem:[%s279 + $0x580] sm:$0xff]
        %v535 = vld [vmem:[%s279 + $0x588] sm:$0xff]
        %v536 = vld [vmem:[%s279 + $0x590] sm:$0xff]
        %v537 = vld [vmem:[%s279 + $0x598] sm:$0xff]
        %v538 = vld [vmem:[%s279 + $0x5a0] sm:$0xff]
        %v539 = vld [vmem:[%s279 + $0x5a8] sm:$0xff]
        %v540 = vld [vmem:[%s279 + $0x5b0] sm:$0xff]
        %v541 = vld [vmem:[%s279 + $0x5b8] sm:$0xff]
        %v542 = vld [vmem:[%s279 + $0x5c0] sm:$0xff]
        %v543 = vld [vmem:[%s279 + $0x5c8] sm:$0xff]
        %v544 = vld [vmem:[%s279 + $0x5d0] sm:$0xff]
        %v545 = vld [vmem:[%s279 + $0x5d8] sm:$0xff]
        %v546 = vld [vmem:[%s279 + $0x5e0] sm:$0xff]
        %v547 = vld [vmem:[%s279 + $0x5e8] sm:$0xff]
        %v548 = vld [vmem:[%s279 + $0x5f0] sm:$0xff]
        %v549 = vld [vmem:[%s279 + $0x5f8] sm:$0xff]
        %v550 = vld [vmem:[%s279 + $0x600] sm:$0xff]
        %v551 = vld [vmem:[%s279 + $0x608] sm:$0xff]
        %v552 = vld [vmem:[%s279 + $0x610] sm:$0xff]
        %v553 = vld [vmem:[%s279 + $0x618] sm:$0xff]
        %v554 = vld [vmem:[%s279 + $0x620] sm:$0xff]
        %v555 = vld [vmem:[%s279 + $0x628] sm:$0xff]
        %v556 = vld [vmem:[%s279 + $0x630] sm:$0xff]
        %v557 = vld [vmem:[%s279 + $0x638] sm:$0xff]
        %v558 = vld [vmem:[%s279 + $0x640] sm:$0xff]
        %v559 = vld [vmem:[%s279 + $0x648] sm:$0xff]
        %v560 = vld [vmem:[%s279 + $0x650] sm:$0xff]
        %v561 = vld [vmem:[%s279 + $0x658] sm:$0xff]
        %v562 = vld [vmem:[%s279 + $0x660] sm:$0xff]
        %v563 = vld [vmem:[%s279 + $0x668] sm:$0xff]
        %v564 = vld [vmem:[%s279 + $0x670] sm:$0xff]
        %v565 = vld [vmem:[%s279 + $0x678] sm:$0xff]
        %v566 = vld [vmem:[%s279 + $0x680] sm:$0xff]
        %v567 = vld [vmem:[%s279 + $0x688] sm:$0xff]
        %v568 = vld [vmem:[%s279 + $0x690] sm:$0xff]
        %v569 = vld [vmem:[%s279 + $0x698] sm:$0xff]
        %v570 = vld [vmem:[%s279 + $0x6a0] sm:$0xff]
        %v571 = vld [vmem:[%s279 + $0x6a8] sm:$0xff]
        %v572 = vld [vmem:[%s279 + $0x6b0] sm:$0xff]
        %v573 = vld [vmem:[%s279 + $0x6b8] sm:$0xff]
        %v574 = vld [vmem:[%s279 + $0x6c0] sm:$0xff]
        %v575 = vld [vmem:[%s279 + $0x6c8] sm:$0xff]
        %v576 = vld [vmem:[%s279 + $0x6d0] sm:$0xff]
        %v577 = vld [vmem:[%s279 + $0x6d8] sm:$0xff]
        %v578 = vld [vmem:[%s279 + $0x6e0] sm:$0xff]
        %v579 = vld [vmem:[%s279 + $0x6e8] sm:$0xff]
        %v580 = vld [vmem:[%s279 + $0x6f0] sm:$0xff]
        %v581 = vld [vmem:[%s279 + $0x6f8] sm:$0xff]
        %v806 = vunpack.c.l.b16 %v358
        %v807 = vunpack.c.h.b16 %v358
        %v808 = vunpack.c.l.b16 %v359
        %v809 = vunpack.c.h.b16 %v359
        %v810 = vunpack.c.l.b16 %v360
        %v811 = vunpack.c.h.b16 %v360
        %v812 = vunpack.c.l.b16 %v361
        %v813 = vunpack.c.h.b16 %v361
        %v814 = vunpack.c.l.b16 %v362
        %v815 = vunpack.c.h.b16 %v362
        %v816 = vunpack.c.l.b16 %v363
        %v817 = vunpack.c.h.b16 %v363
        %v818 = vunpack.c.l.b16 %v364
        %v819 = vunpack.c.h.b16 %v364
        %v820 = vunpack.c.l.b16 %v365
        %v821 = vunpack.c.h.b16 %v365
        %v822 = vunpack.c.l.b16 %v366
        %v823 = vunpack.c.h.b16 %v366
        %v824 = vunpack.c.l.b16 %v367
        %v825 = vunpack.c.h.b16 %v367
        %v826 = vunpack.c.l.b16 %v368
        %v827 = vunpack.c.h.b16 %v368
        %v828 = vunpack.c.l.b16 %v369
        %v829 = vunpack.c.h.b16 %v369
        %v830 = vunpack.c.l.b16 %v370
        %v831 = vunpack.c.h.b16 %v370
        %v832 = vunpack.c.l.b16 %v371
        %v833 = vunpack.c.h.b16 %v371
        %v834 = vunpack.c.l.b16 %v372
        %v835 = vunpack.c.h.b16 %v372
        %v836 = vunpack.c.l.b16 %v373
        %v837 = vunpack.c.h.b16 %v373
        %v838 = vunpack.c.l.b16 %v374
        %v839 = vunpack.c.h.b16 %v374
        %v840 = vunpack.c.l.b16 %v375
        %v841 = vunpack.c.h.b16 %v375
        %v842 = vunpack.c.l.b16 %v376
        %v843 = vunpack.c.h.b16 %v376
        %v844 = vunpack.c.l.b16 %v377
        %v845 = vunpack.c.h.b16 %v377
        %v846 = vunpack.c.l.b16 %v378
        %v847 = vunpack.c.h.b16 %v378
        %v848 = vunpack.c.l.b16 %v379
        %v849 = vunpack.c.h.b16 %v379
        %v850 = vunpack.c.l.b16 %v380
        %v851 = vunpack.c.h.b16 %v380
        %v852 = vunpack.c.l.b16 %v381
        %v853 = vunpack.c.h.b16 %v381
        %v854 = vunpack.c.l.b16 %v382
        %v855 = vunpack.c.h.b16 %v382
        %v856 = vunpack.c.l.b16 %v383
        %v857 = vunpack.c.h.b16 %v383
        %v858 = vunpack.c.l.b16 %v384
        %v859 = vunpack.c.h.b16 %v384
        %v860 = vunpack.c.l.b16 %v385
        %v861 = vunpack.c.h.b16 %v385
        %v862 = vunpack.c.l.b16 %v386
        %v863 = vunpack.c.h.b16 %v386
        %v864 = vunpack.c.l.b16 %v387
        %v865 = vunpack.c.h.b16 %v387
        %v866 = vunpack.c.l.b16 %v388
        %v867 = vunpack.c.h.b16 %v388
        %v868 = vunpack.c.l.b16 %v389
        %v869 = vunpack.c.h.b16 %v389
        %v870 = vunpack.c.l.b16 %v390
        %v871 = vunpack.c.h.b16 %v390
        %v872 = vunpack.c.l.b16 %v391
        %v873 = vunpack.c.h.b16 %v391
        %v874 = vunpack.c.l.b16 %v392
        %v875 = vunpack.c.h.b16 %v392
        %v876 = vunpack.c.l.b16 %v393
        %v877 = vunpack.c.h.b16 %v393
        %v878 = vunpack.c.l.b16 %v394
        %v879 = vunpack.c.h.b16 %v394
        %v880 = vunpack.c.l.b16 %v395
        %v881 = vunpack.c.h.b16 %v395
        %v882 = vunpack.c.l.b16 %v396
        %v883 = vunpack.c.h.b16 %v396
        %v884 = vunpack.c.l.b16 %v397
        %v885 = vunpack.c.h.b16 %v397
        %v886 = vunpack.c.l.b16 %v398
        %v887 = vunpack.c.h.b16 %v398
        %v888 = vunpack.c.l.b16 %v399
        %v889 = vunpack.c.h.b16 %v399
        %v890 = vunpack.c.l.b16 %v400
        %v891 = vunpack.c.h.b16 %v400
        %v892 = vunpack.c.l.b16 %v401
        %v893 = vunpack.c.h.b16 %v401
        %v894 = vunpack.c.l.b16 %v402
        %v895 = vunpack.c.h.b16 %v402
        %v896 = vunpack.c.l.b16 %v403
        %v897 = vunpack.c.h.b16 %v403
        %v898 = vunpack.c.l.b16 %v404
        %v899 = vunpack.c.h.b16 %v404
        %v900 = vunpack.c.l.b16 %v405
        %v901 = vunpack.c.h.b16 %v405
        %v902 = vunpack.c.l.b16 %v406
        %v903 = vunpack.c.h.b16 %v406
        %v904 = vunpack.c.l.b16 %v407
        %v905 = vunpack.c.h.b16 %v407
        %v906 = vunpack.c.l.b16 %v408
        %v907 = vunpack.c.h.b16 %v408
        %v908 = vunpack.c.l.b16 %v409
        %v909 = vunpack.c.h.b16 %v409
        %v910 = vunpack.c.l.b16 %v410
        %v911 = vunpack.c.h.b16 %v410
        %v912 = vunpack.c.l.b16 %v411
        %v913 = vunpack.c.h.b16 %v411
        %v914 = vunpack.c.l.b16 %v412
        %v915 = vunpack.c.h.b16 %v412
        %v916 = vunpack.c.l.b16 %v413
        %v917 = vunpack.c.h.b16 %v413
        %v918 = vunpack.c.l.b16 %v414
        %v919 = vunpack.c.h.b16 %v414
        %v920 = vunpack.c.l.b16 %v415
        %v921 = vunpack.c.h.b16 %v415
        %v922 = vunpack.c.l.b16 %v416
        %v923 = vunpack.c.h.b16 %v416
        %v924 = vunpack.c.l.b16 %v417
        %v925 = vunpack.c.h.b16 %v417
        %v926 = vunpack.c.l.b16 %v418
        %v927 = vunpack.c.h.b16 %v418
        %v928 = vunpack.c.l.b16 %v419
        %v929 = vunpack.c.h.b16 %v419
        %v930 = vunpack.c.l.b16 %v420
        %v931 = vunpack.c.h.b16 %v420
        %v932 = vunpack.c.l.b16 %v421
        %v933 = vunpack.c.h.b16 %v421
        %v934 = vunpack.c.l.b16 %v422
        %v935 = vunpack.c.h.b16 %v422
        %v936 = vunpack.c.l.b16 %v423
        %v937 = vunpack.c.h.b16 %v423
        %v938 = vunpack.c.l.b16 %v424
        %v939 = vunpack.c.h.b16 %v424
        %v940 = vunpack.c.l.b16 %v425
        %v941 = vunpack.c.h.b16 %v425
        %v942 = vunpack.c.l.b16 %v426
        %v943 = vunpack.c.h.b16 %v426
        %v944 = vunpack.c.l.b16 %v427
        %v945 = vunpack.c.h.b16 %v427
        %v946 = vunpack.c.l.b16 %v428
        %v947 = vunpack.c.h.b16 %v428
        %v948 = vunpack.c.l.b16 %v429
        %v949 = vunpack.c.h.b16 %v429
        %v950 = vunpack.c.l.b16 %v430
        %v951 = vunpack.c.h.b16 %v430
        %v952 = vunpack.c.l.b16 %v431
        %v953 = vunpack.c.h.b16 %v431
        %v954 = vunpack.c.l.b16 %v432
        %v955 = vunpack.c.h.b16 %v432
        %v956 = vunpack.c.l.b16 %v433
        %v957 = vunpack.c.h.b16 %v433
        %v958 = vunpack.c.l.b16 %v434
        %v959 = vunpack.c.h.b16 %v434
        %v960 = vunpack.c.l.b16 %v435
        %v961 = vunpack.c.h.b16 %v435
        %v962 = vunpack.c.l.b16 %v436
        %v963 = vunpack.c.h.b16 %v436
        %v964 = vunpack.c.l.b16 %v437
        %v965 = vunpack.c.h.b16 %v437
        %v966 = vunpack.c.l.b16 %v438
        %v967 = vunpack.c.h.b16 %v438
        %v968 = vunpack.c.l.b16 %v439
        %v969 = vunpack.c.h.b16 %v439
        %v970 = vunpack.c.l.b16 %v440
        %v971 = vunpack.c.h.b16 %v440
        %v972 = vunpack.c.l.b16 %v441
        %v973 = vunpack.c.h.b16 %v441
        %v974 = vunpack.c.l.b16 %v442
        %v975 = vunpack.c.h.b16 %v442
        %v976 = vunpack.c.l.b16 %v443
        %v977 = vunpack.c.h.b16 %v443
        %v978 = vunpack.c.l.b16 %v444
        %v979 = vunpack.c.h.b16 %v444
        %v980 = vunpack.c.l.b16 %v445
        %v981 = vunpack.c.h.b16 %v445
        %v982 = vunpack.c.l.b16 %v446
        %v983 = vunpack.c.h.b16 %v446
        %v984 = vunpack.c.l.b16 %v447
        %v985 = vunpack.c.h.b16 %v447
        %v986 = vunpack.c.l.b16 %v448
        %v987 = vunpack.c.h.b16 %v448
        %v988 = vunpack.c.l.b16 %v449
        %v989 = vunpack.c.h.b16 %v449
        %v990 = vunpack.c.l.b16 %v450
        %v991 = vunpack.c.h.b16 %v450
        %v992 = vunpack.c.l.b16 %v451
        %v993 = vunpack.c.h.b16 %v451
        %v994 = vunpack.c.l.b16 %v452
        %v995 = vunpack.c.h.b16 %v452
        %v996 = vunpack.c.l.b16 %v453
        %v997 = vunpack.c.h.b16 %v453
        %v998 = vunpack.c.l.b16 %v454
        %v999 = vunpack.c.h.b16 %v454
        %v1000 = vunpack.c.l.b16 %v455
        %v1001 = vunpack.c.h.b16 %v455
        %v1002 = vunpack.c.l.b16 %v456
        %v1003 = vunpack.c.h.b16 %v456
        %v1004 = vunpack.c.l.b16 %v457
        %v1005 = vunpack.c.h.b16 %v457
        %v1006 = vunpack.c.l.b16 %v458
        %v1007 = vunpack.c.h.b16 %v458
        %v1008 = vunpack.c.l.b16 %v459
        %v1009 = vunpack.c.h.b16 %v459
        %v1010 = vunpack.c.l.b16 %v460
        %v1011 = vunpack.c.h.b16 %v460
        %v1012 = vunpack.c.l.b16 %v461
        %v1013 = vunpack.c.h.b16 %v461
        %v1014 = vunpack.c.l.b16 %v462
        %v1015 = vunpack.c.h.b16 %v462
        %v1016 = vunpack.c.l.b16 %v463
        %v1017 = vunpack.c.h.b16 %v463
        %v1018 = vunpack.c.l.b16 %v464
        %v1019 = vunpack.c.h.b16 %v464
        %v1020 = vunpack.c.l.b16 %v465
        %v1021 = vunpack.c.h.b16 %v465
        %v1022 = vunpack.c.l.b16 %v466
        %v1023 = vunpack.c.h.b16 %v466
        %v1024 = vunpack.c.l.b16 %v467
        %v1025 = vunpack.c.h.b16 %v467
        %v1026 = vunpack.c.l.b16 %v468
        %v1027 = vunpack.c.h.b16 %v468
        %v1028 = vunpack.c.l.b16 %v469
        %v1029 = vunpack.c.h.b16 %v469
        %v1030 = vunpack.c.l.b16 %v470
        %v1031 = vunpack.c.h.b16 %v470
        %v1032 = vunpack.c.l.b16 %v471
        %v1033 = vunpack.c.h.b16 %v471
        %v1034 = vunpack.c.l.b16 %v472
        %v1035 = vunpack.c.h.b16 %v472
        %v1036 = vunpack.c.l.b16 %v473
        %v1037 = vunpack.c.h.b16 %v473
        %v1038 = vunpack.c.l.b16 %v474
        %v1039 = vunpack.c.h.b16 %v474
        %v1040 = vunpack.c.l.b16 %v475
        %v1041 = vunpack.c.h.b16 %v475
        %v1042 = vunpack.c.l.b16 %v476
        %v1043 = vunpack.c.h.b16 %v476
        %v1044 = vunpack.c.l.b16 %v477
        %v1045 = vunpack.c.h.b16 %v477
        %v1046 = vunpack.c.l.b16 %v478
        %v1047 = vunpack.c.h.b16 %v478
        %v1048 = vunpack.c.l.b16 %v479
        %v1049 = vunpack.c.h.b16 %v479
        %v1050 = vunpack.c.l.b16 %v480
        %v1051 = vunpack.c.h.b16 %v480
        %v1052 = vunpack.c.l.b16 %v481
        %v1053 = vunpack.c.h.b16 %v481
        %v1054 = vunpack.c.l.b16 %v482
        %v1055 = vunpack.c.h.b16 %v482
        %v1056 = vunpack.c.l.b16 %v483
        %v1057 = vunpack.c.h.b16 %v483
        %v1058 = vunpack.c.l.b16 %v484
        %v1059 = vunpack.c.h.b16 %v484
        %v1060 = vunpack.c.l.b16 %v485
        %v1061 = vunpack.c.h.b16 %v485
        %v1062 = vunpack.c.l.b16 %v486
        %v1063 = vunpack.c.h.b16 %v486
        %v1064 = vunpack.c.l.b16 %v487
        %v1065 = vunpack.c.h.b16 %v487
        %v1066 = vunpack.c.l.b16 %v488
        %v1067 = vunpack.c.h.b16 %v488
        %v1068 = vunpack.c.l.b16 %v489
        %v1069 = vunpack.c.h.b16 %v489
        %v1070 = vunpack.c.l.b16 %v490
        %v1071 = vunpack.c.h.b16 %v490
        %v1072 = vunpack.c.l.b16 %v491
        %v1073 = vunpack.c.h.b16 %v491
        %v1074 = vunpack.c.l.b16 %v492
        %v1075 = vunpack.c.h.b16 %v492
        %v1076 = vunpack.c.l.b16 %v493
        %v1077 = vunpack.c.h.b16 %v493
        %v1078 = vunpack.c.l.b16 %v494
        %v1079 = vunpack.c.h.b16 %v494
        %v1080 = vunpack.c.l.b16 %v495
        %v1081 = vunpack.c.h.b16 %v495
        %v1082 = vunpack.c.l.b16 %v496
        %v1083 = vunpack.c.h.b16 %v496
        %v1084 = vunpack.c.l.b16 %v497
        %v1085 = vunpack.c.h.b16 %v497
        %v1086 = vunpack.c.l.b16 %v498
        %v1087 = vunpack.c.h.b16 %v498
        %v1088 = vunpack.c.l.b16 %v499
        %v1089 = vunpack.c.h.b16 %v499
        %v1090 = vunpack.c.l.b16 %v500
        %v1091 = vunpack.c.h.b16 %v500
        %v1092 = vunpack.c.l.b16 %v501
        %v1093 = vunpack.c.h.b16 %v501
        %v1094 = vunpack.c.l.b16 %v502
        %v1095 = vunpack.c.h.b16 %v502
        %v1096 = vunpack.c.l.b16 %v503
        %v1097 = vunpack.c.h.b16 %v503
        %v1098 = vunpack.c.l.b16 %v504
        %v1099 = vunpack.c.h.b16 %v504
        %v1100 = vunpack.c.l.b16 %v505
        %v1101 = vunpack.c.h.b16 %v505
        %v1102 = vunpack.c.l.b16 %v506
        %v1103 = vunpack.c.h.b16 %v506
        %v1104 = vunpack.c.l.b16 %v507
        %v1105 = vunpack.c.h.b16 %v507
        %v1106 = vunpack.c.l.b16 %v508
        %v1107 = vunpack.c.h.b16 %v508
        %v1108 = vunpack.c.l.b16 %v509
        %v1109 = vunpack.c.h.b16 %v509
        %v1110 = vunpack.c.l.b16 %v510
        %v1111 = vunpack.c.h.b16 %v510
        %v1112 = vunpack.c.l.b16 %v511
        %v1113 = vunpack.c.h.b16 %v511
        %v1114 = vunpack.c.l.b16 %v512
        %v1115 = vunpack.c.h.b16 %v512
        %v1116 = vunpack.c.l.b16 %v513
        %v1117 = vunpack.c.h.b16 %v513
        %v1118 = vunpack.c.l.b16 %v514
        %v1119 = vunpack.c.h.b16 %v514
        %v1120 = vunpack.c.l.b16 %v515
        %v1121 = vunpack.c.h.b16 %v515
        %v1122 = vunpack.c.l.b16 %v516
        %v1123 = vunpack.c.h.b16 %v516
        %v1124 = vunpack.c.l.b16 %v517
        %v1125 = vunpack.c.h.b16 %v517
        %v1126 = vunpack.c.l.b16 %v518
        %v1127 = vunpack.c.h.b16 %v518
        %v1128 = vunpack.c.l.b16 %v519
        %v1129 = vunpack.c.h.b16 %v519
        %v1130 = vunpack.c.l.b16 %v520
        %v1131 = vunpack.c.h.b16 %v520
        %v1132 = vunpack.c.l.b16 %v521
        %v1133 = vunpack.c.h.b16 %v521
        %v1134 = vunpack.c.l.b16 %v522
        %v1135 = vunpack.c.h.b16 %v522
        %v1136 = vunpack.c.l.b16 %v523
        %v1137 = vunpack.c.h.b16 %v523
        %v1138 = vunpack.c.l.b16 %v524
        %v1139 = vunpack.c.h.b16 %v524
        %v1140 = vunpack.c.l.b16 %v525
        %v1141 = vunpack.c.h.b16 %v525
        %v1142 = vunpack.c.l.b16 %v526
        %v1143 = vunpack.c.h.b16 %v526
        %v1144 = vunpack.c.l.b16 %v527
        %v1145 = vunpack.c.h.b16 %v527
        %v1146 = vunpack.c.l.b16 %v528
        %v1147 = vunpack.c.h.b16 %v528
        %v1148 = vunpack.c.l.b16 %v529
        %v1149 = vunpack.c.h.b16 %v529
        %v1150 = vunpack.c.l.b16 %v530
        %v1151 = vunpack.c.h.b16 %v530
        %v1152 = vunpack.c.l.b16 %v531
        %v1153 = vunpack.c.h.b16 %v531
        %v1154 = vunpack.c.l.b16 %v532
        %v1155 = vunpack.c.h.b16 %v532
        %v1156 = vunpack.c.l.b16 %v533
        %v1157 = vunpack.c.h.b16 %v533
        %v1158 = vunpack.c.l.b16 %v534
        %v1159 = vunpack.c.h.b16 %v534
        %v1160 = vunpack.c.l.b16 %v535
        %v1161 = vunpack.c.h.b16 %v535
        %v1162 = vunpack.c.l.b16 %v536
        %v1163 = vunpack.c.h.b16 %v536
        %v1164 = vunpack.c.l.b16 %v537
        %v1165 = vunpack.c.h.b16 %v537
        %v1166 = vunpack.c.l.b16 %v538
        %v1167 = vunpack.c.h.b16 %v538
        %v1168 = vunpack.c.l.b16 %v539
        %v1169 = vunpack.c.h.b16 %v539
        %v1170 = vunpack.c.l.b16 %v540
        %v1171 = vunpack.c.h.b16 %v540
        %v1172 = vunpack.c.l.b16 %v541
        %v1173 = vunpack.c.h.b16 %v541
        %v1174 = vunpack.c.l.b16 %v542
        %v1175 = vunpack.c.h.b16 %v542
        %v1176 = vunpack.c.l.b16 %v543
        %v1177 = vunpack.c.h.b16 %v543
        %v1178 = vunpack.c.l.b16 %v544
        %v1179 = vunpack.c.h.b16 %v544
        %v1180 = vunpack.c.l.b16 %v545
        %v1181 = vunpack.c.h.b16 %v545
        %v1182 = vunpack.c.l.b16 %v546
        %v1183 = vunpack.c.h.b16 %v546
        %v1184 = vunpack.c.l.b16 %v547
        %v1185 = vunpack.c.h.b16 %v547
        %v1186 = vunpack.c.l.b16 %v548
        %v1187 = vunpack.c.h.b16 %v548
        %v1188 = vunpack.c.l.b16 %v549
        %v1189 = vunpack.c.h.b16 %v549
        %v1190 = vunpack.c.l.b16 %v550
        %v1191 = vunpack.c.h.b16 %v550
        %v1192 = vunpack.c.l.b16 %v551
        %v1193 = vunpack.c.h.b16 %v551
        %v1194 = vunpack.c.l.b16 %v552
        %v1195 = vunpack.c.h.b16 %v552
        %v1196 = vunpack.c.l.b16 %v553
        %v1197 = vunpack.c.h.b16 %v553
        %v1198 = vunpack.c.l.b16 %v554
        %v1199 = vunpack.c.h.b16 %v554
        %v1200 = vunpack.c.l.b16 %v555
        %v1201 = vunpack.c.h.b16 %v555
        %v1202 = vunpack.c.l.b16 %v556
        %v1203 = vunpack.c.h.b16 %v556
        %v1204 = vunpack.c.l.b16 %v557
        %v1205 = vunpack.c.h.b16 %v557
        %v1206 = vunpack.c.l.b16 %v558
        %v1207 = vunpack.c.h.b16 %v558
        %v1208 = vunpack.c.l.b16 %v559
        %v1209 = vunpack.c.h.b16 %v559
        %v1210 = vunpack.c.l.b16 %v560
        %v1211 = vunpack.c.h.b16 %v560
        %v1212 = vunpack.c.l.b16 %v561
        %v1213 = vunpack.c.h.b16 %v561
        %v1214 = vunpack.c.l.b16 %v562
        %v1215 = vunpack.c.h.b16 %v562
        %v1216 = vunpack.c.l.b16 %v563
        %v1217 = vunpack.c.h.b16 %v563
        %v1218 = vunpack.c.l.b16 %v564
        %v1219 = vunpack.c.h.b16 %v564
        %v1220 = vunpack.c.l.b16 %v565
        %v1221 = vunpack.c.h.b16 %v565
        %v1222 = vunpack.c.l.b16 %v566
        %v1223 = vunpack.c.h.b16 %v566
        %v1224 = vunpack.c.l.b16 %v567
        %v1225 = vunpack.c.h.b16 %v567
        %v1226 = vunpack.c.l.b16 %v568
        %v1227 = vunpack.c.h.b16 %v568
        %v1228 = vunpack.c.l.b16 %v569
        %v1229 = vunpack.c.h.b16 %v569
        %v1230 = vunpack.c.l.b16 %v570
        %v1231 = vunpack.c.h.b16 %v570
        %v1232 = vunpack.c.l.b16 %v571
        %v1233 = vunpack.c.h.b16 %v571
        %v1234 = vunpack.c.l.b16 %v572
        %v1235 = vunpack.c.h.b16 %v572
        %v1236 = vunpack.c.l.b16 %v573
        %v1237 = vunpack.c.h.b16 %v573
        %v1238 = vunpack.c.l.b16 %v574
        %v1239 = vunpack.c.h.b16 %v574
        %v1240 = vunpack.c.l.b16 %v575
        %v1241 = vunpack.c.h.b16 %v575
        %v1242 = vunpack.c.l.b16 %v576
        %v1243 = vunpack.c.h.b16 %v576
        %v1244 = vunpack.c.l.b16 %v577
        %v1245 = vunpack.c.h.b16 %v577
        %v1246 = vunpack.c.l.b16 %v578
        %v1247 = vunpack.c.h.b16 %v578
        %v1248 = vunpack.c.l.b16 %v579
        %v1249 = vunpack.c.h.b16 %v579
        %v1250 = vunpack.c.l.b16 %v580
        %v1251 = vunpack.c.h.b16 %v580
        %v1252 = vunpack.c.l.b16 %v581
        %v1253 = vunpack.c.h.b16 %v581
        %v1254 = vpack.c.b16 %v810, %v806
        %v1255 = vpack.c.b16 %v811, %v807
        %v1256 = vpack.c.b16 %v812, %v808
        %v1257 = vpack.c.b16 %v813, %v809
        %v1258 = vpack.c.b16 %v818, %v814
        %v1259 = vpack.c.b16 %v819, %v815
        %v1260 = vpack.c.b16 %v820, %v816
        %v1261 = vpack.c.b16 %v821, %v817
        %v1262 = vpack.c.b16 %v826, %v822
        %v1263 = vpack.c.b16 %v827, %v823
        %v1264 = vpack.c.b16 %v828, %v824
        %v1265 = vpack.c.b16 %v829, %v825
        %v1266 = vpack.c.b16 %v834, %v830
        %v1267 = vpack.c.b16 %v835, %v831
        %v1268 = vpack.c.b16 %v836, %v832
        %v1269 = vpack.c.b16 %v837, %v833
        %v1270 = vpack.c.b16 %v842, %v838
        %v1271 = vpack.c.b16 %v843, %v839
        %v1272 = vpack.c.b16 %v844, %v840
        %v1273 = vpack.c.b16 %v845, %v841
        %v1274 = vpack.c.b16 %v850, %v846
        %v1275 = vpack.c.b16 %v851, %v847
        %v1276 = vpack.c.b16 %v852, %v848
        %v1277 = vpack.c.b16 %v853, %v849
        %v1278 = vpack.c.b16 %v858, %v854
        %v1279 = vpack.c.b16 %v859, %v855
        %v1280 = vpack.c.b16 %v860, %v856
        %v1281 = vpack.c.b16 %v861, %v857
        %v1282 = vpack.c.b16 %v866, %v862
        %v1283 = vpack.c.b16 %v867, %v863
        %v1284 = vpack.c.b16 %v868, %v864
        %v1285 = vpack.c.b16 %v869, %v865
        %v1286 = vpack.c.b16 %v874, %v870
        %v1287 = vpack.c.b16 %v875, %v871
        %v1288 = vpack.c.b16 %v876, %v872
        %v1289 = vpack.c.b16 %v877, %v873
        %v1290 = vpack.c.b16 %v882, %v878
        %v1291 = vpack.c.b16 %v883, %v879
        %v1292 = vpack.c.b16 %v884, %v880
        %v1293 = vpack.c.b16 %v885, %v881
        %v1294 = vpack.c.b16 %v890, %v886
        %v1295 = vpack.c.b16 %v891, %v887
        %v1296 = vpack.c.b16 %v892, %v888
        %v1297 = vpack.c.b16 %v893, %v889
        %v1298 = vpack.c.b16 %v898, %v894
        %v1299 = vpack.c.b16 %v899, %v895
        %v1300 = vpack.c.b16 %v900, %v896
        %v1301 = vpack.c.b16 %v901, %v897
        %v1302 = vpack.c.b16 %v906, %v902
        %v1303 = vpack.c.b16 %v907, %v903
        %v1304 = vpack.c.b16 %v908, %v904
        %v1305 = vpack.c.b16 %v909, %v905
        %v1306 = vpack.c.b16 %v914, %v910
        %v1307 = vpack.c.b16 %v915, %v911
        %v1308 = vpack.c.b16 %v916, %v912
        %v1309 = vpack.c.b16 %v917, %v913
        %v1310 = vpack.c.b16 %v922, %v918
        %v1311 = vpack.c.b16 %v923, %v919
        %v1312 = vpack.c.b16 %v924, %v920
        %v1313 = vpack.c.b16 %v925, %v921
        %v1314 = vpack.c.b16 %v930, %v926
        %v1315 = vpack.c.b16 %v931, %v927
        %v1316 = vpack.c.b16 %v932, %v928
        %v1317 = vpack.c.b16 %v933, %v929
        %v1318 = vpack.c.b16 %v938, %v934
        %v1319 = vpack.c.b16 %v939, %v935
        %v1320 = vpack.c.b16 %v940, %v936
        %v1321 = vpack.c.b16 %v941, %v937
        %v1322 = vpack.c.b16 %v946, %v942
        %v1323 = vpack.c.b16 %v947, %v943
        %v1324 = vpack.c.b16 %v948, %v944
        %v1325 = vpack.c.b16 %v949, %v945
        %v1326 = vpack.c.b16 %v954, %v950
        %v1327 = vpack.c.b16 %v955, %v951
        %v1328 = vpack.c.b16 %v956, %v952
        %v1329 = vpack.c.b16 %v957, %v953
        %v1330 = vpack.c.b16 %v962, %v958
        %v1331 = vpack.c.b16 %v963, %v959
        %v1332 = vpack.c.b16 %v964, %v960
        %v1333 = vpack.c.b16 %v965, %v961
        %v1334 = vpack.c.b16 %v970, %v966
        %v1335 = vpack.c.b16 %v971, %v967
        %v1336 = vpack.c.b16 %v972, %v968
        %v1337 = vpack.c.b16 %v973, %v969
        %v1338 = vpack.c.b16 %v978, %v974
        %v1339 = vpack.c.b16 %v979, %v975
        %v1340 = vpack.c.b16 %v980, %v976
        %v1341 = vpack.c.b16 %v981, %v977
        %v1342 = vpack.c.b16 %v986, %v982
        %v1343 = vpack.c.b16 %v987, %v983
        %v1344 = vpack.c.b16 %v988, %v984
        %v1345 = vpack.c.b16 %v989, %v985
        %v1346 = vpack.c.b16 %v994, %v990
        %v1347 = vpack.c.b16 %v995, %v991
        %v1348 = vpack.c.b16 %v996, %v992
        %v1349 = vpack.c.b16 %v997, %v993
        %v1350 = vpack.c.b16 %v1002, %v998
        %v1351 = vpack.c.b16 %v1003, %v999
        %v1352 = vpack.c.b16 %v1004, %v1000
        %v1353 = vpack.c.b16 %v1005, %v1001
        %v1354 = vpack.c.b16 %v1010, %v1006
        %v1355 = vpack.c.b16 %v1011, %v1007
        %v1356 = vpack.c.b16 %v1012, %v1008
        %v1357 = vpack.c.b16 %v1013, %v1009
        %v1358 = vpack.c.b16 %v1018, %v1014
        %v1359 = vpack.c.b16 %v1019, %v1015
        %v1360 = vpack.c.b16 %v1020, %v1016
        %v1361 = vpack.c.b16 %v1021, %v1017
        %v1362 = vpack.c.b16 %v1026, %v1022
        %v1363 = vpack.c.b16 %v1027, %v1023
        %v1364 = vpack.c.b16 %v1028, %v1024
        %v1365 = vpack.c.b16 %v1029, %v1025
        %v1366 = vpack.c.b16 %v1034, %v1030
        %v1367 = vpack.c.b16 %v1035, %v1031
        %v1368 = vpack.c.b16 %v1036, %v1032
        %v1369 = vpack.c.b16 %v1037, %v1033
        %v1370 = vpack.c.b16 %v1042, %v1038
        %v1371 = vpack.c.b16 %v1043, %v1039
        %v1372 = vpack.c.b16 %v1044, %v1040
        %v1373 = vpack.c.b16 %v1045, %v1041
        %v1374 = vpack.c.b16 %v1050, %v1046
        %v1375 = vpack.c.b16 %v1051, %v1047
        %v1376 = vpack.c.b16 %v1052, %v1048
        %v1377 = vpack.c.b16 %v1053, %v1049
        %v1378 = vpack.c.b16 %v1058, %v1054
        %v1379 = vpack.c.b16 %v1059, %v1055
        %v1380 = vpack.c.b16 %v1060, %v1056
        %v1381 = vpack.c.b16 %v1061, %v1057
        %v1382 = vpack.c.b16 %v1066, %v1062
        %v1383 = vpack.c.b16 %v1067, %v1063
        %v1384 = vpack.c.b16 %v1068, %v1064
        %v1385 = vpack.c.b16 %v1069, %v1065
        %v1386 = vpack.c.b16 %v1074, %v1070
        %v1387 = vpack.c.b16 %v1075, %v1071
        %v1388 = vpack.c.b16 %v1076, %v1072
        %v1389 = vpack.c.b16 %v1077, %v1073
        %v1390 = vpack.c.b16 %v1082, %v1078
        %v1391 = vpack.c.b16 %v1083, %v1079
        %v1392 = vpack.c.b16 %v1084, %v1080
        %v1393 = vpack.c.b16 %v1085, %v1081
        %v1394 = vpack.c.b16 %v1090, %v1086
        %v1395 = vpack.c.b16 %v1091, %v1087
        %v1396 = vpack.c.b16 %v1092, %v1088
        %v1397 = vpack.c.b16 %v1093, %v1089
        %v1398 = vpack.c.b16 %v1098, %v1094
        %v1399 = vpack.c.b16 %v1099, %v1095
        %v1400 = vpack.c.b16 %v1100, %v1096
        %v1401 = vpack.c.b16 %v1101, %v1097
        %v1402 = vpack.c.b16 %v1106, %v1102
        %v1403 = vpack.c.b16 %v1107, %v1103
        %v1404 = vpack.c.b16 %v1108, %v1104
        %v1405 = vpack.c.b16 %v1109, %v1105
        %v1406 = vpack.c.b16 %v1114, %v1110
        %v1407 = vpack.c.b16 %v1115, %v1111
        %v1408 = vpack.c.b16 %v1116, %v1112
        %v1409 = vpack.c.b16 %v1117, %v1113
        %v1410 = vpack.c.b16 %v1122, %v1118
        %v1411 = vpack.c.b16 %v1123, %v1119
        %v1412 = vpack.c.b16 %v1124, %v1120
        %v1413 = vpack.c.b16 %v1125, %v1121
        %v1414 = vpack.c.b16 %v1130, %v1126
        %v1415 = vpack.c.b16 %v1131, %v1127
        %v1416 = vpack.c.b16 %v1132, %v1128
        %v1417 = vpack.c.b16 %v1133, %v1129
        %v1418 = vpack.c.b16 %v1138, %v1134
        %v1419 = vpack.c.b16 %v1139, %v1135
        %v1420 = vpack.c.b16 %v1140, %v1136
        %v1421 = vpack.c.b16 %v1141, %v1137
        %v1422 = vpack.c.b16 %v1146, %v1142
        %v1423 = vpack.c.b16 %v1147, %v1143
        %v1424 = vpack.c.b16 %v1148, %v1144
        %v1425 = vpack.c.b16 %v1149, %v1145
        %v1426 = vpack.c.b16 %v1154, %v1150
        %v1427 = vpack.c.b16 %v1155, %v1151
        %v1428 = vpack.c.b16 %v1156, %v1152
        %v1429 = vpack.c.b16 %v1157, %v1153
        %v1430 = vpack.c.b16 %v1162, %v1158
        %v1431 = vpack.c.b16 %v1163, %v1159
        %v1432 = vpack.c.b16 %v1164, %v1160
        %v1433 = vpack.c.b16 %v1165, %v1161
        %v1434 = vpack.c.b16 %v1170, %v1166
        %v1435 = vpack.c.b16 %v1171, %v1167
        %v1436 = vpack.c.b16 %v1172, %v1168
        %v1437 = vpack.c.b16 %v1173, %v1169
        %v1438 = vpack.c.b16 %v1178, %v1174
        %v1439 = vpack.c.b16 %v1179, %v1175
        %v1440 = vpack.c.b16 %v1180, %v1176
        %v1441 = vpack.c.b16 %v1181, %v1177
        %v1442 = vpack.c.b16 %v1186, %v1182
        %v1443 = vpack.c.b16 %v1187, %v1183
        %v1444 = vpack.c.b16 %v1188, %v1184
        %v1445 = vpack.c.b16 %v1189, %v1185
        %v1446 = vpack.c.b16 %v1194, %v1190
        %v1447 = vpack.c.b16 %v1195, %v1191
        %v1448 = vpack.c.b16 %v1196, %v1192
        %v1449 = vpack.c.b16 %v1197, %v1193
        %v1450 = vpack.c.b16 %v1202, %v1198
        %v1451 = vpack.c.b16 %v1203, %v1199
        %v1452 = vpack.c.b16 %v1204, %v1200
        %v1453 = vpack.c.b16 %v1205, %v1201
        %v1454 = vpack.c.b16 %v1210, %v1206
        %v1455 = vpack.c.b16 %v1211, %v1207
        %v1456 = vpack.c.b16 %v1212, %v1208
        %v1457 = vpack.c.b16 %v1213, %v1209
        %v1458 = vpack.c.b16 %v1218, %v1214
        %v1459 = vpack.c.b16 %v1219, %v1215
        %v1460 = vpack.c.b16 %v1220, %v1216
        %v1461 = vpack.c.b16 %v1221, %v1217
        %v1462 = vpack.c.b16 %v1226, %v1222
        %v1463 = vpack.c.b16 %v1227, %v1223
        %v1464 = vpack.c.b16 %v1228, %v1224
        %v1465 = vpack.c.b16 %v1229, %v1225
        %v1466 = vpack.c.b16 %v1234, %v1230
        %v1467 = vpack.c.b16 %v1235, %v1231
        %v1468 = vpack.c.b16 %v1236, %v1232
        %v1469 = vpack.c.b16 %v1237, %v1233
        %v1470 = vpack.c.b16 %v1242, %v1238
        %v1471 = vpack.c.b16 %v1243, %v1239
        %v1472 = vpack.c.b16 %v1244, %v1240
        %v1473 = vpack.c.b16 %v1245, %v1241
        %v1474 = vpack.c.b16 %v1250, %v1246
        %v1475 = vpack.c.b16 %v1251, %v1247
        %v1476 = vpack.c.b16 %v1252, %v1248
        %v1477 = vpack.c.b16 %v1253, %v1249
        %1702 = vmatprep.subr.bf16.mxu0 %v1283
        %1703 = vmatpush1.bf16.msra.mxu0 %v1282
        %1704 = vmatprep.subr.bf16.mxu0 %v1279
        %1705 = vmatpush1.bf16.msra.mxu0 %v1278
        %1706 = vmatprep.subr.bf16.mxu0 %v1275
        %1707 = vmatpush1.bf16.msra.mxu0 %v1274
        %1708 = vmatprep.subr.bf16.mxu0 %v1271
        %1709 = vmatpush1.bf16.msra.mxu0 %v1270
        %1710 = vmatprep.subr.bf16.mxu0 %v1267
        %1711 = vmatpush1.bf16.msra.mxu0 %v1266
        %1712 = vmatprep.subr.bf16.mxu0 %v1263
        %1713 = vmatpush1.bf16.msra.mxu0 %v1262
        %1714 = vmatprep.subr.bf16.mxu0 %v1259
        %1715 = vmatpush1.bf16.msra.mxu0 %v1258
        %1716 = vmatprep.subr.bf16.mxu0 %v1255
        %1717 = vmatpush1.bf16.msra.mxu0 %v1254
        %1718 = vmatprep.subr.bf16.mxu0 %v1315
        %1719 = vmatpush2.bf16.msra.mxu0 %v1314
        %1720 = vmatprep.subr.bf16.mxu0 %v1311
        %1721 = vmatpush2.bf16.msra.mxu0 %v1310
        %1722 = vmatprep.subr.bf16.mxu0 %v1307
        %1723 = vmatpush2.bf16.msra.mxu0 %v1306
        %1724 = vmatprep.subr.bf16.mxu0 %v1303
        %1725 = vmatpush2.bf16.msra.mxu0 %v1302
        %1726 = vmatprep.subr.bf16.mxu0 %v1299
        %1727 = vmatpush2.bf16.msra.mxu0 %v1298
        %1728 = vmatprep.subr.bf16.mxu0 %v1295
        %1729 = vmatpush2.bf16.msra.mxu0 %v1294
        %1730 = vmatprep.subr.bf16.mxu0 %v1291
        %1731 = vmatpush2.bf16.msra.mxu0 %v1290
        %1732 = vmatprep.subr.bf16.mxu0 %v1287
        %1733 = vmatpush2.bf16.msra.mxu0 %v1286
        %1734 = vmatprep.mubr.f32.mxu0 %v337
        %1735 = vmatmul.mubr.f32.gmra.mxu0 %v336
        %v1736 = vpop.f32.mrf.mxu0
        %v1737 = vadd.f32 0.0, %v1736
        %v1738 = vpop.f32.mrf.mxu0
        %v1739 = vadd.f32 0.0, %v1738
        %1740 = vmatprep.mubr.f32.mxu0 %v344
        %1741 = vmatmul.mubr.f32.gmra.mxu0 %v343
        %v1742 = vpop.f32.mrf.mxu0
        %v1743 = vadd.f32 0.0, %v1742
        %v1744 = vpop.f32.mrf.mxu0
        %v1745 = vadd.f32 0.0, %v1744
        %1746 = vdwg.mxu0
        %1747 = vmatprep.subr.bf16.mxu0 %v1347
        %1748 = vmatpush1.bf16.msra.mxu0 %v1346
        %1749 = vmatprep.subr.bf16.mxu0 %v1343
        %1750 = vmatpush1.bf16.msra.mxu0 %v1342
        %1751 = vmatprep.subr.bf16.mxu0 %v1339
        %1752 = vmatpush1.bf16.msra.mxu0 %v1338
        %1753 = vmatprep.subr.bf16.mxu0 %v1335
        %1754 = vmatpush1.bf16.msra.mxu0 %v1334
        %1755 = vmatprep.subr.bf16.mxu0 %v1331
        %1756 = vmatpush1.bf16.msra.mxu0 %v1330
        %1757 = vmatprep.subr.bf16.mxu0 %v1327
        %1758 = vmatpush1.bf16.msra.mxu0 %v1326
        %1759 = vmatprep.subr.bf16.mxu0 %v1323
        %1760 = vmatpush1.bf16.msra.mxu0 %v1322
        %1761 = vmatprep.subr.bf16.mxu0 %v1319
        %1762 = vmatpush1.bf16.msra.mxu0 %v1318
        %1763 = vmatprep.subr.bf16.mxu0 %v1379
        %1764 = vmatpush2.bf16.msra.mxu0 %v1378
        %1765 = vmatprep.subr.bf16.mxu0 %v1375
        %1766 = vmatpush2.bf16.msra.mxu0 %v1374
        %1767 = vmatprep.subr.bf16.mxu0 %v1371
        %1768 = vmatpush2.bf16.msra.mxu0 %v1370
        %1769 = vmatprep.subr.bf16.mxu0 %v1367
        %1770 = vmatpush2.bf16.msra.mxu0 %v1366
        %1771 = vmatprep.subr.bf16.mxu0 %v1363
        %1772 = vmatpush2.bf16.msra.mxu0 %v1362
        %1773 = vmatprep.subr.bf16.mxu0 %v1359
        %1774 = vmatpush2.bf16.msra.mxu0 %v1358
        %1775 = vmatprep.subr.bf16.mxu0 %v1355
        %1776 = vmatpush2.bf16.msra.mxu0 %v1354
        %1777 = vmatprep.subr.bf16.mxu0 %v1351
        %1778 = vmatpush2.bf16.msra.mxu0 %v1350
        %1779 = vmatprep.mubr.f32.mxu0 %v339
        %1780 = vmatmul.mubr.f32.gmra.mxu0 %v338
        %v1781 = vpop.f32.mrf.mxu0
        %v1782 = vadd.f32 %v1737, %v1781
        %v1783 = vpop.f32.mrf.mxu0
        %v1784 = vadd.f32 %v1739, %v1783
        %1785 = vmatprep.mubr.f32.mxu0 %v346
        %1786 = vmatmul.mubr.f32.gmra.mxu0 %v345
        %v1787 = vpop.f32.mrf.mxu0
        %v1788 = vadd.f32 %v1743, %v1787
        %v1789 = vpop.f32.mrf.mxu0
        %v1790 = vadd.f32 %v1745, %v1789
        %1791 = vdwg.mxu0
        %1792 = vmatprep.subr.bf16.mxu0 %v1411
        %1793 = vmatpush1.bf16.msra.mxu0 %v1410
        %1794 = vmatprep.subr.bf16.mxu0 %v1407
        %1795 = vmatpush1.bf16.msra.mxu0 %v1406
        %1796 = vmatprep.subr.bf16.mxu0 %v1403
        %1797 = vmatpush1.bf16.msra.mxu0 %v1402
        %1798 = vmatprep.subr.bf16.mxu0 %v1399
        %1799 = vmatpush1.bf16.msra.mxu0 %v1398
        %1800 = vmatprep.subr.bf16.mxu0 %v1395
        %1801 = vmatpush1.bf16.msra.mxu0 %v1394
        %1802 = vmatprep.subr.bf16.mxu0 %v1391
        %1803 = vmatpush1.bf16.msra.mxu0 %v1390
        %1804 = vmatprep.subr.bf16.mxu0 %v1387
        %1805 = vmatpush1.bf16.msra.mxu0 %v1386
        %1806 = vmatprep.subr.bf16.mxu0 %v1383
        %1807 = vmatpush1.bf16.msra.mxu0 %v1382
        %1808 = vmatprep.subr.bf16.mxu0 %v1443
        %1809 = vmatpush2.bf16.msra.mxu0 %v1442
        %1810 = vmatprep.subr.bf16.mxu0 %v1439
        %1811 = vmatpush2.bf16.msra.mxu0 %v1438
        %1812 = vmatprep.subr.bf16.mxu0 %v1435
        %1813 = vmatpush2.bf16.msra.mxu0 %v1434
        %1814 = vmatprep.subr.bf16.mxu0 %v1431
        %1815 = vmatpush2.bf16.msra.mxu0 %v1430
        %1816 = vmatprep.subr.bf16.mxu0 %v1427
        %1817 = vmatpush2.bf16.msra.mxu0 %v1426
        %1818 = vmatprep.subr.bf16.mxu0 %v1423
        %1819 = vmatpush2.bf16.msra.mxu0 %v1422
        %1820 = vmatprep.subr.bf16.mxu0 %v1419
        %1821 = vmatpush2.bf16.msra.mxu0 %v1418
        %1822 = vmatprep.subr.bf16.mxu0 %v1415
        %1823 = vmatpush2.bf16.msra.mxu0 %v1414
        %1824 = vmatprep.mubr.f32.mxu0 %v341
        %1825 = vmatmul.mubr.f32.gmra.mxu0 %v340
        %v1826 = vpop.f32.mrf.mxu0
        %v1827 = vadd.f32 %v1782, %v1826
        %v1828 = vpop.f32.mrf.mxu0
        %v1829 = vadd.f32 %v1784, %v1828
        %1830 = vmatprep.mubr.f32.mxu0 %v348
        %1831 = vmatmul.mubr.f32.gmra.mxu0 %v347
        %v1832 = vpop.f32.mrf.mxu0
        %v1833 = vadd.f32 %v1788, %v1832
        %v1834 = vpop.f32.mrf.mxu0
        %v1835 = vadd.f32 %v1790, %v1834
        %1836 = vdwg.mxu0
        %1837 = vmatprep.subr.bf16.mxu0 %v1475
        %1838 = vmatpush1.bf16.msra.mxu0 %v1474
        %1839 = vmatprep.subr.bf16.mxu0 %v1471
        %1840 = vmatpush1.bf16.msra.mxu0 %v1470
        %1841 = vmatprep.subr.bf16.mxu0 %v1467
        %1842 = vmatpush1.bf16.msra.mxu0 %v1466
        %1843 = vmatprep.subr.bf16.mxu0 %v1463
        %1844 = vmatpush1.bf16.msra.mxu0 %v1462
        %1845 = vmatprep.subr.bf16.mxu0 %v1459
        %1846 = vmatpush1.bf16.msra.mxu0 %v1458
        %1847 = vmatprep.subr.bf16.mxu0 %v1455
        %1848 = vmatpush1.bf16.msra.mxu0 %v1454
        %1849 = vmatprep.subr.bf16.mxu0 %v1451
        %1850 = vmatpush1.bf16.msra.mxu0 %v1450
        %1851 = vmatprep.subr.bf16.mxu0 %v1447
        %1852 = vmatpush1.bf16.msra.mxu0 %v1446
        %1853 = vmatprep.subr.bf16.mxu0 0
        %1854 = vmatpush2.bf16.msra.mxu0 0
        %1855 = vmatprep.subr.bf16.mxu0 0
        %1856 = vmatpush2.bf16.msra.mxu0 0
        %1857 = vmatprep.subr.bf16.mxu0 0
        %1858 = vmatpush2.bf16.msra.mxu0 0
        %1859 = vmatprep.subr.bf16.mxu0 0
        %1860 = vmatpush2.bf16.msra.mxu0 0
        %1861 = vmatprep.subr.bf16.mxu0 0
        %1862 = vmatpush2.bf16.msra.mxu0 0
        %1863 = vmatprep.subr.bf16.mxu0 0
        %1864 = vmatpush2.bf16.msra.mxu0 0
        %1865 = vmatprep.subr.bf16.mxu0 0
        %1866 = vmatpush2.bf16.msra.mxu0 0
        %1867 = vmatprep.subr.bf16.mxu0 0
        %1868 = vmatpush2.bf16.msra.mxu0 0
        %1869 = vmatprep.mubr.f32.mxu0 0.0
        %1870 = vmatmul.mubr.f32.gmra.mxu0 %v342
        %v1871 = vpop.f32.mrf.mxu0
        %v1872 = vadd.f32 %v1827, %v1871
        %v1873 = vpop.f32.mrf.mxu0
        %v1874 = vadd.f32 %v1829, %v1873
        %1875 = vmatprep.mubr.f32.mxu0 0.0
        %1876 = vmatmul.mubr.f32.gmra.mxu0 %v349
        %v1877 = vpop.f32.mrf.mxu0
        %v1878 = vadd.f32 %v1833, %v1877
        %v1879 = vpop.f32.mrf.mxu0
        %v1880 = vadd.f32 %v1835, %v1879
        %1881 = vdwg.mxu0
        %1882 = vmatprep.subr.bf16.mxu0 %v1285
        %1883 = vmatpush1.bf16.msra.mxu0 %v1284
        %1884 = vmatprep.subr.bf16.mxu0 %v1281
        %1885 = vmatpush1.bf16.msra.mxu0 %v1280
        %1886 = vmatprep.subr.bf16.mxu0 %v1277
        %1887 = vmatpush1.bf16.msra.mxu0 %v1276
        %1888 = vmatprep.subr.bf16.mxu0 %v1273
        %1889 = vmatpush1.bf16.msra.mxu0 %v1272
        %1890 = vmatprep.subr.bf16.mxu0 %v1269
        %1891 = vmatpush1.bf16.msra.mxu0 %v1268
        %1892 = vmatprep.subr.bf16.mxu0 %v1265
        %1893 = vmatpush1.bf16.msra.mxu0 %v1264
        %1894 = vmatprep.subr.bf16.mxu0 %v1261
        %1895 = vmatpush1.bf16.msra.mxu0 %v1260
        %1896 = vmatprep.subr.bf16.mxu0 %v1257
        %1897 = vmatpush1.bf16.msra.mxu0 %v1256
        %1898 = vmatprep.subr.bf16.mxu0 %v1317
        %1899 = vmatpush2.bf16.msra.mxu0 %v1316
        %1900 = vmatprep.subr.bf16.mxu0 %v1313
        %1901 = vmatpush2.bf16.msra.mxu0 %v1312
        %1902 = vmatprep.subr.bf16.mxu0 %v1309
        %1903 = vmatpush2.bf16.msra.mxu0 %v1308
        %1904 = vmatprep.subr.bf16.mxu0 %v1305
        %1905 = vmatpush2.bf16.msra.mxu0 %v1304
        %1906 = vmatprep.subr.bf16.mxu0 %v1301
        %1907 = vmatpush2.bf16.msra.mxu0 %v1300
        %1908 = vmatprep.subr.bf16.mxu0 %v1297
        %1909 = vmatpush2.bf16.msra.mxu0 %v1296
        %1910 = vmatprep.subr.bf16.mxu0 %v1293
        %1911 = vmatpush2.bf16.msra.mxu0 %v1292
        %1912 = vmatprep.subr.bf16.mxu0 %v1289
        %1913 = vmatpush2.bf16.msra.mxu0 %v1288
        %1914 = vmatprep.mubr.f32.mxu0 %v337
        %1915 = vmatmul.mubr.f32.gmra.mxu0 %v336
        %v1916 = vpop.f32.mrf.mxu0
        %v1917 = vadd.f32 0.0, %v1916
        %v1918 = vpop.f32.mrf.mxu0
        %v1919 = vadd.f32 0.0, %v1918
        %1920 = vmatprep.mubr.f32.mxu0 %v344
        %1921 = vmatmul.mubr.f32.gmra.mxu0 %v343
        %v1922 = vpop.f32.mrf.mxu0
        %v1923 = vadd.f32 0.0, %v1922
        %v1924 = vpop.f32.mrf.mxu0
        %v1925 = vadd.f32 0.0, %v1924
        %1926 = vdwg.mxu0
        %1927 = vmatprep.subr.bf16.mxu0 %v1349
        %1928 = vmatpush1.bf16.msra.mxu0 %v1348
        %1929 = vmatprep.subr.bf16.mxu0 %v1345
        %1930 = vmatpush1.bf16.msra.mxu0 %v1344
        %1931 = vmatprep.subr.bf16.mxu0 %v1341
        %1932 = vmatpush1.bf16.msra.mxu0 %v1340
        %1933 = vmatprep.subr.bf16.mxu0 %v1337
        %1934 = vmatpush1.bf16.msra.mxu0 %v1336
        %1935 = vmatprep.subr.bf16.mxu0 %v1333
        %1936 = vmatpush1.bf16.msra.mxu0 %v1332
        %1937 = vmatprep.subr.bf16.mxu0 %v1329
        %1938 = vmatpush1.bf16.msra.mxu0 %v1328
        %1939 = vmatprep.subr.bf16.mxu0 %v1325
        %1940 = vmatpush1.bf16.msra.mxu0 %v1324
        %1941 = vmatprep.subr.bf16.mxu0 %v1321
        %1942 = vmatpush1.bf16.msra.mxu0 %v1320
        %1943 = vmatprep.subr.bf16.mxu0 %v1381
        %1944 = vmatpush2.bf16.msra.mxu0 %v1380
        %1945 = vmatprep.subr.bf16.mxu0 %v1377
        %1946 = vmatpush2.bf16.msra.mxu0 %v1376
        %1947 = vmatprep.subr.bf16.mxu0 %v1373
        %1948 = vmatpush2.bf16.msra.mxu0 %v1372
        %1949 = vmatprep.subr.bf16.mxu0 %v1369
        %1950 = vmatpush2.bf16.msra.mxu0 %v1368
        %1951 = vmatprep.subr.bf16.mxu0 %v1365
        %1952 = vmatpush2.bf16.msra.mxu0 %v1364
        %1953 = vmatprep.subr.bf16.mxu0 %v1361
        %1954 = vmatpush2.bf16.msra.mxu0 %v1360
        %1955 = vmatprep.subr.bf16.mxu0 %v1357
        %1956 = vmatpush2.bf16.msra.mxu0 %v1356
        %1957 = vmatprep.subr.bf16.mxu0 %v1353
        %1958 = vmatpush2.bf16.msra.mxu0 %v1352
        %1959 = vmatprep.mubr.f32.mxu0 %v339
        %1960 = vmatmul.mubr.f32.gmra.mxu0 %v338
        %v1961 = vpop.f32.mrf.mxu0
        %v1962 = vadd.f32 %v1917, %v1961
        %v1963 = vpop.f32.mrf.mxu0
        %v1964 = vadd.f32 %v1919, %v1963
        %1965 = vmatprep.mubr.f32.mxu0 %v346
        %1966 = vmatmul.mubr.f32.gmra.mxu0 %v345
        %v1967 = vpop.f32.mrf.mxu0
        %v1968 = vadd.f32 %v1923, %v1967
        %v1969 = vpop.f32.mrf.mxu0
        %v1970 = vadd.f32 %v1925, %v1969
        %1971 = vdwg.mxu0
        %1972 = vmatprep.subr.bf16.mxu0 %v1413
        %1973 = vmatpush1.bf16.msra.mxu0 %v1412
        %1974 = vmatprep.subr.bf16.mxu0 %v1409
        %1975 = vmatpush1.bf16.msra.mxu0 %v1408
        %1976 = vmatprep.subr.bf16.mxu0 %v1405
        %1977 = vmatpush1.bf16.msra.mxu0 %v1404
        %1978 = vmatprep.subr.bf16.mxu0 %v1401
        %1979 = vmatpush1.bf16.msra.mxu0 %v1400
        %1980 = vmatprep.subr.bf16.mxu0 %v1397
        %1981 = vmatpush1.bf16.msra.mxu0 %v1396
        %1982 = vmatprep.subr.bf16.mxu0 %v1393
        %1983 = vmatpush1.bf16.msra.mxu0 %v1392
        %1984 = vmatprep.subr.bf16.mxu0 %v1389
        %1985 = vmatpush1.bf16.msra.mxu0 %v1388
        %1986 = vmatprep.subr.bf16.mxu0 %v1385
        %1987 = vmatpush1.bf16.msra.mxu0 %v1384
        %1988 = vmatprep.subr.bf16.mxu0 %v1445
        %1989 = vmatpush2.bf16.msra.mxu0 %v1444
        %1990 = vmatprep.subr.bf16.mxu0 %v1441
        %1991 = vmatpush2.bf16.msra.mxu0 %v1440
        %1992 = vmatprep.subr.bf16.mxu0 %v1437
        %1993 = vmatpush2.bf16.msra.mxu0 %v1436
        %1994 = vmatprep.subr.bf16.mxu0 %v1433
        %1995 = vmatpush2.bf16.msra.mxu0 %v1432
        %1996 = vmatprep.subr.bf16.mxu0 %v1429
        %1997 = vmatpush2.bf16.msra.mxu0 %v1428
        %1998 = vmatprep.subr.bf16.mxu0 %v1425
        %1999 = vmatpush2.bf16.msra.mxu0 %v1424
        %2000 = vmatprep.subr.bf16.mxu0 %v1421
        %2001 = vmatpush2.bf16.msra.mxu0 %v1420
        %2002 = vmatprep.subr.bf16.mxu0 %v1417
        %2003 = vmatpush2.bf16.msra.mxu0 %v1416
        %2004 = vmatprep.mubr.f32.mxu0 %v341
        %2005 = vmatmul.mubr.f32.gmra.mxu0 %v340
        %v2006 = vpop.f32.mrf.mxu0
        %v2007 = vadd.f32 %v1962, %v2006
        %v2008 = vpop.f32.mrf.mxu0
        %v2009 = vadd.f32 %v1964, %v2008
        %2010 = vmatprep.mubr.f32.mxu0 %v348
        %2011 = vmatmul.mubr.f32.gmra.mxu0 %v347
        %v2012 = vpop.f32.mrf.mxu0
        %v2013 = vadd.f32 %v1968, %v2012
        %v2014 = vpop.f32.mrf.mxu0
        %v2015 = vadd.f32 %v1970, %v2014
        %2016 = vdwg.mxu0
        %2017 = vmatprep.subr.bf16.mxu0 %v1477
        %2018 = vmatpush1.bf16.msra.mxu0 %v1476
        %2019 = vmatprep.subr.bf16.mxu0 %v1473
        %2020 = vmatpush1.bf16.msra.mxu0 %v1472
        %2021 = vmatprep.subr.bf16.mxu0 %v1469
        %2022 = vmatpush1.bf16.msra.mxu0 %v1468
        %2023 = vmatprep.subr.bf16.mxu0 %v1465
        %2024 = vmatpush1.bf16.msra.mxu0 %v1464
        %2025 = vmatprep.subr.bf16.mxu0 %v1461
        %2026 = vmatpush1.bf16.msra.mxu0 %v1460
        %2027 = vmatprep.subr.bf16.mxu0 %v1457
        %2028 = vmatpush1.bf16.msra.mxu0 %v1456
        %2029 = vmatprep.subr.bf16.mxu0 %v1453
        %2030 = vmatpush1.bf16.msra.mxu0 %v1452
        %2031 = vmatprep.subr.bf16.mxu0 %v1449
        %2032 = vmatpush1.bf16.msra.mxu0 %v1448
        %2033 = vmatprep.subr.bf16.mxu0 0
        %2034 = vmatpush2.bf16.msra.mxu0 0
        %2035 = vmatprep.subr.bf16.mxu0 0
        %2036 = vmatpush2.bf16.msra.mxu0 0
        %2037 = vmatprep.subr.bf16.mxu0 0
        %2038 = vmatpush2.bf16.msra.mxu0 0
        %2039 = vmatprep.subr.bf16.mxu0 0
        %2040 = vmatpush2.bf16.msra.mxu0 0
        %2041 = vmatprep.subr.bf16.mxu0 0
        %2042 = vmatpush2.bf16.msra.mxu0 0
        %2043 = vmatprep.subr.bf16.mxu0 0
        %2044 = vmatpush2.bf16.msra.mxu0 0
        %2045 = vmatprep.subr.bf16.mxu0 0
        %2046 = vmatpush2.bf16.msra.mxu0 0
        %2047 = vmatprep.subr.bf16.mxu0 0
        %2048 = vmatpush2.bf16.msra.mxu0 0
        %2049 = vmatprep.mubr.f32.mxu0 0.0
        %2050 = vmatmul.mubr.f32.gmra.mxu0 %v342
        %v2051 = vpop.f32.mrf.mxu0
        %v2052 = vadd.f32 %v2007, %v2051
        %v2053 = vpop.f32.mrf.mxu0
        %v2054 = vadd.f32 %v2009, %v2053
        %2055 = vmatprep.mubr.f32.mxu0 0.0
        %2056 = vmatmul.mubr.f32.gmra.mxu0 %v349
        %v2057 = vpop.f32.mrf.mxu0
        %v2058 = vadd.f32 %v2013, %v2057
        %v2059 = vpop.f32.mrf.mxu0
        %v2060 = vadd.f32 %v2015, %v2059
        %2061 = vdwg.mxu0
        %v2062 = vadd.f32 %v350, %v1872
        %v2063 = vadd.f32 %v351, %v1874
        %v2064 = vadd.f32 %v352, %v2052
        %v2065 = vadd.f32 %v353, %v2054
        %v2066 = vadd.f32 %v354, %v1878
        %v2067 = vadd.f32 %v355, %v1880
        %v2068 = vadd.f32 %v356, %v2058
        %v2069 = vadd.f32 %v357, %v2060
        %2070 = vst [vmem:[#allocation2] sm:$0xff] %v2062
        %2071 = vst [vmem:[#allocation2 + $0x8] sm:$0xff] %v2063
        %2072 = vst [vmem:[#allocation2 + $0x10] sm:$0xff] %v2064
        %2073 = vst [vmem:[#allocation2 + $0x18] sm:$0xff] %v2065
        %2074 = vst [vmem:[#allocation2 + $0x20] sm:$0xf] %v2066
        %2075 = vst [vmem:[#allocation2 + $0x28] sm:$0xf] %v2067
        %2076 = vst [vmem:[#allocation2 + $0x30] sm:$0xf] %v2068
        %2077 = vst [vmem:[#allocation2 + $0x38] sm:$0xf] %v2069
        %p2078 = scmp.eq.s32.totalorder %s18, 1
        // Predicated region
        $region64: #{wasserstein_tke_forward.3} parent=54 // pred_check
          %p2079 = pneg %p2078
        $region65: #{wasserstein_tke_forward.3} parent=54 // pred_check_branch
          %2081 = sbr.rel (%p2079) target = $region67
        $region66: #{wasserstein_tke_forward.3} parent=54 // pred_region
          %v2082 = vld [vmem:[#allocation2] sm:$0xff]
          %v2083 = vld [vmem:[#allocation2 + $0x8] sm:$0xff]
          %v2084 = vld [vmem:[#allocation2 + $0x10] sm:$0xff]
          %v2085 = vld [vmem:[#allocation2 + $0x18] sm:$0xff]
          %v2086 = vld [vmem:[#allocation2 + $0x20] sm:$0xf]
          %v2087 = vld [vmem:[#allocation2 + $0x28] sm:$0xf]
          %v2088 = vld [vmem:[#allocation2 + $0x30] sm:$0xf]
          %v2089 = vld [vmem:[#allocation2 + $0x38] sm:$0xf]
          %v2090 = vmul.f32 %v2082, 1.442695
          %v2091 = vpow.pop %v2090
          %v2092 = vmul.f32 %v2083, 1.442695
          %v2093 = vpow.pop %v2092
          %v2094 = vmul.f32 %v2084, 1.442695
          %v2095 = vpow.pop %v2094
          %v2096 = vmul.f32 %v2085, 1.442695
          %v2097 = vpow.pop %v2096
          %v2098 = vmul.f32 %v2086, 1.442695
          %v2099 = vpow.pop %v2098
          %v2100 = vmul.f32 %v2087, 1.442695
          %v2101 = vpow.pop %v2100
          %v2102 = vmul.f32 %v2088, 1.442695
          %v2103 = vpow.pop %v2102
          %v2104 = vmul.f32 %v2089, 1.442695
          %v2105 = vpow.pop %v2104
          %v2106 = vld [vmem:[%s2] sm:$0xf]
          %v2107 = vld [vmem:[%s2 + $0x4] sm:$0xf]
          %v2108 = vld [vmem:[%s2 + $0x8] sm:$0xf]
          %v2109 = vld [vmem:[%s2 + $0xc] sm:$0xf]
          %v2110 = vld [vmem:[%s2 + $0x10] sm:$0xf]
          %v2111 = vld [vmem:[%s2 + $0x14] sm:$0xf]
          %v2112 = vld [vmem:[%s2 + $0x18] sm:$0xf]
          %v2113 = vld [vmem:[%s2 + $0x1c] sm:$0xf]
          %v2114 = vld [vmem:[%s2 + $0x20] sm:$0xf]
          %v2115 = vld [vmem:[%s2 + $0x24] sm:$0xf]
          %v2116 = vld [vmem:[%s2 + $0x28] sm:$0xf]
          %v2117 = vld [vmem:[%s2 + $0x2c] sm:$0xf]
          %v2118 = vld [vmem:[%s2 + $0x30] sm:$0xf]
          %v2119 = vld [vmem:[%s2 + $0x34] sm:$0xf]
          %v2120 = vld [vmem:[%s2 + $0x38] sm:$0xf]
          %v2121 = vld [vmem:[%s2 + $0x3c] sm:$0xf]
          %v2122 = vld [vmem:[%s2 + $0x40] sm:$0xf]
          %v2123 = vld [vmem:[%s2 + $0x44] sm:$0xf]
          %v2124 = vld [vmem:[%s2 + $0x48] sm:$0xf]
          %v2125 = vld [vmem:[%s2 + $0x4c] sm:$0xf]
          %v2126 = vld [vmem:[%s2 + $0x50] sm:$0xf]
          %v2127 = vld [vmem:[%s2 + $0x54] sm:$0xf]
          %v2128 = vld [vmem:[%s2 + $0x58] sm:$0xf]
          %v2129 = vld [vmem:[%s2 + $0x5c] sm:$0xf]
          %v2130 = vld [vmem:[%s2 + $0x60] sm:$0xf]
          %v2131 = vld [vmem:[%s2 + $0x64] sm:$0xf]
          %v2132 = vld [vmem:[%s2 + $0x68] sm:$0xf]
          %v2133 = vld [vmem:[%s2 + $0x6c] sm:$0xf]
          %v2134 = vld [vmem:[%s2 + $0x70] sm:$0xf]
          %v2135 = vld [vmem:[%s2 + $0x74] sm:$0xf]
          %v2136 = vld [vmem:[%s2 + $0x78] sm:$0xf]
          %v2137 = vld [vmem:[%s2 + $0x7c] sm:$0xf]
          %v2138 = vld [vmem:[%s2 + $0x80] sm:$0xf]
          %v2139 = vld [vmem:[%s2 + $0x84] sm:$0xf]
          %v2140 = vld [vmem:[%s2 + $0x88] sm:$0xf]
          %v2141 = vld [vmem:[%s2 + $0x8c] sm:$0xf]
          %v2142 = vld [vmem:[%s2 + $0x90] sm:$0xf]
          %v2143 = vld [vmem:[%s2 + $0x94] sm:$0xf]
          %v2144 = vld [vmem:[%s2 + $0x98] sm:$0xf]
          %v2145 = vld [vmem:[%s2 + $0x9c] sm:$0xf]
          %v2146 = vld [vmem:[%s2 + $0xa0] sm:$0xf]
          %v2147 = vld [vmem:[%s2 + $0xa4] sm:$0xf]
          %v2148 = vld [vmem:[%s2 + $0xa8] sm:$0xf]
          %v2149 = vld [vmem:[%s2 + $0xac] sm:$0xf]
          %v2150 = vld [vmem:[%s2 + $0xb0] sm:$0xf]
          %v2151 = vld [vmem:[%s2 + $0xb4] sm:$0xf]
          %v2152 = vld [vmem:[%s2 + $0xb8] sm:$0xf]
          %v2153 = vld [vmem:[%s2 + $0xbc] sm:$0xf]
          %v2154 = vld [vmem:[%s2 + $0xc0] sm:$0xf]
          %v2155 = vld [vmem:[%s2 + $0xc4] sm:$0xf]
          %v2156 = vld [vmem:[%s2 + $0xc8] sm:$0xf]
          %v2157 = vld [vmem:[%s2 + $0xcc] sm:$0xf]
          %v2158 = vld [vmem:[%s2 + $0xd0] sm:$0xf]
          %v2159 = vld [vmem:[%s2 + $0xd4] sm:$0xf]
          %v2160 = vld [vmem:[%s2 + $0xd8] sm:$0xf]
          %v2161 = vld [vmem:[%s2 + $0xdc] sm:$0xf]
          %v2162 = vld [vmem:[%s2 + $0xe0] sm:$0xf]
          %v2163 = vld [vmem:[%s2 + $0xe4] sm:$0xf]
          %v2164 = vld [vmem:[%s2 + $0xe8] sm:$0xf]
          %v2165 = vld [vmem:[%s2 + $0xec] sm:$0xf]
          %v2166 = vld [vmem:[%s2 + $0xf0] sm:$0xf]
          %v2167 = vld [vmem:[%s2 + $0xf4] sm:$0xf]
          %v2168 = vld [vmem:[%s2 + $0xf8] sm:$0xf]
          %v2169 = vld [vmem:[%s2 + $0xfc] sm:$0xf]
          %v2234 = vunpack.c.l.b16 %v2106
          %v2235 = vunpack.c.l.b16 %v2107
          %v2236 = vunpack.c.l.b16 %v2108
          %v2237 = vunpack.c.l.b16 %v2109
          %v2238 = vunpack.c.l.b16 %v2110
          %v2239 = vunpack.c.l.b16 %v2111
          %v2240 = vunpack.c.l.b16 %v2112
          %v2241 = vunpack.c.l.b16 %v2113
          %v2242 = vunpack.c.l.b16 %v2114
          %v2243 = vunpack.c.l.b16 %v2115
          %v2244 = vunpack.c.l.b16 %v2116
          %v2245 = vunpack.c.l.b16 %v2117
          %v2246 = vunpack.c.l.b16 %v2118
          %v2247 = vunpack.c.l.b16 %v2119
          %v2248 = vunpack.c.l.b16 %v2120
          %v2249 = vunpack.c.l.b16 %v2121
          %v2250 = vunpack.c.l.b16 %v2122
          %v2251 = vunpack.c.l.b16 %v2123
          %v2252 = vunpack.c.l.b16 %v2124
          %v2253 = vunpack.c.l.b16 %v2125
          %v2254 = vunpack.c.l.b16 %v2126
          %v2255 = vunpack.c.l.b16 %v2127
          %v2256 = vunpack.c.l.b16 %v2128
          %v2257 = vunpack.c.l.b16 %v2129
          %v2258 = vunpack.c.l.b16 %v2130
          %v2259 = vunpack.c.l.b16 %v2131
          %v2260 = vunpack.c.l.b16 %v2132
          %v2261 = vunpack.c.l.b16 %v2133
          %v2262 = vunpack.c.l.b16 %v2134
          %v2263 = vunpack.c.l.b16 %v2135
          %v2264 = vunpack.c.l.b16 %v2136
          %v2265 = vunpack.c.l.b16 %v2137
          %v2266 = vunpack.c.l.b16 %v2138
          %v2267 = vunpack.c.l.b16 %v2139
          %v2268 = vunpack.c.l.b16 %v2140
          %v2269 = vunpack.c.l.b16 %v2141
          %v2270 = vunpack.c.l.b16 %v2142
          %v2271 = vunpack.c.l.b16 %v2143
          %v2272 = vunpack.c.l.b16 %v2144
          %v2273 = vunpack.c.l.b16 %v2145
          %v2274 = vunpack.c.l.b16 %v2146
          %v2275 = vunpack.c.l.b16 %v2147
          %v2276 = vunpack.c.l.b16 %v2148
          %v2277 = vunpack.c.l.b16 %v2149
          %v2278 = vunpack.c.l.b16 %v2150
          %v2279 = vunpack.c.l.b16 %v2151
          %v2280 = vunpack.c.l.b16 %v2152
          %v2281 = vunpack.c.l.b16 %v2153
          %v2282 = vunpack.c.l.b16 %v2154
          %v2283 = vunpack.c.l.b16 %v2155
          %v2284 = vunpack.c.l.b16 %v2156
          %v2285 = vunpack.c.l.b16 %v2157
          %v2286 = vunpack.c.l.b16 %v2158
          %v2287 = vunpack.c.l.b16 %v2159
          %v2288 = vunpack.c.l.b16 %v2160
          %v2289 = vunpack.c.l.b16 %v2161
          %v2290 = vunpack.c.l.b16 %v2162
          %v2291 = vunpack.c.l.b16 %v2163
          %v2292 = vunpack.c.l.b16 %v2164
          %v2293 = vunpack.c.l.b16 %v2165
          %v2294 = vunpack.c.l.b16 %v2166
          %v2295 = vunpack.c.l.b16 %v2167
          %v2296 = vunpack.c.l.b16 %v2168
          %v2297 = vunpack.c.l.b16 %v2169
          %v2298 = vpack.c.b16 %v2235, %v2234
          %v2299 = vpack.c.b16 %v2237, %v2236
          %v2300 = vpack.c.b16 %v2239, %v2238
          %v2301 = vpack.c.b16 %v2241, %v2240
          %v2302 = vpack.c.b16 %v2243, %v2242
          %v2303 = vpack.c.b16 %v2245, %v2244
          %v2304 = vpack.c.b16 %v2247, %v2246
          %v2305 = vpack.c.b16 %v2249, %v2248
          %v2306 = vpack.c.b16 %v2251, %v2250
          %v2307 = vpack.c.b16 %v2253, %v2252
          %v2308 = vpack.c.b16 %v2255, %v2254
          %v2309 = vpack.c.b16 %v2257, %v2256
          %v2310 = vpack.c.b16 %v2259, %v2258
          %v2311 = vpack.c.b16 %v2261, %v2260
          %v2312 = vpack.c.b16 %v2263, %v2262
          %v2313 = vpack.c.b16 %v2265, %v2264
          %v2314 = vpack.c.b16 %v2267, %v2266
          %v2315 = vpack.c.b16 %v2269, %v2268
          %v2316 = vpack.c.b16 %v2271, %v2270
          %v2317 = vpack.c.b16 %v2273, %v2272
          %v2318 = vpack.c.b16 %v2275, %v2274
          %v2319 = vpack.c.b16 %v2277, %v2276
          %v2320 = vpack.c.b16 %v2279, %v2278
          %v2321 = vpack.c.b16 %v2281, %v2280
          %v2322 = vpack.c.b16 %v2283, %v2282
          %v2323 = vpack.c.b16 %v2285, %v2284
          %v2324 = vpack.c.b16 %v2287, %v2286
          %v2325 = vpack.c.b16 %v2289, %v2288
          %v2326 = vpack.c.b16 %v2291, %v2290
          %v2327 = vpack.c.b16 %v2293, %v2292
          %v2328 = vpack.c.b16 %v2295, %v2294
          %v2329 = vpack.c.b16 %v2297, %v2296
          %2362 = vmatprep.subr.bf16.mxu0 0
          %2363 = vmatpush1.bf16.msra.mxu0 %v2305
          %2364 = vmatprep.subr.bf16.mxu0 0
          %2365 = vmatpush1.bf16.msra.mxu0 %v2304
          %2366 = vmatprep.subr.bf16.mxu0 0
          %2367 = vmatpush1.bf16.msra.mxu0 %v2303
          %2368 = vmatprep.subr.bf16.mxu0 0
          %2369 = vmatpush1.bf16.msra.mxu0 %v2302
          %2370 = vmatprep.subr.bf16.mxu0 0
          %2371 = vmatpush1.bf16.msra.mxu0 %v2301
          %2372 = vmatprep.subr.bf16.mxu0 0
          %2373 = vmatpush1.bf16.msra.mxu0 %v2300
          %2374 = vmatprep.subr.bf16.mxu0 0
          %2375 = vmatpush1.bf16.msra.mxu0 %v2299
          %2376 = vmatprep.subr.bf16.mxu0 0
          %2377 = vmatpush1.bf16.msra.mxu0 %v2298
          %2378 = vmatprep.subr.bf16.mxu0 0
          %2379 = vmatpush2.bf16.msra.mxu0 %v2313
          %2380 = vmatprep.subr.bf16.mxu0 0
          %2381 = vmatpush2.bf16.msra.mxu0 %v2312
          %2382 = vmatprep.subr.bf16.mxu0 0
          %2383 = vmatpush2.bf16.msra.mxu0 %v2311
          %2384 = vmatprep.subr.bf16.mxu0 0
          %2385 = vmatpush2.bf16.msra.mxu0 %v2310
          %2386 = vmatprep.subr.bf16.mxu0 0
          %2387 = vmatpush2.bf16.msra.mxu0 %v2309
          %2388 = vmatprep.subr.bf16.mxu0 0
          %2389 = vmatpush2.bf16.msra.mxu0 %v2308
          %2390 = vmatprep.subr.bf16.mxu0 0
          %2391 = vmatpush2.bf16.msra.mxu0 %v2307
          %2392 = vmatprep.subr.bf16.mxu0 0
          %2393 = vmatpush2.bf16.msra.mxu0 %v2306
          %2394 = vmatprep.mubr.f32.mxu0 %v2093
          %2395 = vmatmul.mubr.f32.gmra.mxu0 %v2091
          %v2396 = vpop.f32.mrf.mxu0
          %v2397 = vadd.f32 0.0, %v2396
          %v2398 = vpop.f32.mrf.mxu0
          %2399 = vmatprep.mubr.f32.mxu0 %v2101
          %2400 = vmatmul.mubr.f32.gmra.mxu0 %v2099
          %v2401 = vpop.f32.mrf.mxu0
          %v2402 = vadd.f32 0.0, %v2401
          %v2403 = vpop.f32.mrf.mxu0
          %2404 = vdwg.mxu0
          %2405 = vmatprep.subr.bf16.mxu0 0
          %2406 = vmatpush1.bf16.msra.mxu0 %v2321
          %2407 = vmatprep.subr.bf16.mxu0 0
          %2408 = vmatpush1.bf16.msra.mxu0 %v2320
          %2409 = vmatprep.subr.bf16.mxu0 0
          %2410 = vmatpush1.bf16.msra.mxu0 %v2319
          %2411 = vmatprep.subr.bf16.mxu0 0
          %2412 = vmatpush1.bf16.msra.mxu0 %v2318
          %2413 = vmatprep.subr.bf16.mxu0 0
          %2414 = vmatpush1.bf16.msra.mxu0 %v2317
          %2415 = vmatprep.subr.bf16.mxu0 0
          %2416 = vmatpush1.bf16.msra.mxu0 %v2316
          %2417 = vmatprep.subr.bf16.mxu0 0
          %2418 = vmatpush1.bf16.msra.mxu0 %v2315
          %2419 = vmatprep.subr.bf16.mxu0 0
          %2420 = vmatpush1.bf16.msra.mxu0 %v2314
          %2421 = vmatprep.subr.bf16.mxu0 0
          %2422 = vmatpush2.bf16.msra.mxu0 %v2329
          %2423 = vmatprep.subr.bf16.mxu0 0
          %2424 = vmatpush2.bf16.msra.mxu0 %v2328
          %2425 = vmatprep.subr.bf16.mxu0 0
          %2426 = vmatpush2.bf16.msra.mxu0 %v2327
          %2427 = vmatprep.subr.bf16.mxu0 0
          %2428 = vmatpush2.bf16.msra.mxu0 %v2326
          %2429 = vmatprep.subr.bf16.mxu0 0
          %2430 = vmatpush2.bf16.msra.mxu0 %v2325
          %2431 = vmatprep.subr.bf16.mxu0 0
          %2432 = vmatpush2.bf16.msra.mxu0 %v2324
          %2433 = vmatprep.subr.bf16.mxu0 0
          %2434 = vmatpush2.bf16.msra.mxu0 %v2323
          %2435 = vmatprep.subr.bf16.mxu0 0
          %2436 = vmatpush2.bf16.msra.mxu0 %v2322
          %2437 = vmatprep.mubr.f32.mxu0 %v2097
          %2438 = vmatmul.mubr.f32.gmra.mxu0 %v2095
          %v2439 = vpop.f32.mrf.mxu0
          %v2440 = vadd.f32 %v2397, %v2439
          %v2441 = vpop.f32.mrf.mxu0
          %2442 = vmatprep.mubr.f32.mxu0 %v2105
          %2443 = vmatmul.mubr.f32.gmra.mxu0 %v2103
          %v2444 = vpop.f32.mrf.mxu0
          %v2445 = vadd.f32 %v2402, %v2444
          %v2446 = vpop.f32.mrf.mxu0
          %2447 = vdwg.mxu0
          %v2448 = vmax.f32 %v2440, 1e-30
          %v2449 = vmax.f32 %v2445, 1e-30
          %v2450 = vlog2.pop %v2448
          %v2451 = vmul.f32 %v2450, 0.6931472
          %v2452 = vlog2.pop %v2449
          %v2453 = vmul.f32 %v2452, 0.6931472
          %vm2454 = vcmask 130048
          %2455 = vst.msk [vmem:[#allocation4] sm:$0xff] %vm2454, %v2451
          %vm2456 = vcmask 125952
          %2457 = vst.msk [vmem:[#allocation4 + $0x8] sm:$0xf] %vm2456, %v2453
          %v2458 = vld [vmem:[%s3] sm:$0x1]
          %v2460 = vlaneseq
          %v2461 = vshrl.u32 %v2460, 7
          %v2462 = vsub.s32 0, %v2461
          %v2463 = vrot.slane %v2458, %v2462
          %v2465 = vmul.f32 %v2451, %v2463
          %v2466 = vmul.f32 %v2453, %v2463
          %v2467 = vmul.f32 %v2465, %v2451
          %v2468 = vmul.f32 %v2466, %v2453
          %v2469 = vsel %vm2454, %v2467, 0.0
          %2470 = vadd.xlane.f32.xlu0 %v2469
          %v2471 = vpop.xlane.xlu0 %2470
          %v2472 = vsel %vm2456, %v2468, 0.0
          %2473 = vadd.xlane.f32.xlu0 %v2472
          %v2474 = vpop.xlane.xlu0 %2473
          %v2475 = vmul.f32 %v2451, %v2451
          %v2476 = vmul.f32 %v2453, %v2453
          %v2477 = vsel %vm2454, %v2458, 0
          %v2480 = vsel %vm2454, %v2475, 0
          %v2483 = vsel %vm2454, %v2476, 0
          %2485 = vmatprep.subr.mxu0 0.0
          %2486 = vmatpush1.xpose.msra.mxu0 0.0
          %2487 = vmatprep.subr.mxu0 0.0
          %2488 = vmatpush1.xpose.msra.mxu0 0.0
          %2489 = vmatprep.subr.mxu0 0.0
          %2490 = vmatpush1.xpose.msra.mxu0 0.0
          %2491 = vmatprep.subr.mxu0 0.0
          %2492 = vmatpush1.xpose.msra.mxu0 0.0
          %2493 = vmatprep.subr.mxu0 0.0
          %2494 = vmatpush1.xpose.msra.mxu0 0.0
          %2495 = vmatprep.subr.mxu0 0.0
          %2496 = vmatpush1.xpose.msra.mxu0 0.0
          %2497 = vmatprep.subr.mxu0 0.0
          %2498 = vmatpush1.xpose.msra.mxu0 0.0
          %2499 = vmatprep.subr.mxu0 0.0
          %2500 = vmatpush1.xpose.msra.mxu0 0.0
          %2501 = vmatprep.subr.mxu0 0.0
          %2502 = vmatpush1.xpose.msra.mxu0 0.0
          %2503 = vmatprep.subr.mxu0 0.0
          %2504 = vmatpush1.xpose.msra.mxu0 0.0
          %2505 = vmatprep.subr.mxu0 0.0
          %2506 = vmatpush1.xpose.msra.mxu0 0.0
          %2507 = vmatprep.subr.mxu0 0.0
          %2508 = vmatpush1.xpose.msra.mxu0 0.0
          %2509 = vmatprep.subr.mxu0 0.0
          %2510 = vmatpush1.xpose.msra.mxu0 0.0
          %2511 = vmatprep.subr.mxu0 0.0
          %2512 = vmatpush1.xpose.msra.mxu0 0.0
          %2513 = vmatprep.subr.mxu0 0.0
          %2514 = vmatpush1.xpose.msra.mxu0 %v2483
          %2515 = vmatprep.subr.mxu0 0.0
          %2516 = vmatpush1.xpose.msra.mxu0 %v2480
          %2517 = vmatprep.subr.mxu0 0.0
          %2518 = vmatpush2.xpose.msra.mxu0 0.0
          %2519 = vmatprep.subr.mxu0 0.0
          %2520 = vmatpush2.xpose.msra.mxu0 0.0
          %2521 = vmatprep.subr.mxu0 0.0
          %2522 = vmatpush2.xpose.msra.mxu0 0.0
          %2523 = vmatprep.subr.mxu0 0.0
          %2524 = vmatpush2.xpose.msra.mxu0 0.0
          %2525 = vmatprep.subr.mxu0 0.0
          %2526 = vmatpush2.xpose.msra.mxu0 0.0
          %2527 = vmatprep.subr.mxu0 0.0
          %2528 = vmatpush2.xpose.msra.mxu0 0.0
          %2529 = vmatprep.subr.mxu0 0.0
          %2530 = vmatpush2.xpose.msra.mxu0 0.0
          %2531 = vmatprep.subr.mxu0 0.0
          %2532 = vmatpush2.xpose.msra.mxu0 0.0
          %2533 = vmatprep.subr.mxu0 0.0
          %2534 = vmatpush2.xpose.msra.mxu0 0.0
          %2535 = vmatprep.subr.mxu0 0.0
          %2536 = vmatpush2.xpose.msra.mxu0 0.0
          %2537 = vmatprep.subr.mxu0 0.0
          %2538 = vmatpush2.xpose.msra.mxu0 0.0
          %2539 = vmatprep.subr.mxu0 0.0
          %2540 = vmatpush2.xpose.msra.mxu0 0.0
          %2541 = vmatprep.subr.mxu0 0.0
          %2542 = vmatpush2.xpose.msra.mxu0 0.0
          %2543 = vmatprep.subr.mxu0 0.0
          %2544 = vmatpush2.xpose.msra.mxu0 0.0
          %2545 = vmatprep.subr.mxu0 0.0
          %2546 = vmatpush2.xpose.msra.mxu0 0.0
          %2547 = vmatprep.subr.mxu0 0.0
          %2548 = vmatpush2.xpose.msra.mxu0 0.0
          %2549 = vmatprep.mubr.f32.mxu0 0.0
          %2550 = vmatmul.mubr.f32.gmra.mxu0 %v2477
          %v2551 = vpop.f32.mrf.mxu0
          %v2552 = vadd.f32 0.0, %v2551
          %v2553 = vpop.f32.mrf.mxu0
          %2554 = vdwg.mxu0
          %v2556 = vrot.slane %v2451, 2
          %v2558 = vsel %vm2454, %v2465, 0
          %v2560 = vsel %vm2454, %v2556, 0
          %2562 = vmatprep.subr.mxu0 0.0
          %2563 = vmatpush1.xpose.msra.mxu0 0.0
          %2564 = vmatprep.subr.mxu0 0.0
          %2565 = vmatpush1.xpose.msra.mxu0 0.0
          %2566 = vmatprep.subr.mxu0 0.0
          %2567 = vmatpush1.xpose.msra.mxu0 0.0
          %2568 = vmatprep.subr.mxu0 0.0
          %2569 = vmatpush1.xpose.msra.mxu0 0.0
          %2570 = vmatprep.subr.mxu0 0.0
          %2571 = vmatpush1.xpose.msra.mxu0 0.0
          %2572 = vmatprep.subr.mxu0 0.0
          %2573 = vmatpush1.xpose.msra.mxu0 0.0
          %2574 = vmatprep.subr.mxu0 0.0
          %2575 = vmatpush1.xpose.msra.mxu0 0.0
          %2576 = vmatprep.subr.mxu0 0.0
          %2577 = vmatpush1.xpose.msra.mxu0 0.0
          %2578 = vmatprep.subr.mxu0 0.0
          %2579 = vmatpush1.xpose.msra.mxu0 0.0
          %2580 = vmatprep.subr.mxu0 0.0
          %2581 = vmatpush1.xpose.msra.mxu0 0.0
          %2582 = vmatprep.subr.mxu0 0.0
          %2583 = vmatpush1.xpose.msra.mxu0 0.0
          %2584 = vmatprep.subr.mxu0 0.0
          %2585 = vmatpush1.xpose.msra.mxu0 0.0
          %2586 = vmatprep.subr.mxu0 0.0
          %2587 = vmatpush1.xpose.msra.mxu0 0.0
          %2588 = vmatprep.subr.mxu0 0.0
          %2589 = vmatpush1.xpose.msra.mxu0 0.0
          %2590 = vmatprep.subr.mxu0 0.0
          %2591 = vmatpush1.xpose.msra.mxu0 0.0
          %2592 = vmatprep.subr.mxu0 0.0
          %2593 = vmatpush1.xpose.msra.mxu0 %v2560
          %2594 = vmatprep.subr.mxu0 0.0
          %2595 = vmatpush2.xpose.msra.mxu0 0.0
          %2596 = vmatprep.subr.mxu0 0.0
          %2597 = vmatpush2.xpose.msra.mxu0 0.0
          %2598 = vmatprep.subr.mxu0 0.0
          %2599 = vmatpush2.xpose.msra.mxu0 0.0
          %2600 = vmatprep.subr.mxu0 0.0
          %2601 = vmatpush2.xpose.msra.mxu0 0.0
          %2602 = vmatprep.subr.mxu0 0.0
          %2603 = vmatpush2.xpose.msra.mxu0 0.0
          %2604 = vmatprep.subr.mxu0 0.0
          %2605 = vmatpush2.xpose.msra.mxu0 0.0
          %2606 = vmatprep.subr.mxu0 0.0
          %2607 = vmatpush2.xpose.msra.mxu0 0.0
          %2608 = vmatprep.subr.mxu0 0.0
          %2609 = vmatpush2.xpose.msra.mxu0 0.0
          %2610 = vmatprep.subr.mxu0 0.0
          %2611 = vmatpush2.xpose.msra.mxu0 0.0
          %2612 = vmatprep.subr.mxu0 0.0
          %2613 = vmatpush2.xpose.msra.mxu0 0.0
          %2614 = vmatprep.subr.mxu0 0.0
          %2615 = vmatpush2.xpose.msra.mxu0 0.0
          %2616 = vmatprep.subr.mxu0 0.0
          %2617 = vmatpush2.xpose.msra.mxu0 0.0
          %2618 = vmatprep.subr.mxu0 0.0
          %2619 = vmatpush2.xpose.msra.mxu0 0.0
          %2620 = vmatprep.subr.mxu0 0.0
          %2621 = vmatpush2.xpose.msra.mxu0 0.0
          %2622 = vmatprep.subr.mxu0 0.0
          %2623 = vmatpush2.xpose.msra.mxu0 0.0
          %2624 = vmatprep.subr.mxu0 0.0
          %2625 = vmatpush2.xpose.msra.mxu0 0.0
          %2626 = vmatprep.mubr.f32.mxu0 0.0
          %2627 = vmatmul.mubr.f32.gmra.mxu0 %v2558
          %v2628 = vpop.f32.mrf.mxu0
          %v2629 = vadd.f32 0.0, %v2628
          %v2630 = vpop.f32.mrf.mxu0
          %2631 = vdwg.mxu0
          %v2632 = vlaneseq
          %v2633 = vshrl.u32 %v2632, 7
          %v2634 = vsub.s32 0, %v2633
          %v2635 = vrot.slane %v2552, %v2634
          %v2636 = vadd.f32 %v2471, %v2635
          %v2637 = vmul.f32 %v2629, 2.0
          %2639 = vrot.lane.b32.xlu0 %v2637, 2
          %v2640 = vpop.permute.xlu0 %2639
          %v2642 = vsub.f32 %v2636, %v2640
          %v2643 = vmax.f32 %v2642, 0.0
          %v2644 = vrsqrt.pop %v2643
          %v2645 = vmul.f32 %v2643, %v2644
          %vm2646 = vcmp.eq.f32.partialorder %v2643, inf
          %v2647 = vsel %vm2646, %v2643, %v2645
          %vm2648 = vcmp.eq.f32.partialorder %v2643, 0.0
          %v2649 = vand.u32 %v2643, 2147483648
          %v2650 = vsel %vm2648, %v2649, %v2647
          %2652 = vrot.lane.b32.xlu0 %v2650, 126
          %v2653 = vpop.permute.xlu0 %2652
          %vm2655 = vcmask 9216
          %2656 = vst.msk [vmem:[%s5] sm:$0x3] %vm2655, %v2653
          %v2657 = vrot.slane %v2465, 4
          %v2658 = vrot.slane %v2451, 6
          %v2659 = vsel %vm2454, %v2657, 0
          %v2661 = vsel %vm2454, %v2658, 0
          %2663 = vmatprep.subr.mxu0 0.0
          %2664 = vmatpush1.xpose.msra.mxu0 0.0
          %2665 = vmatprep.subr.mxu0 0.0
          %2666 = vmatpush1.xpose.msra.mxu0 0.0
          %2667 = vmatprep.subr.mxu0 0.0
          %2668 = vmatpush1.xpose.msra.mxu0 0.0
          %2669 = vmatprep.subr.mxu0 0.0
          %2670 = vmatpush1.xpose.msra.mxu0 0.0
          %2671 = vmatprep.subr.mxu0 0.0
          %2672 = vmatpush1.xpose.msra.mxu0 0.0
          %2673 = vmatprep.subr.mxu0 0.0
          %2674 = vmatpush1.xpose.msra.mxu0 0.0
          %2675 = vmatprep.subr.mxu0 0.0
          %2676 = vmatpush1.xpose.msra.mxu0 0.0
          %2677 = vmatprep.subr.mxu0 0.0
          %2678 = vmatpush1.xpose.msra.mxu0 0.0
          %2679 = vmatprep.subr.mxu0 0.0
          %2680 = vmatpush1.xpose.msra.mxu0 0.0
          %2681 = vmatprep.subr.mxu0 0.0
          %2682 = vmatpush1.xpose.msra.mxu0 0.0
          %2683 = vmatprep.subr.mxu0 0.0
          %2684 = vmatpush1.xpose.msra.mxu0 0.0
          %2685 = vmatprep.subr.mxu0 0.0
          %2686 = vmatpush1.xpose.msra.mxu0 0.0
          %2687 = vmatprep.subr.mxu0 0.0
          %2688 = vmatpush1.xpose.msra.mxu0 0.0
          %2689 = vmatprep.subr.mxu0 0.0
          %2690 = vmatpush1.xpose.msra.mxu0 0.0
          %2691 = vmatprep.subr.mxu0 0.0
          %2692 = vmatpush1.xpose.msra.mxu0 0.0
          %2693 = vmatprep.subr.mxu0 0.0
          %2694 = vmatpush1.xpose.msra.mxu0 %v2661
          %2695 = vmatprep.subr.mxu0 0.0
          %2696 = vmatpush2.xpose.msra.mxu0 0.0
          %2697 = vmatprep.subr.mxu0 0.0
          %2698 = vmatpush2.xpose.msra.mxu0 0.0
          %2699 = vmatprep.subr.mxu0 0.0
          %2700 = vmatpush2.xpose.msra.mxu0 0.0
          %2701 = vmatprep.subr.mxu0 0.0
          %2702 = vmatpush2.xpose.msra.mxu0 0.0
          %2703 = vmatprep.subr.mxu0 0.0
          %2704 = vmatpush2.xpose.msra.mxu0 0.0
          %2705 = vmatprep.subr.mxu0 0.0
          %2706 = vmatpush2.xpose.msra.mxu0 0.0
          %2707 = vmatprep.subr.mxu0 0.0
          %2708 = vmatpush2.xpose.msra.mxu0 0.0
          %2709 = vmatprep.subr.mxu0 0.0
          %2710 = vmatpush2.xpose.msra.mxu0 0.0
          %2711 = vmatprep.subr.mxu0 0.0
          %2712 = vmatpush2.xpose.msra.mxu0 0.0
          %2713 = vmatprep.subr.mxu0 0.0
          %2714 = vmatpush2.xpose.msra.mxu0 0.0
          %2715 = vmatprep.subr.mxu0 0.0
          %2716 = vmatpush2.xpose.msra.mxu0 0.0
          %2717 = vmatprep.subr.mxu0 0.0
          %2718 = vmatpush2.xpose.msra.mxu0 0.0
          %2719 = vmatprep.subr.mxu0 0.0
          %2720 = vmatpush2.xpose.msra.mxu0 0.0
          %2721 = vmatprep.subr.mxu0 0.0
          %2722 = vmatpush2.xpose.msra.mxu0 0.0
          %2723 = vmatprep.subr.mxu0 0.0
          %2724 = vmatpush2.xpose.msra.mxu0 0.0
          %2725 = vmatprep.subr.mxu0 0.0
          %2726 = vmatpush2.xpose.msra.mxu0 0.0
          %2727 = vmatprep.mubr.f32.mxu0 0.0
          %2728 = vmatmul.mubr.f32.gmra.mxu0 %v2659
          %v2729 = vpop.f32.mrf.mxu0
          %v2730 = vadd.f32 0.0, %v2729
          %v2731 = vpop.f32.mrf.mxu0
          %2732 = vdwg.mxu0
          %v2733 = vmul.f32 %v2730, 2.0
          %v2735 = vrot.slane %v2733, 4
          %2736 = vrot.lane.b32.xlu0 %v2735, 6
          %v2737 = vpop.permute.xlu0 %2736
          %v2739 = vsub.f32 %v2636, %v2737
          %v2740 = vmax.f32 %v2739, 0.0
          %v2741 = vrsqrt.pop %v2740
          %v2742 = vmul.f32 %v2740, %v2741
          %vm2743 = vcmp.eq.f32.partialorder %v2740, inf
          %v2744 = vsel %vm2743, %v2740, %v2742
          %vm2745 = vcmp.eq.f32.partialorder %v2740, 0.0
          %v2746 = vand.u32 %v2740, 2147483648
          %v2747 = vsel %vm2745, %v2746, %v2744
          %2749 = vrot.lane.b32.xlu0 %v2747, 122
          %v2750 = vpop.permute.xlu0 %2749
          %s2752 = scalar_lea.vmem %s5, 2
          %vm2753 = vcmask 13316
          %2754 = vst.msk [vmem:[%s2752 - $0x4] sm:$0x30] %vm2753, %v2750
          %v2756 = vrot.slane %v2453, 2
          %v2758 = vsel %vm2454, %v2466, 0
          %v2760 = vsel %vm2454, %v2756, 0
          %2762 = vmatprep.subr.mxu0 0.0
          %2763 = vmatpush1.xpose.msra.mxu0 0.0
          %2764 = vmatprep.subr.mxu0 0.0
          %2765 = vmatpush1.xpose.msra.mxu0 0.0
          %2766 = vmatprep.subr.mxu0 0.0
          %2767 = vmatpush1.xpose.msra.mxu0 0.0
          %2768 = vmatprep.subr.mxu0 0.0
          %2769 = vmatpush1.xpose.msra.mxu0 0.0
          %2770 = vmatprep.subr.mxu0 0.0
          %2771 = vmatpush1.xpose.msra.mxu0 0.0
          %2772 = vmatprep.subr.mxu0 0.0
          %2773 = vmatpush1.xpose.msra.mxu0 0.0
          %2774 = vmatprep.subr.mxu0 0.0
          %2775 = vmatpush1.xpose.msra.mxu0 0.0
          %2776 = vmatprep.subr.mxu0 0.0
          %2777 = vmatpush1.xpose.msra.mxu0 0.0
          %2778 = vmatprep.subr.mxu0 0.0
          %2779 = vmatpush1.xpose.msra.mxu0 0.0
          %2780 = vmatprep.subr.mxu0 0.0
          %2781 = vmatpush1.xpose.msra.mxu0 0.0
          %2782 = vmatprep.subr.mxu0 0.0
          %2783 = vmatpush1.xpose.msra.mxu0 0.0
          %2784 = vmatprep.subr.mxu0 0.0
          %2785 = vmatpush1.xpose.msra.mxu0 0.0
          %2786 = vmatprep.subr.mxu0 0.0
          %2787 = vmatpush1.xpose.msra.mxu0 0.0
          %2788 = vmatprep.subr.mxu0 0.0
          %2789 = vmatpush1.xpose.msra.mxu0 0.0
          %2790 = vmatprep.subr.mxu0 0.0
          %2791 = vmatpush1.xpose.msra.mxu0 0.0
          %2792 = vmatprep.subr.mxu0 0.0
          %2793 = vmatpush1.xpose.msra.mxu0 %v2760
          %2794 = vmatprep.subr.mxu0 0.0
          %2795 = vmatpush2.xpose.msra.mxu0 0.0
          %2796 = vmatprep.subr.mxu0 0.0
          %2797 = vmatpush2.xpose.msra.mxu0 0.0
          %2798 = vmatprep.subr.mxu0 0.0
          %2799 = vmatpush2.xpose.msra.mxu0 0.0
          %2800 = vmatprep.subr.mxu0 0.0
          %2801 = vmatpush2.xpose.msra.mxu0 0.0
          %2802 = vmatprep.subr.mxu0 0.0
          %2803 = vmatpush2.xpose.msra.mxu0 0.0
          %2804 = vmatprep.subr.mxu0 0.0
          %2805 = vmatpush2.xpose.msra.mxu0 0.0
          %2806 = vmatprep.subr.mxu0 0.0
          %2807 = vmatpush2.xpose.msra.mxu0 0.0
          %2808 = vmatprep.subr.mxu0 0.0
          %2809 = vmatpush2.xpose.msra.mxu0 0.0
          %2810 = vmatprep.subr.mxu0 0.0
          %2811 = vmatpush2.xpose.msra.mxu0 0.0
          %2812 = vmatprep.subr.mxu0 0.0
          %2813 = vmatpush2.xpose.msra.mxu0 0.0
          %2814 = vmatprep.subr.mxu0 0.0
          %2815 = vmatpush2.xpose.msra.mxu0 0.0
          %2816 = vmatprep.subr.mxu0 0.0
          %2817 = vmatpush2.xpose.msra.mxu0 0.0
          %2818 = vmatprep.subr.mxu0 0.0
          %2819 = vmatpush2.xpose.msra.mxu0 0.0
          %2820 = vmatprep.subr.mxu0 0.0
          %2821 = vmatpush2.xpose.msra.mxu0 0.0
          %2822 = vmatprep.subr.mxu0 0.0
          %2823 = vmatpush2.xpose.msra.mxu0 0.0
          %2824 = vmatprep.subr.mxu0 0.0
          %2825 = vmatpush2.xpose.msra.mxu0 0.0
          %2826 = vmatprep.mubr.f32.mxu0 0.0
          %2827 = vmatmul.mubr.f32.gmra.mxu0 %v2758
          %v2828 = vpop.f32.mrf.mxu0
          %v2829 = vadd.f32 0.0, %v2828
          %v2830 = vpop.f32.mrf.mxu0
          %2831 = vdwg.mxu0
          %v2832 = vadd.f32 %v2474, %v2635
          %v2833 = vmul.f32 %v2829, 2.0
          %2835 = vrot.lane.b32.xlu0 %v2833, 10
          %v2836 = vpop.permute.xlu0 %2835
          %v2838 = vsub.f32 %v2832, %v2836
          %v2839 = vmax.f32 %v2838, 0.0
          %v2840 = vrsqrt.pop %v2839
          %v2841 = vmul.f32 %v2839, %v2840
          %vm2842 = vcmp.eq.f32.partialorder %v2839, inf
          %v2843 = vsel %vm2842, %v2839, %v2841
          %vm2844 = vcmp.eq.f32.partialorder %v2839, 0.0
          %v2845 = vand.u32 %v2839, 2147483648
          %v2846 = vsel %vm2844, %v2845, %v2843
          %2848 = vrot.lane.b32.xlu0 %v2846, 118
          %v2849 = vpop.permute.xlu0 %2848
          %s2851 = scalar_lea.vmem %s5, 4
          %2852 = vst.msk [vmem:[%s2851] sm:$0x3] %vm2655, %v2849
        $region67: #{wasserstein_tke_forward.3} parent=54 // pred_fallthru
          _
        // Predicated region
        $region68: #{wasserstein_tke_forward.3} parent=54 // pred_check
          %p2853 = pneg %p125
        $region69: #{wasserstein_tke_forward.3} parent=54 // pred_check_branch
          %2855 = sbr.rel (%p2853) target = $region71
        $region70: #{wasserstein_tke_forward.3} parent=54 // pred_region
          %s2857 = ssub.s32 256, 256
          %2858 = vsyncadd [#allocation5], %s2857
          %s2859 = sshll.u32 [#allocation4], 4
          %s2860 = int_to_ptr.vmem [resolvable:$true] %s2859
          %2865 = dma.vmem_to_hbm [thread:$0]  %s2860, 256, %s4, [#allocation5], 128, 128, 8
        $region71: #{wasserstein_tke_forward.3} parent=54 // pred_fallthru
          _
        // Predicated region
        $region72: #{wasserstein_tke_forward.3} parent=54 // pred_check
          %p2866 = pneg %p146
        $region73: #{wasserstein_tke_forward.3} parent=54 // pred_check_branch
          %2868 = sbr.rel (%p2866) target = $region75
        $region74: #{wasserstein_tke_forward.3} parent=54 // pred_region
          _
        $region75: #{wasserstein_tke_forward.3} parent=54 // pred_fallthru
          _
        // Predicated region
        $region76: #{wasserstein_tke_forward.3} parent=54 // pred_check
          %p2869 = pneg %p125
        $region77: #{wasserstein_tke_forward.3} parent=54 // pred_check_branch
          %2871 = sbr.rel (%p2869) target = $region79
        $region78: #{wasserstein_tke_forward.3} parent=54 // pred_region
          %2872 = dma.done [#allocation5], 256
        $region79: #{wasserstein_tke_forward.3} parent=54 // pred_fallthru
          _
        // Predicated region
        $region80: #{wasserstein_tke_forward.3} parent=54 // pred_check
          %p2873 = pneg %p146
        $region81: #{wasserstein_tke_forward.3} parent=54 // pred_check_branch
          %2875 = sbr.rel (%p2873) target = $region83
        $region82: #{wasserstein_tke_forward.3} parent=54 // pred_region
          _
        $region83: #{wasserstein_tke_forward.3} parent=54 // pred_fallthru
          _
      $region55: #{wasserstein_tke_forward.3} parent=5 // pred_fallthru
        _
      %p2876 = scmp.le.s32.totalorder 2, %s13
      // Predicated region
      $region84: #{wasserstein_tke_forward.3} parent=5 // pred_check
        %p2877 = pneg %p2876
      $region85: #{wasserstein_tke_forward.3} parent=5 // pred_check_branch
        %2879 = sbr.rel (%p2877) target = $region87
      $region86: #{wasserstein_tke_forward.3} parent=5 // pred_region
        %s2880 = ssub.s32 %s13, 2
      $region87: #{wasserstein_tke_forward.3} parent=5 // pred_fallthru
        _
    $region6: #{wasserstein_tke_forward.3} parent=1 // loop_footer
      %s17 = sadd.s32 1, %s13
    $region7: #{wasserstein_tke_forward.3} parent=1 // loop_footer_branch
      %12 = sbr.rel target = $region3
    $region8: #{wasserstein_tke_forward.3} parent=1 // loop_exit
      _
    %2881 = vsyncpa [#allocation5], 1
    %s2882 = scalar_lea.sflag [#allocation5], 1
    %2883 = vsyncpa %s2882, 1

</llo_original>
